<compile_context>
chip_gen: v6e
topology: v6e:2x2x1
jax: 0.10.0
libtpu: 0.0.40
codegen_flags: <defaults>
</compile_context>

<pallas_src>
import jax
import jax.numpy as jnp
from jax.experimental import pallas as pl
from jax.experimental.pallas import tpu as pltpu

LSTM_HIDDEN = 32     # lstm_hidde_size (small test value; filename default 200)
LSTM_LAYERS = 2      # lstm_num_layers (kernel below is specialized for 2)
FC1_OUT = 32
CONV1_OUT = 64
CONV2_OUT = 128

_VMEM_LIMIT = 32 * 1024 * 1024          # explicit scoped-VMEM budget (safe on v5e/v6e/v7x)
_BLOCK_B = 8                            # batch tile (sublane-aligned); raise for big B


def _bcast_spec(shape):
    """Full-array block replicated to every grid step (weights / biases)."""
    n = len(shape)
    return pl.BlockSpec(shape, lambda i, n=n: (0,) * n)


# ----------------------------- fused CNN kernel ------------------------------
def _cnn_kernel(x_ref, va_ref, vb_ref, vc_ref, b1cat_ref, w2cat_ref, b2_ref, out_ref):
    # x_ref:    (BB, L)        raw signal (channel dim of 1 squeezed in wrapper)
    # va/vb/vc: (1, 128)       conv1 taps rearranged so conv2's two taps share lanes
    # b1cat:    (1, 128)       [b1 | b1]
    # w2cat:    (128, 128)     bf16; rows 0:64 = w2[:,:,0].T, rows 64:128 = w2[:,:,1].T
    # b2:       (1, 128)
    # out_ref:  (BB, Tp, 128)  time-major pooled features (lane-dense 128 writes)
    x = x_ref[...]
    BB, L = x.shape
    T2 = L - 2                  # conv2 output length
    Tp = T2 // 2                # maxpool output length

    va = va_ref[...]
    vb = vb_ref[...]
    vc = vc_ref[...]
    b1c = b1cat_ref[...]

    # conv1 (1->64, k=2) + ReLU for taps t and t+1 at once:
    #   h1cat[b, t, :] = [relu(conv1)[b, t, :] | relu(conv1)[b, t+1, :]]   (128 lanes)
    x0 = x[:, 0:T2][:, :, None]
    x1 = x[:, 1:T2 + 1][:, :, None]
    x2 = x[:, 2:T2 + 2][:, :, None]
    h1cat = jnp.maximum(x0 * va + x1 * vb + x2 * vc + b1c, 0.0)      # (BB, T2, 128)

    # conv2 (64->128, k=2) + ReLU as ONE K=128 MXU matmul (bf16 in, f32 accumulate)
    h2 = jnp.dot(h1cat.reshape(BB * T2, 2 * CONV1_OUT).astype(jnp.bfloat16),
                 w2cat_ref[...],
                 preferred_element_type=jnp.float32) + b2_ref[...]
    h2 = jnp.maximum(h2, 0.0).reshape(BB, T2, CONV2_OUT)

    # MaxPool1d(kernel_size=2, stride=2) along time
    out_ref[...] = jnp.max(h2[:, :2 * Tp, :].reshape(BB, Tp, 2, CONV2_OUT), axis=2)


def cnn_forward(x, w1, b1, w2, b2):
    B, C, L = x.shape
    assert C == 1
    Tp = (L - 2) // 2
    BB = B if B <= _BLOCK_B else _BLOCK_B
    nb = pl.cdiv(B, BB)

    # conv1 tap vectors arranged for the concatenated 128-lane activation.
    w1a = w1[:, 0, 0].reshape(1, CONV1_OUT)
    w1b = w1[:, 0, 1].reshape(1, CONV1_OUT)
    zeros = jnp.zeros((1, CONV1_OUT), jnp.float32)
    va = jnp.concatenate([w1a, zeros], axis=1)                       # (1, 128)
    vb = jnp.concatenate([w1b, w1a], axis=1)
    vc = jnp.concatenate([zeros, w1b], axis=1)
    b1r = b1.reshape(1, CONV1_OUT)
    b1cat = jnp.concatenate([b1r, b1r], axis=1)
    # conv2 taps merged into a single (128, 128) weight, bf16 for the MXU.
    w2cat = jnp.concatenate([w2[:, :, 0].T, w2[:, :, 1].T], axis=0).astype(jnp.bfloat16)
    b2r = b2.reshape(1, CONV2_OUT)

    return pl.pallas_call(
        _cnn_kernel,
        out_shape=jax.ShapeDtypeStruct((B, Tp, CONV2_OUT), jnp.float32),
        grid=(nb,),
        in_specs=[
            pl.BlockSpec((BB, L), lambda i: (i, 0)),
            _bcast_spec((1, 2 * CONV1_OUT)),
            _bcast_spec((1, 2 * CONV1_OUT)),
            _bcast_spec((1, 2 * CONV1_OUT)),
            _bcast_spec((1, 2 * CONV1_OUT)),
            _bcast_spec((CONV2_OUT, CONV2_OUT)),
            _bcast_spec((1, CONV2_OUT)),
        ],
        out_specs=pl.BlockSpec((BB, Tp, CONV2_OUT), lambda i: (i, 0, 0)),
        compiler_params=pltpu.CompilerParams(
            dimension_semantics=("parallel",),
            vmem_limit_bytes=_VMEM_LIMIT),
    )(x[:, 0, :], va, vb, vc, b1cat, w2cat, b2r)


# ------------------------ fused 2-layer LSTM + head kernel -------------------
def _lstm_head_kernel(seq_ref, wih1_ref, whh1_ref, b1_ref,
                      wih2_ref, whh2_ref, b2_ref,
                      wfc1_ref, bfc1_ref, wout_ref, bout_ref,
                      out_ref, xw_scr, h1s_scr):
    # seq_ref:  (Tp, BB, 128)  time-major LSTM input
    # wih1:     (128, 4H) bf16 ; whh1/whh2/wih2: (4H, 4H), rows >= H zero-padded
    # b1/b2:    (1, 4H) = b_ih + b_hh
    # wfc1:     (4H, 32) rows >= H zero ; wout: (32, 1)
    # out_ref:  (BB, 1)
    # xw_scr:   (Tp, BB, 4H)   per-timestep input projections (reused by both layers)
    # h1s_scr:  (Tp, BB, 4H)   layer-1 hidden sequence (valid lanes [0, H))
    Tp, BB, IN = seq_ref.shape
    GW = whh1_ref.shape[0]          # 4*H; h/c live in a GW-wide lane container
    H = GW // 4

    def gates_to_ifgo(gates):
        # Full-lane sigmoid/tanh (EUP), then XLU lane rolls bring every gate to
        # lanes [0, H) -- no sub-128 lane slices on the recurrence critical path.
        sg = jax.nn.sigmoid(gates)
        th = jnp.tanh(gates)
        i_g = sg                                      # input  gate @ lanes [0,H)
        f_g = pltpu.roll(sg, shift=3 * H, axis=1)     # forget gate [H,2H)  -> [0,H)
        g_g = pltpu.roll(th, shift=2 * H, axis=1)     # cell   gate [2H,3H) -> [0,H)
        o_g = pltpu.roll(sg, shift=H, axis=1)         # output gate [3H,4H) -> [0,H)
        return i_g, f_g, g_g, o_g

    # ---------------- layer 1 ----------------
    # Input projection for all timesteps as one bf16 MXU matmul, parked in VMEM
    # scratch laid out (T, B, 4H) so the recurrence reads xw_scr[t] (leading axis).
    x = seq_ref[...].reshape(Tp * BB, IN).astype(jnp.bfloat16)
    xw = jnp.dot(x, wih1_ref[...], preferred_element_type=jnp.float32) + b1_ref[...]
    xw_scr[...] = xw.reshape(Tp, BB, GW)

    whh1 = whh1_ref[...]
    h = jnp.zeros((BB, GW), jnp.float32)
    c = jnp.zeros((BB, GW), jnp.float32)
    # Tp is static & small -> fully unrolled recurrence (== fori_loop(unroll=True));
    # every xw_scr[t] load / h1s_scr[t] store uses a static aligned index.
    for t in range(Tp):
        gates = xw_scr[t] + jnp.dot(h, whh1, preferred_element_type=jnp.float32)
        i_g, f_g, g_g, o_g = gates_to_ifgo(gates)
        c = f_g * c + i_g * g_g
        h = o_g * jnp.tanh(c)
        h1s_scr[t] = h                  # lane-dense (BB, GW) store, no vst.msk

    # ---------------- layer 2 ----------------
    h1 = h1s_scr[...].reshape(Tp * BB, GW).astype(jnp.bfloat16)
    xw = jnp.dot(h1, wih2_ref[...], preferred_element_type=jnp.float32) + b2_ref[...]
    xw_scr[...] = xw.reshape(Tp, BB, GW)

    whh2 = whh2_ref[...]
    h = jnp.zeros((BB, GW), jnp.float32)
    c = jnp.zeros((BB, GW), jnp.float32)
    for t in range(Tp):
        gates = xw_scr[t] + jnp.dot(h, whh2, preferred_element_type=jnp.float32)
        i_g, f_g, g_g, o_g = gates_to_ifgo(gates)
        c = f_g * c + i_g * g_g
        h = o_g * jnp.tanh(c)
    # only the last hidden state is needed downstream (torch: out[:, -1, :])

    # ---------------- head: fc_1 -> Dropout (eval identity) -> output_layer ----
    # TODO(synk): nn.Dropout(p=0.5) modeled as eval-mode identity (no RNG mask).
    y1 = jnp.dot(h, wfc1_ref[...], preferred_element_type=jnp.float32) + bfc1_ref[...]
    out_ref[...] = (jnp.dot(y1, wout_ref[...], preferred_element_type=jnp.float32)
                    + bout_ref[...])


def lstm_head_forward(seq_tm, lstm_params, wfc1, bfc1, wout, bout):
    Tp, B, IN = seq_tm.shape
    assert len(lstm_params) == 2, "kernel is specialized for lstm_num_layers=2"
    (w_ih1, w_hh1, b_ih1, b_hh1), (w_ih2, w_hh2, b_ih2, b_hh2) = lstm_params
    H = w_hh1.shape[1]
    GW = 4 * H
    BB = B if B <= _BLOCK_B else _BLOCK_B
    nb = pl.cdiv(B, BB)

    def pad_rows(m, rows):
        # zero-pad leading dim to `rows`: padded rows kill the garbage lanes >= H
        # that ride along in the GW-wide hidden-state container.
        return jnp.zeros((rows, m.shape[1]), m.dtype).at[:m.shape[0], :].set(m)

    wih1_t = w_ih1.T.astype(jnp.bfloat16)                    # (128, 4H)
    whh1_p = pad_rows(w_hh1.T, GW)                           # (4H, 4H), f32 recurrent
    b1 = (b_ih1 + b_hh1).reshape(1, GW)
    wih2_p = pad_rows(w_ih2.T, GW).astype(jnp.bfloat16)      # (4H, 4H)
    whh2_p = pad_rows(w_hh2.T, GW)
    b2 = (b_ih2 + b_hh2).reshape(1, GW)
    wfc1_p = pad_rows(wfc1.T, GW)                            # (4H, 32)
    bfc1_r = bfc1.reshape(1, FC1_OUT)
    wout_t = wout.T                                          # (32, 1)
    bout_r = bout.reshape(1, 1)

    return pl.pallas_call(
        _lstm_head_kernel,
        out_shape=jax.ShapeDtypeStruct((B, 1), jnp.float32),
        grid=(nb,),
        in_specs=[
            pl.BlockSpec((Tp, BB, IN), lambda i: (0, i, 0)),
            _bcast_spec((IN, GW)),
            _bcast_spec((GW, GW)),
            _bcast_spec((1, GW)),
            _bcast_spec((GW, GW)),
            _bcast_spec((GW, GW)),
            _bcast_spec((1, GW)),
            _bcast_spec((GW, FC1_OUT)),
            _bcast_spec((1, FC1_OUT)),
            _bcast_spec((FC1_OUT, 1)),
            _bcast_spec((1, 1)),
        ],
        out_specs=pl.BlockSpec((BB, 1), lambda i: (i, 0)),
        scratch_shapes=[
            pltpu.VMEM((Tp, BB, GW), jnp.float32),   # xw: input projections
            pltpu.VMEM((Tp, BB, GW), jnp.float32),   # layer-1 hidden sequence
        ],
        compiler_params=pltpu.CompilerParams(
            dimension_semantics=("parallel",),
            vmem_limit_bytes=_VMEM_LIMIT),
    )(seq_tm, wih1_t, whh1_p, b1, wih2_p, whh2_p, b2,
      wfc1_p, bfc1_r, wout_t, bout_r)


# ---------------------------------- forward ----------------------------------
def forward(params, x):
    B = x.shape[0]
    pooled_t = cnn_forward(x, params['w1'], params['b1'],
                           params['w2'], params['b2'])            # (B, Tp, 128) time-major
    Tp = pooled_t.shape[1]
    # PyTorch: out.view(B, out.shape[2], out.shape[1]) on the (B, 128, Tp) conv output
    # is a raw-memory reshape (NOT a transpose); reproduce it exactly. This is a ~15 KB
    # tensor with a 15-wide minor dim, so the scramble stays in XLA between the kernels.
    seq = jnp.transpose(pooled_t, (0, 2, 1)).reshape(B, Tp, CONV2_OUT)
    # time-major-first layout so the LSTM kernel reads xw_scr[t] on the leading axis.
    seq_tm = jnp.transpose(seq, (1, 0, 2))                        # (Tp, B, 128)
    return lstm_head_forward(seq_tm, params['lstm'],
                             params['wfc1'], params['bfc1'],
                             params['wout'], params['bout'])


# ------------------------------- param init ----------------------------------
def init_params(key):
    ks = jax.random.split(key, 4 + 4 * LSTM_LAYERS + 4)

    def u(k, shape, fan_in):
        bound = 1.0 / jnp.sqrt(jnp.float32(fan_in))
        return jax.random.uniform(k, shape, jnp.float32, -bound, bound)

    H = LSTM_HIDDEN
    params = {
        'w1': u(ks[0], (CONV1_OUT, 1, 2), 2),                        # Conv1d(1, 64, k=2)
        'b1': u(ks[1], (CONV1_OUT,), 2),
        'w2': u(ks[2], (CONV2_OUT, CONV1_OUT, 2), CONV1_OUT * 2),    # Conv1d(64, 128, k=2)
        'b2': u(ks[3], (CONV2_OUT,), CONV1_OUT * 2),
    }
    lstm = []
    in_sz = CONV2_OUT
    idx = 4
    for _ in range(LSTM_LAYERS):
        w_ih = u(ks[idx], (4 * H, in_sz), H); idx += 1
        w_hh = u(ks[idx], (4 * H, H), H); idx += 1
        b_ih = u(ks[idx], (4 * H,), H); idx += 1
        b_hh = u(ks[idx], (4 * H,), H); idx += 1
        lstm.append((w_ih, w_hh, b_ih, b_hh))
        in_sz = H
    params['lstm'] = lstm
    params['wfc1'] = u(ks[idx], (FC1_OUT, H), H); idx += 1
    params['bfc1'] = u(ks[idx], (FC1_OUT,), H); idx += 1
    params['wout'] = u(ks[idx], (1, FC1_OUT), FC1_OUT); idx += 1
    params['bout'] = u(ks[idx], (1,), FC1_OUT)
    return params


if __name__ == "__main__":
    key = jax.random.PRNGKey(0)
    pkey, xkey = jax.random.split(key)
    params = init_params(pkey)

    B, L = 2, 32                                    # x: (batch, 1 channel, length)
    x = jax.random.normal(xkey, (B, 1, L), jnp.float32)

    out = jax.jit(forward)(params, x)
    out = jax.block_until_ready(out)

    assert out.shape == (B, 1), out.shape
    assert bool(jnp.all(jnp.isfinite(out)))
    print("KERNEL_OK")
</pallas_src>

<mosaic_0001>
module attributes {stable_mosaic.version = 11 : i64} {
  func.func @_cnn_kernel(%arg0: i32, %arg1: memref<2x32xf32, #tpu.memory_space<vmem>>, %arg2: memref<1x128xf32, #tpu.memory_space<vmem>>, %arg3: memref<1x128xf32, #tpu.memory_space<vmem>>, %arg4: memref<1x128xf32, #tpu.memory_space<vmem>>, %arg5: memref<1x128xf32, #tpu.memory_space<vmem>>, %arg6: memref<128x128xbf16, #tpu.memory_space<vmem>>, %arg7: memref<1x128xf32, #tpu.memory_space<vmem>>, %arg8: memref<2x15x128xf32, #tpu.memory_space<vmem>>) attributes {dimension_semantics = [#tpu.dimension_semantics<parallel>], iteration_bounds = array<i64: 1>, scalar_prefetch = 0 : i64, scratch_operands = 0 : i64, tpu.core_type = #tpu.core_type<tc>, window_params = [{transform_indices = @transform_0, window_bounds = array<i64: 2, 32>}, {pipeline_mode = #tpu.pipeline_mode<synchronous>, transform_indices = @transform_1, window_bounds = array<i64: 1, 128>}, {pipeline_mode = #tpu.pipeline_mode<synchronous>, transform_indices = @transform_2, window_bounds = array<i64: 1, 128>}, {pipeline_mode = #tpu.pipeline_mode<synchronous>, transform_indices = @transform_3, window_bounds = array<i64: 1, 128>}, {pipeline_mode = #tpu.pipeline_mode<synchronous>, transform_indices = @transform_4, window_bounds = array<i64: 1, 128>}, {pipeline_mode = #tpu.pipeline_mode<synchronous>, transform_indices = @transform_5, window_bounds = array<i64: 128, 128>}, {pipeline_mode = #tpu.pipeline_mode<synchronous>, transform_indices = @transform_6, window_bounds = array<i64: 1, 128>}, {transform_indices = @transform_7, window_bounds = array<i64: 2, 15, 128>}]} {
    %c0 = arith.constant 0 : index
    %c0_0 = arith.constant 0 : index
    %0 = vector.load %arg1[%c0, %c0_0] : memref<2x32xf32, #tpu.memory_space<vmem>>, vector<2x32xf32>
    %c0_1 = arith.constant 0 : index
    %c0_2 = arith.constant 0 : index
    %1 = vector.load %arg2[%c0_1, %c0_2] : memref<1x128xf32, #tpu.memory_space<vmem>>, vector<1x128xf32>
    %c0_3 = arith.constant 0 : index
    %c0_4 = arith.constant 0 : index
    %2 = vector.load %arg3[%c0_3, %c0_4] : memref<1x128xf32, #tpu.memory_space<vmem>>, vector<1x128xf32>
    %c0_5 = arith.constant 0 : index
    %c0_6 = arith.constant 0 : index
    %3 = vector.load %arg4[%c0_5, %c0_6] : memref<1x128xf32, #tpu.memory_space<vmem>>, vector<1x128xf32>
    %c0_7 = arith.constant 0 : index
    %c0_8 = arith.constant 0 : index
    %4 = vector.load %arg5[%c0_7, %c0_8] : memref<1x128xf32, #tpu.memory_space<vmem>>, vector<1x128xf32>
    %5 = vector.extract_strided_slice %0 {offsets = [0, 0], sizes = [2, 30], strides = [1, 1]} : vector<2x32xf32> to vector<2x30xf32>
    %6 = vector.shape_cast %5 : vector<2x30xf32> to vector<2x30x1xf32>
    %7 = vector.extract_strided_slice %0 {offsets = [0, 1], sizes = [2, 30], strides = [1, 1]} : vector<2x32xf32> to vector<2x30xf32>
    %8 = vector.shape_cast %7 : vector<2x30xf32> to vector<2x30x1xf32>
    %9 = vector.extract_strided_slice %0 {offsets = [0, 2], sizes = [2, 30], strides = [1, 1]} : vector<2x32xf32> to vector<2x30xf32>
    %10 = vector.shape_cast %9 : vector<2x30xf32> to vector<2x30x1xf32>
    %11 = vector.shape_cast %1 : vector<1x128xf32> to vector<1x1x128xf32>
    %12 = vector.broadcast %6 : vector<2x30x1xf32> to vector<2x30x128xf32>
    %13 = vector.broadcast %11 : vector<1x1x128xf32> to vector<2x30x128xf32>
    %14 = arith.mulf %12, %13 : vector<2x30x128xf32>
    %15 = vector.shape_cast %2 : vector<1x128xf32> to vector<1x1x128xf32>
    %16 = vector.broadcast %8 : vector<2x30x1xf32> to vector<2x30x128xf32>
    %17 = vector.broadcast %15 : vector<1x1x128xf32> to vector<2x30x128xf32>
    %18 = arith.mulf %16, %17 : vector<2x30x128xf32>
    %19 = arith.addf %14, %18 : vector<2x30x128xf32>
    %20 = vector.shape_cast %3 : vector<1x128xf32> to vector<1x1x128xf32>
    %21 = vector.broadcast %10 : vector<2x30x1xf32> to vector<2x30x128xf32>
    %22 = vector.broadcast %20 : vector<1x1x128xf32> to vector<2x30x128xf32>
    %23 = arith.mulf %21, %22 : vector<2x30x128xf32>
    %24 = arith.addf %19, %23 : vector<2x30x128xf32>
    %25 = vector.shape_cast %4 : vector<1x128xf32> to vector<1x1x128xf32>
    %26 = vector.broadcast %25 : vector<1x1x128xf32> to vector<2x30x128xf32>
    %27 = arith.addf %24, %26 : vector<2x30x128xf32>
    %cst = arith.constant 0.000000e+00 : f32
    %28 = vector.broadcast %cst : f32 to vector<2x30x128xf32>
    %29 = arith.maximumf %27, %28 : vector<2x30x128xf32>
    %30 = vector.shape_cast %29 : vector<2x30x128xf32> to vector<60x128xf32>
    %31 = arith.truncf %30 : vector<60x128xf32> to vector<60x128xbf16>
    %c0_9 = arith.constant 0 : index
    %c0_10 = arith.constant 0 : index
    %32 = vector.load %arg6[%c0_9, %c0_10] : memref<128x128xbf16, #tpu.memory_space<vmem>>, vector<128x128xbf16>
    %cst_11 = arith.constant dense<0.000000e+00> : vector<60x128xf32>
    %33 = tpu.matmul %31, %32, %cst_11 {dimension_numbers = #tpu.dot_dimension_numbers<[1], [0], [0], [1], [0, 0, 1, 1], [], []>} : vector<60x128xbf16>, vector<128x128xbf16>, vector<60x128xf32> -> vector<60x128xf32>
    %c0_12 = arith.constant 0 : index
    %c0_13 = arith.constant 0 : index
    %34 = vector.load %arg7[%c0_12, %c0_13] : memref<1x128xf32, #tpu.memory_space<vmem>>, vector<1x128xf32>
    %35 = vector.broadcast %34 : vector<1x128xf32> to vector<60x128xf32>
    %36 = arith.addf %33, %35 : vector<60x128xf32>
    %cst_14 = arith.constant 0.000000e+00 : f32
    %37 = vector.broadcast %cst_14 : f32 to vector<60x128xf32>
    %38 = arith.maximumf %36, %37 : vector<60x128xf32>
    %39 = vector.shape_cast %38 : vector<60x128xf32> to vector<2x30x128xf32>
    %40 = vector.shape_cast %39 : vector<2x30x128xf32> to vector<2x15x2x128xf32>
    %cst_15 = arith.constant dense<0xFF800000> : vector<2x15x128xf32>
    %41 = vector.multi_reduction <maximumf>, %40, %cst_15 [2] : vector<2x15x2x128xf32> to vector<2x15x128xf32>
    %c0_16 = arith.constant 0 : index
    %c0_17 = arith.constant 0 : index
    %c0_18 = arith.constant 0 : index
    %42 = vector.load %arg8[%c0_16, %c0_17, %c0_18] : memref<2x15x128xf32, #tpu.memory_space<vmem>>, vector<2x15x128xf32>
    tpu.vector_store %arg8[%c0_16, %c0_17, %c0_18], %41 {strides = array<i32>} : memref<2x15x128xf32, #tpu.memory_space<vmem>>, vector<2x15x128xf32>,
    return
  }
  func.func @transform_0(%arg0: i32) -> (i32, i32) {
    %c0_i32 = arith.constant 0 : i32
    %c0_i32_0 = arith.constant 0 : i32
    return %arg0, %c0_i32 : i32, i32
  }
  func.func @transform_1(%arg0: i32) -> (i32, i32) {
    %c0_i32 = arith.constant 0 : i32
    %c0_i32_0 = arith.constant 0 : i32
    %c0_i32_1 = arith.constant 0 : i32
    return %c0_i32, %c0_i32_0 : i32, i32
  }
  func.func @transform_2(%arg0: i32) -> (i32, i32) {
    %c0_i32 = arith.constant 0 : i32
    %c0_i32_0 = arith.constant 0 : i32
    %c0_i32_1 = arith.constant 0 : i32
    return %c0_i32, %c0_i32_0 : i32, i32
  }
  func.func @transform_3(%arg0: i32) -> (i32, i32) {
    %c0_i32 = arith.constant 0 : i32
    %c0_i32_0 = arith.constant 0 : i32
    %c0_i32_1 = arith.constant 0 : i32
    return %c0_i32, %c0_i32_0 : i32, i32
  }
  func.func @transform_4(%arg0: i32) -> (i32, i32) {
    %c0_i32 = arith.constant 0 : i32
    %c0_i32_0 = arith.constant 0 : i32
    %c0_i32_1 = arith.constant 0 : i32
    return %c0_i32, %c0_i32_0 : i32, i32
  }
  func.func @transform_5(%arg0: i32) -> (i32, i32) {
    %c0_i32 = arith.constant 0 : i32
    %c0_i32_0 = arith.constant 0 : i32
    %c0_i32_1 = arith.constant 0 : i32
    return %c0_i32, %c0_i32_0 : i32, i32
  }
  func.func @transform_6(%arg0: i32) -> (i32, i32) {
    %c0_i32 = arith.constant 0 : i32
    %c0_i32_0 = arith.constant 0 : i32
    %c0_i32_1 = arith.constant 0 : i32
    return %c0_i32, %c0_i32_0 : i32, i32
  }
  func.func @transform_7(%arg0: i32) -> (i32, i32, i32) {
    %c0_i32 = arith.constant 0 : i32
    %c0_i32_0 = arith.constant 0 : i32
    %c0_i32_1 = arith.constant 0 : i32
    return %arg0, %c0_i32, %c0_i32_0 : i32, i32, i32
  }
}

module attributes {stable_mosaic.version = 11 : i64} {
  func.func @_lstm_head_kernel(%arg0: i32, %arg1: memref<15x2x128xf32, #tpu.memory_space<vmem>>, %arg2: memref<128x128xbf16, #tpu.memory_space<vmem>>, %arg3: memref<128x128xf32, #tpu.memory_space<vmem>>, %arg4: memref<1x128xf32, #tpu.memory_space<vmem>>, %arg5: memref<128x128xbf16, #tpu.memory_space<vmem>>, %arg6: memref<128x128xf32, #tpu.memory_space<vmem>>, %arg7: memref<1x128xf32, #tpu.memory_space<vmem>>, %arg8: memref<128x32xf32, #tpu.memory_space<vmem>>, %arg9: memref<1x32xf32, #tpu.memory_space<vmem>>, %arg10: memref<32x1xf32, #tpu.memory_space<vmem>>, %arg11: memref<1x1xf32, #tpu.memory_space<vmem>>, %arg12: memref<2x1xf32, #tpu.memory_space<vmem>>, %arg13: memref<15x2x128xf32, #tpu.memory_space<vmem>>, %arg14: memref<15x2x128xf32, #tpu.memory_space<vmem>>) attributes {dimension_semantics = [#tpu.dimension_semantics<parallel>], iteration_bounds = array<i64: 1>, scalar_prefetch = 0 : i64, scratch_operands = 2 : i64, tpu.core_type = #tpu.core_type<tc>, window_params = [{transform_indices = @transform_0, window_bounds = array<i64: 15, 2, 128>}, {pipeline_mode = #tpu.pipeline_mode<synchronous>, transform_indices = @transform_1, window_bounds = array<i64: 128, 128>}, {pipeline_mode = #tpu.pipeline_mode<synchronous>, transform_indices = @transform_2, window_bounds = array<i64: 128, 128>}, {pipeline_mode = #tpu.pipeline_mode<synchronous>, transform_indices = @transform_3, window_bounds = array<i64: 1, 128>}, {pipeline_mode = #tpu.pipeline_mode<synchronous>, transform_indices = @transform_4, window_bounds = array<i64: 128, 128>}, {pipeline_mode = #tpu.pipeline_mode<synchronous>, transform_indices = @transform_5, window_bounds = array<i64: 128, 128>}, {pipeline_mode = #tpu.pipeline_mode<synchronous>, transform_indices = @transform_6, window_bounds = array<i64: 1, 128>}, {pipeline_mode = #tpu.pipeline_mode<synchronous>, transform_indices = @transform_7, window_bounds = array<i64: 128, 32>}, {pipeline_mode = #tpu.pipeline_mode<synchronous>, transform_indices = @transform_8, window_bounds = array<i64: 1, 32>}, {pipeline_mode = #tpu.pipeline_mode<synchronous>, transform_indices = @transform_9, window_bounds = array<i64: 32, 1>}, {pipeline_mode = #tpu.pipeline_mode<synchronous>, transform_indices = @transform_10, window_bounds = array<i64: 1, 1>}, {transform_indices = @transform_11, window_bounds = array<i64: 2, 1>}]} {
    %c0 = arith.constant 0 : index
    %c0_0 = arith.constant 0 : index
    %c0_1 = arith.constant 0 : index
    %0 = vector.load %arg1[%c0, %c0_0, %c0_1] : memref<15x2x128xf32, #tpu.memory_space<vmem>>, vector<15x2x128xf32>
    %1 = vector.shape_cast %0 : vector<15x2x128xf32> to vector<30x128xf32>
    %2 = arith.truncf %1 : vector<30x128xf32> to vector<30x128xbf16>
    %c0_2 = arith.constant 0 : index
    %c0_3 = arith.constant 0 : index
    %3 = vector.load %arg2[%c0_2, %c0_3] : memref<128x128xbf16, #tpu.memory_space<vmem>>, vector<128x128xbf16>
    %cst = arith.constant dense<0.000000e+00> : vector<30x128xf32>
    %4 = tpu.matmul %2, %3, %cst {dimension_numbers = #tpu.dot_dimension_numbers<[1], [0], [0], [1], [0, 0, 1, 1], [], []>} : vector<30x128xbf16>, vector<128x128xbf16>, vector<30x128xf32> -> vector<30x128xf32>
    %c0_4 = arith.constant 0 : index
    %c0_5 = arith.constant 0 : index
    %5 = vector.load %arg4[%c0_4, %c0_5] : memref<1x128xf32, #tpu.memory_space<vmem>>, vector<1x128xf32>
    %6 = vector.broadcast %5 : vector<1x128xf32> to vector<30x128xf32>
    %7 = arith.addf %4, %6 : vector<30x128xf32>
    %8 = vector.shape_cast %7 : vector<30x128xf32> to vector<15x2x128xf32>
    %c0_6 = arith.constant 0 : index
    %c0_7 = arith.constant 0 : index
    %c0_8 = arith.constant 0 : index
    %9 = vector.load %arg13[%c0_6, %c0_7, %c0_8] : memref<15x2x128xf32, #tpu.memory_space<vmem>>, vector<15x2x128xf32>
    tpu.vector_store %arg13[%c0_6, %c0_7, %c0_8], %8 {strides = array<i32>} : memref<15x2x128xf32, #tpu.memory_space<vmem>>, vector<15x2x128xf32>,
    %c0_9 = arith.constant 0 : index
    %c0_10 = arith.constant 0 : index
    %10 = vector.load %arg3[%c0_9, %c0_10] : memref<128x128xf32, #tpu.memory_space<vmem>>, vector<128x128xf32>
    %cst_11 = arith.constant 0.000000e+00 : f32
    %11 = vector.broadcast %cst_11 : f32 to vector<2x128xf32>
    %cst_12 = arith.constant 0.000000e+00 : f32
    %12 = vector.broadcast %cst_12 : f32 to vector<2x128xf32>
    %c0_13 = arith.constant 0 : index
    %c0_14 = arith.constant 0 : index
    %c0_15 = arith.constant 0 : index
    %13 = vector.load %arg13[%c0_13, %c0_14, %c0_15] : memref<15x2x128xf32, #tpu.memory_space<vmem>>, vector<1x2x128xf32>
    %14 = vector.shape_cast %13 : vector<1x2x128xf32> to vector<2x128xf32>
    %cst_16 = arith.constant dense<0.000000e+00> : vector<2x128xf32>
    %15 = tpu.matmul %11, %10, %cst_16 {dimension_numbers = #tpu.dot_dimension_numbers<[1], [0], [0], [1], [0, 0, 1, 1], [], []>} : vector<2x128xf32>, vector<128x128xf32>, vector<2x128xf32> -> vector<2x128xf32>
    %16 = arith.addf %14, %15 : vector<2x128xf32>
    %17 = arith.negf %16 : vector<2x128xf32>
    %18 = math.exp %17 : vector<2x128xf32>
    %cst_17 = arith.constant 1.000000e+00 : f32
    %19 = vector.broadcast %cst_17 : f32 to vector<2x128xf32>
    %20 = arith.addf %19, %18 : vector<2x128xf32>
    %21 = arith.divf %19, %20 : vector<2x128xf32>
    %22 = math.tanh %16 : vector<2x128xf32>
    %c96_i32 = arith.constant 96 : i32
    %23 = tpu.dynamic_rotate %21 by %c96_i32 dim 1 : vector<2x128xf32>, i32 -> vector<2x128xf32>
    %c64_i32 = arith.constant 64 : i32
    %24 = tpu.dynamic_rotate %22 by %c64_i32 dim 1 : vector<2x128xf32>, i32 -> vector<2x128xf32>
    %c32_i32 = arith.constant 32 : i32
    %25 = tpu.dynamic_rotate %21 by %c32_i32 dim 1 : vector<2x128xf32>, i32 -> vector<2x128xf32>
    %26 = arith.mulf %23, %12 : vector<2x128xf32>
    %27 = arith.mulf %21, %24 : vector<2x128xf32>
    %28 = arith.addf %26, %27 : vector<2x128xf32>
    %29 = math.tanh %28 : vector<2x128xf32>
    %30 = arith.mulf %25, %29 : vector<2x128xf32>
    %c0_18 = arith.constant 0 : index
    %c0_19 = arith.constant 0 : index
    %c0_20 = arith.constant 0 : index
    %31 = vector.load %arg14[%c0_18, %c0_19, %c0_20] : memref<15x2x128xf32, #tpu.memory_space<vmem>>, vector<1x2x128xf32>
    %32 = vector.shape_cast %31 : vector<1x2x128xf32> to vector<2x128xf32>
    %33 = vector.shape_cast %30 : vector<2x128xf32> to vector<1x2x128xf32>
    tpu.vector_store %arg14[%c0_18, %c0_19, %c0_20], %33 {strides = array<i32>} : memref<15x2x128xf32, #tpu.memory_space<vmem>>, vector<1x2x128xf32>,
    %c1 = arith.constant 1 : index
    %c0_21 = arith.constant 0 : index
    %c0_22 = arith.constant 0 : index
    %34 = vector.load %arg13[%c1, %c0_21, %c0_22] : memref<15x2x128xf32, #tpu.memory_space<vmem>>, vector<1x2x128xf32>
    %35 = vector.shape_cast %34 : vector<1x2x128xf32> to vector<2x128xf32>
    %cst_23 = arith.constant dense<0.000000e+00> : vector<2x128xf32>
    %36 = tpu.matmul %30, %10, %cst_23 {dimension_numbers = #tpu.dot_dimension_numbers<[1], [0], [0], [1], [0, 0, 1, 1], [], []>} : vector<2x128xf32>, vector<128x128xf32>, vector<2x128xf32> -> vector<2x128xf32>
    %37 = arith.addf %35, %36 : vector<2x128xf32>
    %38 = arith.negf %37 : vector<2x128xf32>
    %39 = math.exp %38 : vector<2x128xf32>
    %cst_24 = arith.constant 1.000000e+00 : f32
    %40 = vector.broadcast %cst_24 : f32 to vector<2x128xf32>
    %41 = arith.addf %40, %39 : vector<2x128xf32>
    %42 = arith.divf %40, %41 : vector<2x128xf32>
    %43 = math.tanh %37 : vector<2x128xf32>
    %c96_i32_25 = arith.constant 96 : i32
    %44 = tpu.dynamic_rotate %42 by %c96_i32_25 dim 1 : vector<2x128xf32>, i32 -> vector<2x128xf32>
    %c64_i32_26 = arith.constant 64 : i32
    %45 = tpu.dynamic_rotate %43 by %c64_i32_26 dim 1 : vector<2x128xf32>, i32 -> vector<2x128xf32>
    %c32_i32_27 = arith.constant 32 : i32
    %46 = tpu.dynamic_rotate %42 by %c32_i32_27 dim 1 : vector<2x128xf32>, i32 -> vector<2x128xf32>
    %47 = arith.mulf %44, %28 : vector<2x128xf32>
    %48 = arith.mulf %42, %45 : vector<2x128xf32>
    %49 = arith.addf %47, %48 : vector<2x128xf32>
    %50 = math.tanh %49 : vector<2x128xf32>
    %51 = arith.mulf %46, %50 : vector<2x128xf32>
    %c1_28 = arith.constant 1 : index
    %c0_29 = arith.constant 0 : index
    %c0_30 = arith.constant 0 : index
    %52 = vector.load %arg14[%c1_28, %c0_29, %c0_30] : memref<15x2x128xf32, #tpu.memory_space<vmem>>, vector<1x2x128xf32>
    %53 = vector.shape_cast %52 : vector<1x2x128xf32> to vector<2x128xf32>
    %54 = vector.shape_cast %51 : vector<2x128xf32> to vector<1x2x128xf32>
    tpu.vector_store %arg14[%c1_28, %c0_29, %c0_30], %54 {strides = array<i32>} : memref<15x2x128xf32, #tpu.memory_space<vmem>>, vector<1x2x128xf32>,
    %c2 = arith.constant 2 : index
    %c0_31 = arith.constant 0 : index
    %c0_32 = arith.constant 0 : index
    %55 = vector.load %arg13[%c2, %c0_31, %c0_32] : memref<15x2x128xf32, #tpu.memory_space<vmem>>, vector<1x2x128xf32>
    %56 = vector.shape_cast %55 : vector<1x2x128xf32> to vector<2x128xf32>
    %cst_33 = arith.constant dense<0.000000e+00> : vector<2x128xf32>
    %57 = tpu.matmul %51, %10, %cst_33 {dimension_numbers = #tpu.dot_dimension_numbers<[1], [0], [0], [1], [0, 0, 1, 1], [], []>} : vector<2x128xf32>, vector<128x128xf32>, vector<2x128xf32> -> vector<2x128xf32>
    %58 = arith.addf %56, %57 : vector<2x128xf32>
    %59 = arith.negf %58 : vector<2x128xf32>
    %60 = math.exp %59 : vector<2x128xf32>
    %cst_34 = arith.constant 1.000000e+00 : f32
    %61 = vector.broadcast %cst_34 : f32 to vector<2x128xf32>
    %62 = arith.addf %61, %60 : vector<2x128xf32>
    %63 = arith.divf %61, %62 : vector<2x128xf32>
    %64 = math.tanh %58 : vector<2x128xf32>
    %c96_i32_35 = arith.constant 96 : i32
    %65 = tpu.dynamic_rotate %63 by %c96_i32_35 dim 1 : vector<2x128xf32>, i32 -> vector<2x128xf32>
    %c64_i32_36 = arith.constant 64 : i32
    %66 = tpu.dynamic_rotate %64 by %c64_i32_36 dim 1 : vector<2x128xf32>, i32 -> vector<2x128xf32>
    %c32_i32_37 = arith.constant 32 : i32
    %67 = tpu.dynamic_rotate %63 by %c32_i32_37 dim 1 : vector<2x128xf32>, i32 -> vector<2x128xf32>
    %68 = arith.mulf %65, %49 : vector<2x128xf32>
    %69 = arith.mulf %63, %66 : vector<2x128xf32>
    %70 = arith.addf %68, %69 : vector<2x128xf32>
    %71 = math.tanh %70 : vector<2x128xf32>
    %72 = arith.mulf %67, %71 : vector<2x128xf32>
    %c2_38 = arith.constant 2 : index
    %c0_39 = arith.constant 0 : index
    %c0_40 = arith.constant 0 : index
    %73 = vector.load %arg14[%c2_38, %c0_39, %c0_40] : memref<15x2x128xf32, #tpu.memory_space<vmem>>, vector<1x2x128xf32>
    %74 = vector.shape_cast %73 : vector<1x2x128xf32> to vector<2x128xf32>
    %75 = vector.shape_cast %72 : vector<2x128xf32> to vector<1x2x128xf32>
    tpu.vector_store %arg14[%c2_38, %c0_39, %c0_40], %75 {strides = array<i32>} : memref<15x2x128xf32, #tpu.memory_space<vmem>>, vector<1x2x128xf32>,
    %c3 = arith.constant 3 : index
    %c0_41 = arith.constant 0 : index
    %c0_42 = arith.constant 0 : index
    %76 = vector.load %arg13[%c3, %c0_41, %c0_42] : memref<15x2x128xf32, #tpu.memory_space<vmem>>, vector<1x2x128xf32>
    %77 = vector.shape_cast %76 : vector<1x2x128xf32> to vector<2x128xf32>
    %cst_43 = arith.constant dense<0.000000e+00> : vector<2x128xf32>
    %78 = tpu.matmul %72, %10, %cst_43 {dimension_numbers = #tpu.dot_dimension_numbers<[1], [0], [0], [1], [0, 0, 1, 1], [], []>} : vector<2x128xf32>, vector<128x128xf32>, vector<2x128xf32> -> vector<2x128xf32>
    %79 = arith.addf %77, %78 : vector<2x128xf32>
    %80 = arith.negf %79 : vector<2x128xf32>
    %81 = math.exp %80 : vector<2x128xf32>
    %cst_44 = arith.constant 1.000000e+00 : f32
    %82 = vector.broadcast %cst_44 : f32 to vector<2x128xf32>
    %83 = arith.addf %82, %81 : vector<2x128xf32>
    %84 = arith.divf %82, %83 : vector<2x128xf32>
    %85 = math.tanh %79 : vector<2x128xf32>
    %c96_i32_45 = arith.constant 96 : i32
    %86 = tpu.dynamic_rotate %84 by %c96_i32_45 dim 1 : vector<2x128xf32>, i32 -> vector<2x128xf32>
    %c64_i32_46 = arith.constant 64 : i32
    %87 = tpu.dynamic_rotate %85 by %c64_i32_46 dim 1 : vector<2x128xf32>, i32 -> vector<2x128xf32>
    %c32_i32_47 = arith.constant 32 : i32
    %88 = tpu.dynamic_rotate %84 by %c32_i32_47 dim 1 : vector<2x128xf32>, i32 -> vector<2x128xf32>
    %89 = arith.mulf %86, %70 : vector<2x128xf32>
    %90 = arith.mulf %84, %87 : vector<2x128xf32>
    %91 = arith.addf %89, %90 : vector<2x128xf32>
    %92 = math.tanh %91 : vector<2x128xf32>
    %93 = arith.mulf %88, %92 : vector<2x128xf32>
    %c3_48 = arith.constant 3 : index
    %c0_49 = arith.constant 0 : index
    %c0_50 = arith.constant 0 : index
    %94 = vector.load %arg14[%c3_48, %c0_49, %c0_50] : memref<15x2x128xf32, #tpu.memory_space<vmem>>, vector<1x2x128xf32>
    %95 = vector.shape_cast %94 : vector<1x2x128xf32> to vector<2x128xf32>
    %96 = vector.shape_cast %93 : vector<2x128xf32> to vector<1x2x128xf32>
    tpu.vector_store %arg14[%c3_48, %c0_49, %c0_50], %96 {strides = array<i32>} : memref<15x2x128xf32, #tpu.memory_space<vmem>>, vector<1x2x128xf32>,
    %c4 = arith.constant 4 : index
    %c0_51 = arith.constant 0 : index
    %c0_52 = arith.constant 0 : index
    %97 = vector.load %arg13[%c4, %c0_51, %c0_52] : memref<15x2x128xf32, #tpu.memory_space<vmem>>, vector<1x2x128xf32>
    %98 = vector.shape_cast %97 : vector<1x2x128xf32> to vector<2x128xf32>
    %cst_53 = arith.constant dense<0.000000e+00> : vector<2x128xf32>
    %99 = tpu.matmul %93, %10, %cst_53 {dimension_numbers = #tpu.dot_dimension_numbers<[1], [0], [0], [1], [0, 0, 1, 1], [], []>} : vector<2x128xf32>, vector<128x128xf32>, vector<2x128xf32> -> vector<2x128xf32>
    %100 = arith.addf %98, %99 : vector<2x128xf32>
    %101 = arith.negf %100 : vector<2x128xf32>
    %102 = math.exp %101 : vector<2x128xf32>
    %cst_54 = arith.constant 1.000000e+00 : f32
    %103 = vector.broadcast %cst_54 : f32 to vector<2x128xf32>
    %104 = arith.addf %103, %102 : vector<2x128xf32>
    %105 = arith.divf %103, %104 : vector<2x128xf32>
    %106 = math.tanh %100 : vector<2x128xf32>
    %c96_i32_55 = arith.constant 96 : i32
    %107 = tpu.dynamic_rotate %105 by %c96_i32_55 dim 1 : vector<2x128xf32>, i32 -> vector<2x128xf32>
    %c64_i32_56 = arith.constant 64 : i32
    %108 = tpu.dynamic_rotate %106 by %c64_i32_56 dim 1 : vector<2x128xf32>, i32 -> vector<2x128xf32>
    %c32_i32_57 = arith.constant 32 : i32
    %109 = tpu.dynamic_rotate %105 by %c32_i32_57 dim 1 : vector<2x128xf32>, i32 -> vector<2x128xf32>
    %110 = arith.mulf %107, %91 : vector<2x128xf32>
    %111 = arith.mulf %105, %108 : vector<2x128xf32>
    %112 = arith.addf %110, %111 : vector<2x128xf32>
    %113 = math.tanh %112 : vector<2x128xf32>
    %114 = arith.mulf %109, %113 : vector<2x128xf32>
    %c4_58 = arith.constant 4 : index
    %c0_59 = arith.constant 0 : index
    %c0_60 = arith.constant 0 : index
    %115 = vector.load %arg14[%c4_58, %c0_59, %c0_60] : memref<15x2x128xf32, #tpu.memory_space<vmem>>, vector<1x2x128xf32>
    %116 = vector.shape_cast %115 : vector<1x2x128xf32> to vector<2x128xf32>
    %117 = vector.shape_cast %114 : vector<2x128xf32> to vector<1x2x128xf32>
    tpu.vector_store %arg14[%c4_58, %c0_59, %c0_60], %117 {strides = array<i32>} : memref<15x2x128xf32, #tpu.memory_space<vmem>>, vector<1x2x128xf32>,
    %c5 = arith.constant 5 : index
    %c0_61 = arith.constant 0 : index
    %c0_62 = arith.constant 0 : index
    %118 = vector.load %arg13[%c5, %c0_61, %c0_62] : memref<15x2x128xf32, #tpu.memory_space<vmem>>, vector<1x2x128xf32>
    %119 = vector.shape_cast %118 : vector<1x2x128xf32> to vector<2x128xf32>
    %cst_63 = arith.constant dense<0.000000e+00> : vector<2x128xf32>
    %120 = tpu.matmul %114, %10, %cst_63 {dimension_numbers = #tpu.dot_dimension_numbers<[1], [0], [0], [1], [0, 0, 1, 1], [], []>} : vector<2x128xf32>, vector<128x128xf32>, vector<2x128xf32> -> vector<2x128xf32>
    %121 = arith.addf %119, %120 : vector<2x128xf32>
    %122 = arith.negf %121 : vector<2x128xf32>
    %123 = math.exp %122 : vector<2x128xf32>
    %cst_64 = arith.constant 1.000000e+00 : f32
    %124 = vector.broadcast %cst_64 : f32 to vector<2x128xf32>
    %125 = arith.addf %124, %123 : vector<2x128xf32>
    %126 = arith.divf %124, %125 : vector<2x128xf32>
    %127 = math.tanh %121 : vector<2x128xf32>
    %c96_i32_65 = arith.constant 96 : i32
    %128 = tpu.dynamic_rotate %126 by %c96_i32_65 dim 1 : vector<2x128xf32>, i32 -> vector<2x128xf32>
    %c64_i32_66 = arith.constant 64 : i32
    %129 = tpu.dynamic_rotate %127 by %c64_i32_66 dim 1 : vector<2x128xf32>, i32 -> vector<2x128xf32>
    %c32_i32_67 = arith.constant 32 : i32
    %130 = tpu.dynamic_rotate %126 by %c32_i32_67 dim 1 : vector<2x128xf32>, i32 -> vector<2x128xf32>
    %131 = arith.mulf %128, %112 : vector<2x128xf32>
    %132 = arith.mulf %126, %129 : vector<2x128xf32>
    %133 = arith.addf %131, %132 : vector<2x128xf32>
    %134 = math.tanh %133 : vector<2x128xf32>
    %135 = arith.mulf %130, %134 : vector<2x128xf32>
    %c5_68 = arith.constant 5 : index
    %c0_69 = arith.constant 0 : index
    %c0_70 = arith.constant 0 : index
    %136 = vector.load %arg14[%c5_68, %c0_69, %c0_70] : memref<15x2x128xf32, #tpu.memory_space<vmem>>, vector<1x2x128xf32>
    %137 = vector.shape_cast %136 : vector<1x2x128xf32> to vector<2x128xf32>
    %138 = vector.shape_cast %135 : vector<2x128xf32> to vector<1x2x128xf32>
    tpu.vector_store %arg14[%c5_68, %c0_69, %c0_70], %138 {strides = array<i32>} : memref<15x2x128xf32, #tpu.memory_space<vmem>>, vector<1x2x128xf32>,
    %c6 = arith.constant 6 : index
    %c0_71 = arith.constant 0 : index
    %c0_72 = arith.constant 0 : index
    %139 = vector.load %arg13[%c6, %c0_71, %c0_72] : memref<15x2x128xf32, #tpu.memory_space<vmem>>, vector<1x2x128xf32>
    %140 = vector.shape_cast %139 : vector<1x2x128xf32> to vector<2x128xf32>
    %cst_73 = arith.constant dense<0.000000e+00> : vector<2x128xf32>
    %141 = tpu.matmul %135, %10, %cst_73 {dimension_numbers = #tpu.dot_dimension_numbers<[1], [0], [0], [1], [0, 0, 1, 1], [], []>} : vector<2x128xf32>, vector<128x128xf32>, vector<2x128xf32> -> vector<2x128xf32>
    %142 = arith.addf %140, %141 : vector<2x128xf32>
    %143 = arith.negf %142 : vector<2x128xf32>
    %144 = math.exp %143 : vector<2x128xf32>
    %cst_74 = arith.constant 1.000000e+00 : f32
    %145 = vector.broadcast %cst_74 : f32 to vector<2x128xf32>
    %146 = arith.addf %145, %144 : vector<2x128xf32>
    %147 = arith.divf %145, %146 : vector<2x128xf32>
    %148 = math.tanh %142 : vector<2x128xf32>
    %c96_i32_75 = arith.constant 96 : i32
    %149 = tpu.dynamic_rotate %147 by %c96_i32_75 dim 1 : vector<2x128xf32>, i32 -> vector<2x128xf32>
    %c64_i32_76 = arith.constant 64 : i32
    %150 = tpu.dynamic_rotate %148 by %c64_i32_76 dim 1 : vector<2x128xf32>, i32 -> vector<2x128xf32>
    %c32_i32_77 = arith.constant 32 : i32
    %151 = tpu.dynamic_rotate %147 by %c32_i32_77 dim 1 : vector<2x128xf32>, i32 -> vector<2x128xf32>
    %152 = arith.mulf %149, %133 : vector<2x128xf32>
    %153 = arith.mulf %147, %150 : vector<2x128xf32>
    %154 = arith.addf %152, %153 : vector<2x128xf32>
    %155 = math.tanh %154 : vector<2x128xf32>
    %156 = arith.mulf %151, %155 : vector<2x128xf32>
    %c6_78 = arith.constant 6 : index
    %c0_79 = arith.constant 0 : index
    %c0_80 = arith.constant 0 : index
    %157 = vector.load %arg14[%c6_78, %c0_79, %c0_80] : memref<15x2x128xf32, #tpu.memory_space<vmem>>, vector<1x2x128xf32>
    %158 = vector.shape_cast %157 : vector<1x2x128xf32> to vector<2x128xf32>
    %159 = vector.shape_cast %156 : vector<2x128xf32> to vector<1x2x128xf32>
    tpu.vector_store %arg14[%c6_78, %c0_79, %c0_80], %159 {strides = array<i32>} : memref<15x2x128xf32, #tpu.memory_space<vmem>>, vector<1x2x128xf32>,
    %c7 = arith.constant 7 : index
    %c0_81 = arith.constant 0 : index
    %c0_82 = arith.constant 0 : index
    %160 = vector.load %arg13[%c7, %c0_81, %c0_82] : memref<15x2x128xf32, #tpu.memory_space<vmem>>, vector<1x2x128xf32>
    %161 = vector.shape_cast %160 : vector<1x2x128xf32> to vector<2x128xf32>
    %cst_83 = arith.constant dense<0.000000e+00> : vector<2x128xf32>
    %162 = tpu.matmul %156, %10, %cst_83 {dimension_numbers = #tpu.dot_dimension_numbers<[1], [0], [0], [1], [0, 0, 1, 1], [], []>} : vector<2x128xf32>, vector<128x128xf32>, vector<2x128xf32> -> vector<2x128xf32>
    %163 = arith.addf %161, %162 : vector<2x128xf32>
    %164 = arith.negf %163 : vector<2x128xf32>
    %165 = math.exp %164 : vector<2x128xf32>
    %cst_84 = arith.constant 1.000000e+00 : f32
    %166 = vector.broadcast %cst_84 : f32 to vector<2x128xf32>
    %167 = arith.addf %166, %165 : vector<2x128xf32>
    %168 = arith.divf %166, %167 : vector<2x128xf32>
    %169 = math.tanh %163 : vector<2x128xf32>
    %c96_i32_85 = arith.constant 96 : i32
    %170 = tpu.dynamic_rotate %168 by %c96_i32_85 dim 1 : vector<2x128xf32>, i32 -> vector<2x128xf32>
    %c64_i32_86 = arith.constant 64 : i32
    %171 = tpu.dynamic_rotate %169 by %c64_i32_86 dim 1 : vector<2x128xf32>, i32 -> vector<2x128xf32>
    %c32_i32_87 = arith.constant 32 : i32
    %172 = tpu.dynamic_rotate %168 by %c32_i32_87 dim 1 : vector<2x128xf32>, i32 -> vector<2x128xf32>
    %173 = arith.mulf %170, %154 : vector<2x128xf32>
    %174 = arith.mulf %168, %171 : vector<2x128xf32>
    %175 = arith.addf %173, %174 : vector<2x128xf32>
    %176 = math.tanh %175 : vector<2x128xf32>
    %177 = arith.mulf %172, %176 : vector<2x128xf32>
    %c7_88 = arith.constant 7 : index
    %c0_89 = arith.constant 0 : index
    %c0_90 = arith.constant 0 : index
    %178 = vector.load %arg14[%c7_88, %c0_89, %c0_90] : memref<15x2x128xf32, #tpu.memory_space<vmem>>, vector<1x2x128xf32>
    %179 = vector.shape_cast %178 : vector<1x2x128xf32> to vector<2x128xf32>
    %180 = vector.shape_cast %177 : vector<2x128xf32> to vector<1x2x128xf32>
    tpu.vector_store %arg14[%c7_88, %c0_89, %c0_90], %180 {strides = array<i32>} : memref<15x2x128xf32, #tpu.memory_space<vmem>>, vector<1x2x128xf32>,
    %c8 = arith.constant 8 : index
    %c0_91 = arith.constant 0 : index
    %c0_92 = arith.constant 0 : index
    %181 = vector.load %arg13[%c8, %c0_91, %c0_92] : memref<15x2x128xf32, #tpu.memory_space<vmem>>, vector<1x2x128xf32>
    %182 = vector.shape_cast %181 : vector<1x2x128xf32> to vector<2x128xf32>
    %cst_93 = arith.constant dense<0.000000e+00> : vector<2x128xf32>
    %183 = tpu.matmul %177, %10, %cst_93 {dimension_numbers = #tpu.dot_dimension_numbers<[1], [0], [0], [1], [0, 0, 1, 1], [], []>} : vector<2x128xf32>, vector<128x128xf32>, vector<2x128xf32> -> vector<2x128xf32>
    %184 = arith.addf %182, %183 : vector<2x128xf32>
    %185 = arith.negf %184 : vector<2x128xf32>
    %186 = math.exp %185 : vector<2x128xf32>
    %cst_94 = arith.constant 1.000000e+00 : f32
    %187 = vector.broadcast %cst_94 : f32 to vector<2x128xf32>
    %188 = arith.addf %187, %186 : vector<2x128xf32>
    %189 = arith.divf %187, %188 : vector<2x128xf32>
    %190 = math.tanh %184 : vector<2x128xf32>
    %c96_i32_95 = arith.constant 96 : i32
    %191 = tpu.dynamic_rotate %189 by %c96_i32_95 dim 1 : vector<2x128xf32>, i32 -> vector<2x128xf32>
    %c64_i32_96 = arith.constant 64 : i32
    %192 = tpu.dynamic_rotate %190 by %c64_i32_96 dim 1 : vector<2x128xf32>, i32 -> vector<2x128xf32>
    %c32_i32_97 = arith.constant 32 : i32
    %193 = tpu.dynamic_rotate %189 by %c32_i32_97 dim 1 : vector<2x128xf32>, i32 -> vector<2x128xf32>
    %194 = arith.mulf %191, %175 : vector<2x128xf32>
    %195 = arith.mulf %189, %192 : vector<2x128xf32>
    %196 = arith.addf %194, %195 : vector<2x128xf32>
    %197 = math.tanh %196 : vector<2x128xf32>
    %198 = arith.mulf %193, %197 : vector<2x128xf32>
    %c8_98 = arith.constant 8 : index
    %c0_99 = arith.constant 0 : index
    %c0_100 = arith.constant 0 : index
    %199 = vector.load %arg14[%c8_98, %c0_99, %c0_100] : memref<15x2x128xf32, #tpu.memory_space<vmem>>, vector<1x2x128xf32>
    %200 = vector.shape_cast %199 : vector<1x2x128xf32> to vector<2x128xf32>
    %201 = vector.shape_cast %198 : vector<2x128xf32> to vector<1x2x128xf32>
    tpu.vector_store %arg14[%c8_98, %c0_99, %c0_100], %201 {strides = array<i32>} : memref<15x2x128xf32, #tpu.memory_space<vmem>>, vector<1x2x128xf32>,
    %c9 = arith.constant 9 : index
    %c0_101 = arith.constant 0 : index
    %c0_102 = arith.constant 0 : index
    %202 = vector.load %arg13[%c9, %c0_101, %c0_102] : memref<15x2x128xf32, #tpu.memory_space<vmem>>, vector<1x2x128xf32>
    %203 = vector.shape_cast %202 : vector<1x2x128xf32> to vector<2x128xf32>
    %cst_103 = arith.constant dense<0.000000e+00> : vector<2x128xf32>
    %204 = tpu.matmul %198, %10, %cst_103 {dimension_numbers = #tpu.dot_dimension_numbers<[1], [0], [0], [1], [0, 0, 1, 1], [], []>} : vector<2x128xf32>, vector<128x128xf32>, vector<2x128xf32> -> vector<2x128xf32>
    %205 = arith.addf %203, %204 : vector<2x128xf32>
    %206 = arith.negf %205 : vector<2x128xf32>
    %207 = math.exp %206 : vector<2x128xf32>
    %cst_104 = arith.constant 1.000000e+00 : f32
    %208 = vector.broadcast %cst_104 : f32 to vector<2x128xf32>
    %209 = arith.addf %208, %207 : vector<2x128xf32>
    %210 = arith.divf %208, %209 : vector<2x128xf32>
    %211 = math.tanh %205 : vector<2x128xf32>
    %c96_i32_105 = arith.constant 96 : i32
    %212 = tpu.dynamic_rotate %210 by %c96_i32_105 dim 1 : vector<2x128xf32>, i32 -> vector<2x128xf32>
    %c64_i32_106 = arith.constant 64 : i32
    %213 = tpu.dynamic_rotate %211 by %c64_i32_106 dim 1 : vector<2x128xf32>, i32 -> vector<2x128xf32>
    %c32_i32_107 = arith.constant 32 : i32
    %214 = tpu.dynamic_rotate %210 by %c32_i32_107 dim 1 : vector<2x128xf32>, i32 -> vector<2x128xf32>
    %215 = arith.mulf %212, %196 : vector<2x128xf32>
    %216 = arith.mulf %210, %213 : vector<2x128xf32>
    %217 = arith.addf %215, %216 : vector<2x128xf32>
    %218 = math.tanh %217 : vector<2x128xf32>
    %219 = arith.mulf %214, %218 : vector<2x128xf32>
    %c9_108 = arith.constant 9 : index
    %c0_109 = arith.constant 0 : index
    %c0_110 = arith.constant 0 : index
    %220 = vector.load %arg14[%c9_108, %c0_109, %c0_110] : memref<15x2x128xf32, #tpu.memory_space<vmem>>, vector<1x2x128xf32>
    %221 = vector.shape_cast %220 : vector<1x2x128xf32> to vector<2x128xf32>
    %222 = vector.shape_cast %219 : vector<2x128xf32> to vector<1x2x128xf32>
    tpu.vector_store %arg14[%c9_108, %c0_109, %c0_110], %222 {strides = array<i32>} : memref<15x2x128xf32, #tpu.memory_space<vmem>>, vector<1x2x128xf32>,
    %c10 = arith.constant 10 : index
    %c0_111 = arith.constant 0 : index
    %c0_112 = arith.constant 0 : index
    %223 = vector.load %arg13[%c10, %c0_111, %c0_112] : memref<15x2x128xf32, #tpu.memory_space<vmem>>, vector<1x2x128xf32>
    %224 = vector.shape_cast %223 : vector<1x2x128xf32> to vector<2x128xf32>
    %cst_113 = arith.constant dense<0.000000e+00> : vector<2x128xf32>
    %225 = tpu.matmul %219, %10, %cst_113 {dimension_numbers = #tpu.dot_dimension_numbers<[1], [0], [0], [1], [0, 0, 1, 1], [], []>} : vector<2x128xf32>, vector<128x128xf32>, vector<2x128xf32> -> vector<2x128xf32>
    %226 = arith.addf %224, %225 : vector<2x128xf32>
    %227 = arith.negf %226 : vector<2x128xf32>
    %228 = math.exp %227 : vector<2x128xf32>
    %cst_114 = arith.constant 1.000000e+00 : f32
    %229 = vector.broadcast %cst_114 : f32 to vector<2x128xf32>
    %230 = arith.addf %229, %228 : vector<2x128xf32>
    %231 = arith.divf %229, %230 : vector<2x128xf32>
    %232 = math.tanh %226 : vector<2x128xf32>
    %c96_i32_115 = arith.constant 96 : i32
    %233 = tpu.dynamic_rotate %231 by %c96_i32_115 dim 1 : vector<2x128xf32>, i32 -> vector<2x128xf32>
    %c64_i32_116 = arith.constant 64 : i32
    %234 = tpu.dynamic_rotate %232 by %c64_i32_116 dim 1 : vector<2x128xf32>, i32 -> vector<2x128xf32>
    %c32_i32_117 = arith.constant 32 : i32
    %235 = tpu.dynamic_rotate %231 by %c32_i32_117 dim 1 : vector<2x128xf32>, i32 -> vector<2x128xf32>
    %236 = arith.mulf %233, %217 : vector<2x128xf32>
    %237 = arith.mulf %231, %234 : vector<2x128xf32>
    %238 = arith.addf %236, %237 : vector<2x128xf32>
    %239 = math.tanh %238 : vector<2x128xf32>
    %240 = arith.mulf %235, %239 : vector<2x128xf32>
    %c10_118 = arith.constant 10 : index
    %c0_119 = arith.constant 0 : index
    %c0_120 = arith.constant 0 : index
    %241 = vector.load %arg14[%c10_118, %c0_119, %c0_120] : memref<15x2x128xf32, #tpu.memory_space<vmem>>, vector<1x2x128xf32>
    %242 = vector.shape_cast %241 : vector<1x2x128xf32> to vector<2x128xf32>
    %243 = vector.shape_cast %240 : vector<2x128xf32> to vector<1x2x128xf32>
    tpu.vector_store %arg14[%c10_118, %c0_119, %c0_120], %243 {strides = array<i32>} : memref<15x2x128xf32, #tpu.memory_space<vmem>>, vector<1x2x128xf32>,
    %c11 = arith.constant 11 : index
    %c0_121 = arith.constant 0 : index
    %c0_122 = arith.constant 0 : index
    %244 = vector.load %arg13[%c11, %c0_121, %c0_122] : memref<15x2x128xf32, #tpu.memory_space<vmem>>, vector<1x2x128xf32>
    %245 = vector.shape_cast %244 : vector<1x2x128xf32> to vector<2x128xf32>
    %cst_123 = arith.constant dense<0.000000e+00> : vector<2x128xf32>
    %246 = tpu.matmul %240, %10, %cst_123 {dimension_numbers = #tpu.dot_dimension_numbers<[1], [0], [0], [1], [0, 0, 1, 1], [], []>} : vector<2x128xf32>, vector<128x128xf32>, vector<2x128xf32> -> vector<2x128xf32>
    %247 = arith.addf %245, %246 : vector<2x128xf32>
    %248 = arith.negf %247 : vector<2x128xf32>
    %249 = math.exp %248 : vector<2x128xf32>
    %cst_124 = arith.constant 1.000000e+00 : f32
    %250 = vector.broadcast %cst_124 : f32 to vector<2x128xf32>
    %251 = arith.addf %250, %249 : vector<2x128xf32>
    %252 = arith.divf %250, %251 : vector<2x128xf32>
    %253 = math.tanh %247 : vector<2x128xf32>
    %c96_i32_125 = arith.constant 96 : i32
    %254 = tpu.dynamic_rotate %252 by %c96_i32_125 dim 1 : vector<2x128xf32>, i32 -> vector<2x128xf32>
    %c64_i32_126 = arith.constant 64 : i32
    %255 = tpu.dynamic_rotate %253 by %c64_i32_126 dim 1 : vector<2x128xf32>, i32 -> vector<2x128xf32>
    %c32_i32_127 = arith.constant 32 : i32
    %256 = tpu.dynamic_rotate %252 by %c32_i32_127 dim 1 : vector<2x128xf32>, i32 -> vector<2x128xf32>
    %257 = arith.mulf %254, %238 : vector<2x128xf32>
    %258 = arith.mulf %252, %255 : vector<2x128xf32>
    %259 = arith.addf %257, %258 : vector<2x128xf32>
    %260 = math.tanh %259 : vector<2x128xf32>
    %261 = arith.mulf %256, %260 : vector<2x128xf32>
    %c11_128 = arith.constant 11 : index
    %c0_129 = arith.constant 0 : index
    %c0_130 = arith.constant 0 : index
    %262 = vector.load %arg14[%c11_128, %c0_129, %c0_130] : memref<15x2x128xf32, #tpu.memory_space<vmem>>, vector<1x2x128xf32>
    %263 = vector.shape_cast %262 : vector<1x2x128xf32> to vector<2x128xf32>
    %264 = vector.shape_cast %261 : vector<2x128xf32> to vector<1x2x128xf32>
    tpu.vector_store %arg14[%c11_128, %c0_129, %c0_130], %264 {strides = array<i32>} : memref<15x2x128xf32, #tpu.memory_space<vmem>>, vector<1x2x128xf32>,
    %c12 = arith.constant 12 : index
    %c0_131 = arith.constant 0 : index
    %c0_132 = arith.constant 0 : index
    %265 = vector.load %arg13[%c12, %c0_131, %c0_132] : memref<15x2x128xf32, #tpu.memory_space<vmem>>, vector<1x2x128xf32>
    %266 = vector.shape_cast %265 : vector<1x2x128xf32> to vector<2x128xf32>
    %cst_133 = arith.constant dense<0.000000e+00> : vector<2x128xf32>
    %267 = tpu.matmul %261, %10, %cst_133 {dimension_numbers = #tpu.dot_dimension_numbers<[1], [0], [0], [1], [0, 0, 1, 1], [], []>} : vector<2x128xf32>, vector<128x128xf32>, vector<2x128xf32> -> vector<2x128xf32>
    %268 = arith.addf %266, %267 : vector<2x128xf32>
    %269 = arith.negf %268 : vector<2x128xf32>
    %270 = math.exp %269 : vector<2x128xf32>
    %cst_134 = arith.constant 1.000000e+00 : f32
    %271 = vector.broadcast %cst_134 : f32 to vector<2x128xf32>
    %272 = arith.addf %271, %270 : vector<2x128xf32>
    %273 = arith.divf %271, %272 : vector<2x128xf32>
    %274 = math.tanh %268 : vector<2x128xf32>
    %c96_i32_135 = arith.constant 96 : i32
    %275 = tpu.dynamic_rotate %273 by %c96_i32_135 dim 1 : vector<2x128xf32>, i32 -> vector<2x128xf32>
    %c64_i32_136 = arith.constant 64 : i32
    %276 = tpu.dynamic_rotate %274 by %c64_i32_136 dim 1 : vector<2x128xf32>, i32 -> vector<2x128xf32>
    %c32_i32_137 = arith.constant 32 : i32
    %277 = tpu.dynamic_rotate %273 by %c32_i32_137 dim 1 : vector<2x128xf32>, i32 -> vector<2x128xf32>
    %278 = arith.mulf %275, %259 : vector<2x128xf32>
    %279 = arith.mulf %273, %276 : vector<2x128xf32>
    %280 = arith.addf %278, %279 : vector<2x128xf32>
    %281 = math.tanh %280 : vector<2x128xf32>
    %282 = arith.mulf %277, %281 : vector<2x128xf32>
    %c12_138 = arith.constant 12 : index
    %c0_139 = arith.constant 0 : index
    %c0_140 = arith.constant 0 : index
    %283 = vector.load %arg14[%c12_138, %c0_139, %c0_140] : memref<15x2x128xf32, #tpu.memory_space<vmem>>, vector<1x2x128xf32>
    %284 = vector.shape_cast %283 : vector<1x2x128xf32> to vector<2x128xf32>
    %285 = vector.shape_cast %282 : vector<2x128xf32> to vector<1x2x128xf32>
    tpu.vector_store %arg14[%c12_138, %c0_139, %c0_140], %285 {strides = array<i32>} : memref<15x2x128xf32, #tpu.memory_space<vmem>>, vector<1x2x128xf32>,
    %c13 = arith.constant 13 : index
    %c0_141 = arith.constant 0 : index
    %c0_142 = arith.constant 0 : index
    %286 = vector.load %arg13[%c13, %c0_141, %c0_142] : memref<15x2x128xf32, #tpu.memory_space<vmem>>, vector<1x2x128xf32>
    %287 = vector.shape_cast %286 : vector<1x2x128xf32> to vector<2x128xf32>
    %cst_143 = arith.constant dense<0.000000e+00> : vector<2x128xf32>
    %288 = tpu.matmul %282, %10, %cst_143 {dimension_numbers = #tpu.dot_dimension_numbers<[1], [0], [0], [1], [0, 0, 1, 1], [], []>} : vector<2x128xf32>, vector<128x128xf32>, vector<2x128xf32> -> vector<2x128xf32>
    %289 = arith.addf %287, %288 : vector<2x128xf32>
    %290 = arith.negf %289 : vector<2x128xf32>
    %291 = math.exp %290 : vector<2x128xf32>
    %cst_144 = arith.constant 1.000000e+00 : f32
    %292 = vector.broadcast %cst_144 : f32 to vector<2x128xf32>
    %293 = arith.addf %292, %291 : vector<2x128xf32>
    %294 = arith.divf %292, %293 : vector<2x128xf32>
    %295 = math.tanh %289 : vector<2x128xf32>
    %c96_i32_145 = arith.constant 96 : i32
    %296 = tpu.dynamic_rotate %294 by %c96_i32_145 dim 1 : vector<2x128xf32>, i32 -> vector<2x128xf32>
    %c64_i32_146 = arith.constant 64 : i32
    %297 = tpu.dynamic_rotate %295 by %c64_i32_146 dim 1 : vector<2x128xf32>, i32 -> vector<2x128xf32>
    %c32_i32_147 = arith.constant 32 : i32
    %298 = tpu.dynamic_rotate %294 by %c32_i32_147 dim 1 : vector<2x128xf32>, i32 -> vector<2x128xf32>
    %299 = arith.mulf %296, %280 : vector<2x128xf32>
    %300 = arith.mulf %294, %297 : vector<2x128xf32>
    %301 = arith.addf %299, %300 : vector<2x128xf32>
    %302 = math.tanh %301 : vector<2x128xf32>
    %303 = arith.mulf %298, %302 : vector<2x128xf32>
    %c13_148 = arith.constant 13 : index
    %c0_149 = arith.constant 0 : index
    %c0_150 = arith.constant 0 : index
    %304 = vector.load %arg14[%c13_148, %c0_149, %c0_150] : memref<15x2x128xf32, #tpu.memory_space<vmem>>, vector<1x2x128xf32>
    %305 = vector.shape_cast %304 : vector<1x2x128xf32> to vector<2x128xf32>
    %306 = vector.shape_cast %303 : vector<2x128xf32> to vector<1x2x128xf32>
    tpu.vector_store %arg14[%c13_148, %c0_149, %c0_150], %306 {strides = array<i32>} : memref<15x2x128xf32, #tpu.memory_space<vmem>>, vector<1x2x128xf32>,
    %c14 = arith.constant 14 : index
    %c0_151 = arith.constant 0 : index
    %c0_152 = arith.constant 0 : index
    %307 = vector.load %arg13[%c14, %c0_151, %c0_152] : memref<15x2x128xf32, #tpu.memory_space<vmem>>, vector<1x2x128xf32>
    %308 = vector.shape_cast %307 : vector<1x2x128xf32> to vector<2x128xf32>
    %cst_153 = arith.constant dense<0.000000e+00> : vector<2x128xf32>
    %309 = tpu.matmul %303, %10, %cst_153 {dimension_numbers = #tpu.dot_dimension_numbers<[1], [0], [0], [1], [0, 0, 1, 1], [], []>} : vector<2x128xf32>, vector<128x128xf32>, vector<2x128xf32> -> vector<2x128xf32>
    %310 = arith.addf %308, %309 : vector<2x128xf32>
    %311 = arith.negf %310 : vector<2x128xf32>
    %312 = math.exp %311 : vector<2x128xf32>
    %cst_154 = arith.constant 1.000000e+00 : f32
    %313 = vector.broadcast %cst_154 : f32 to vector<2x128xf32>
    %314 = arith.addf %313, %312 : vector<2x128xf32>
    %315 = arith.divf %313, %314 : vector<2x128xf32>
    %316 = math.tanh %310 : vector<2x128xf32>
    %c96_i32_155 = arith.constant 96 : i32
    %317 = tpu.dynamic_rotate %315 by %c96_i32_155 dim 1 : vector<2x128xf32>, i32 -> vector<2x128xf32>
    %c64_i32_156 = arith.constant 64 : i32
    %318 = tpu.dynamic_rotate %316 by %c64_i32_156 dim 1 : vector<2x128xf32>, i32 -> vector<2x128xf32>
    %c32_i32_157 = arith.constant 32 : i32
    %319 = tpu.dynamic_rotate %315 by %c32_i32_157 dim 1 : vector<2x128xf32>, i32 -> vector<2x128xf32>
    %320 = arith.mulf %317, %301 : vector<2x128xf32>
    %321 = arith.mulf %315, %318 : vector<2x128xf32>
    %322 = arith.addf %320, %321 : vector<2x128xf32>
    %323 = math.tanh %322 : vector<2x128xf32>
    %324 = arith.mulf %319, %323 : vector<2x128xf32>
    %c14_158 = arith.constant 14 : index
    %c0_159 = arith.constant 0 : index
    %c0_160 = arith.constant 0 : index
    %325 = vector.load %arg14[%c14_158, %c0_159, %c0_160] : memref<15x2x128xf32, #tpu.memory_space<vmem>>, vector<1x2x128xf32>
    %326 = vector.shape_cast %325 : vector<1x2x128xf32> to vector<2x128xf32>
    %327 = vector.shape_cast %324 : vector<2x128xf32> to vector<1x2x128xf32>
    tpu.vector_store %arg14[%c14_158, %c0_159, %c0_160], %327 {strides = array<i32>} : memref<15x2x128xf32, #tpu.memory_space<vmem>>, vector<1x2x128xf32>,
    %c0_161 = arith.constant 0 : index
    %c0_162 = arith.constant 0 : index
    %c0_163 = arith.constant 0 : index
    %328 = vector.load %arg14[%c0_161, %c0_162, %c0_163] : memref<15x2x128xf32, #tpu.memory_space<vmem>>, vector<15x2x128xf32>
    %329 = vector.shape_cast %328 : vector<15x2x128xf32> to vector<30x128xf32>
    %330 = arith.truncf %329 : vector<30x128xf32> to vector<30x128xbf16>
    %c0_164 = arith.constant 0 : index
    %c0_165 = arith.constant 0 : index
    %331 = vector.load %arg5[%c0_164, %c0_165] : memref<128x128xbf16, #tpu.memory_space<vmem>>, vector<128x128xbf16>
    %cst_166 = arith.constant dense<0.000000e+00> : vector<30x128xf32>
    %332 = tpu.matmul %330, %331, %cst_166 {dimension_numbers = #tpu.dot_dimension_numbers<[1], [0], [0], [1], [0, 0, 1, 1], [], []>} : vector<30x128xbf16>, vector<128x128xbf16>, vector<30x128xf32> -> vector<30x128xf32>
    %c0_167 = arith.constant 0 : index
    %c0_168 = arith.constant 0 : index
    %333 = vector.load %arg7[%c0_167, %c0_168] : memref<1x128xf32, #tpu.memory_space<vmem>>, vector<1x128xf32>
    %334 = vector.broadcast %333 : vector<1x128xf32> to vector<30x128xf32>
    %335 = arith.addf %332, %334 : vector<30x128xf32>
    %336 = vector.shape_cast %335 : vector<30x128xf32> to vector<15x2x128xf32>
    %c0_169 = arith.constant 0 : index
    %c0_170 = arith.constant 0 : index
    %c0_171 = arith.constant 0 : index
    %337 = vector.load %arg13[%c0_169, %c0_170, %c0_171] : memref<15x2x128xf32, #tpu.memory_space<vmem>>, vector<15x2x128xf32>
    tpu.vector_store %arg13[%c0_169, %c0_170, %c0_171], %336 {strides = array<i32>} : memref<15x2x128xf32, #tpu.memory_space<vmem>>, vector<15x2x128xf32>,
    %c0_172 = arith.constant 0 : index
    %c0_173 = arith.constant 0 : index
    %338 = vector.load %arg6[%c0_172, %c0_173] : memref<128x128xf32, #tpu.memory_space<vmem>>, vector<128x128xf32>
    %cst_174 = arith.constant 0.000000e+00 : f32
    %339 = vector.broadcast %cst_174 : f32 to vector<2x128xf32>
    %cst_175 = arith.constant 0.000000e+00 : f32
    %340 = vector.broadcast %cst_175 : f32 to vector<2x128xf32>
    %c0_176 = arith.constant 0 : index
    %c0_177 = arith.constant 0 : index
    %c0_178 = arith.constant 0 : index
    %341 = vector.load %arg13[%c0_176, %c0_177, %c0_178] : memref<15x2x128xf32, #tpu.memory_space<vmem>>, vector<1x2x128xf32>
    %342 = vector.shape_cast %341 : vector<1x2x128xf32> to vector<2x128xf32>
    %cst_179 = arith.constant dense<0.000000e+00> : vector<2x128xf32>
    %343 = tpu.matmul %339, %338, %cst_179 {dimension_numbers = #tpu.dot_dimension_numbers<[1], [0], [0], [1], [0, 0, 1, 1], [], []>} : vector<2x128xf32>, vector<128x128xf32>, vector<2x128xf32> -> vector<2x128xf32>
    %344 = arith.addf %342, %343 : vector<2x128xf32>
    %345 = arith.negf %344 : vector<2x128xf32>
    %346 = math.exp %345 : vector<2x128xf32>
    %cst_180 = arith.constant 1.000000e+00 : f32
    %347 = vector.broadcast %cst_180 : f32 to vector<2x128xf32>
    %348 = arith.addf %347, %346 : vector<2x128xf32>
    %349 = arith.divf %347, %348 : vector<2x128xf32>
    %350 = math.tanh %344 : vector<2x128xf32>
    %c96_i32_181 = arith.constant 96 : i32
    %351 = tpu.dynamic_rotate %349 by %c96_i32_181 dim 1 : vector<2x128xf32>, i32 -> vector<2x128xf32>
    %c64_i32_182 = arith.constant 64 : i32
    %352 = tpu.dynamic_rotate %350 by %c64_i32_182 dim 1 : vector<2x128xf32>, i32 -> vector<2x128xf32>
    %c32_i32_183 = arith.constant 32 : i32
    %353 = tpu.dynamic_rotate %349 by %c32_i32_183 dim 1 : vector<2x128xf32>, i32 -> vector<2x128xf32>
    %354 = arith.mulf %351, %340 : vector<2x128xf32>
    %355 = arith.mulf %349, %352 : vector<2x128xf32>
    %356 = arith.addf %354, %355 : vector<2x128xf32>
    %357 = math.tanh %356 : vector<2x128xf32>
    %358 = arith.mulf %353, %357 : vector<2x128xf32>
    %c1_184 = arith.constant 1 : index
    %c0_185 = arith.constant 0 : index
    %c0_186 = arith.constant 0 : index
    %359 = vector.load %arg13[%c1_184, %c0_185, %c0_186] : memref<15x2x128xf32, #tpu.memory_space<vmem>>, vector<1x2x128xf32>
    %360 = vector.shape_cast %359 : vector<1x2x128xf32> to vector<2x128xf32>
    %cst_187 = arith.constant dense<0.000000e+00> : vector<2x128xf32>
    %361 = tpu.matmul %358, %338, %cst_187 {dimension_numbers = #tpu.dot_dimension_numbers<[1], [0], [0], [1], [0, 0, 1, 1], [], []>} : vector<2x128xf32>, vector<128x128xf32>, vector<2x128xf32> -> vector<2x128xf32>
    %362 = arith.addf %360, %361 : vector<2x128xf32>
    %363 = arith.negf %362 : vector<2x128xf32>
    %364 = math.exp %363 : vector<2x128xf32>
    %cst_188 = arith.constant 1.000000e+00 : f32
    %365 = vector.broadcast %cst_188 : f32 to vector<2x128xf32>
    %366 = arith.addf %365, %364 : vector<2x128xf32>
    %367 = arith.divf %365, %366 : vector<2x128xf32>
    %368 = math.tanh %362 : vector<2x128xf32>
    %c96_i32_189 = arith.constant 96 : i32
    %369 = tpu.dynamic_rotate %367 by %c96_i32_189 dim 1 : vector<2x128xf32>, i32 -> vector<2x128xf32>
    %c64_i32_190 = arith.constant 64 : i32
    %370 = tpu.dynamic_rotate %368 by %c64_i32_190 dim 1 : vector<2x128xf32>, i32 -> vector<2x128xf32>
    %c32_i32_191 = arith.constant 32 : i32
    %371 = tpu.dynamic_rotate %367 by %c32_i32_191 dim 1 : vector<2x128xf32>, i32 -> vector<2x128xf32>
    %372 = arith.mulf %369, %356 : vector<2x128xf32>
    %373 = arith.mulf %367, %370 : vector<2x128xf32>
    %374 = arith.addf %372, %373 : vector<2x128xf32>
    %375 = math.tanh %374 : vector<2x128xf32>
    %376 = arith.mulf %371, %375 : vector<2x128xf32>
    %c2_192 = arith.constant 2 : index
    %c0_193 = arith.constant 0 : index
    %c0_194 = arith.constant 0 : index
    %377 = vector.load %arg13[%c2_192, %c0_193, %c0_194] : memref<15x2x128xf32, #tpu.memory_space<vmem>>, vector<1x2x128xf32>
    %378 = vector.shape_cast %377 : vector<1x2x128xf32> to vector<2x128xf32>
    %cst_195 = arith.constant dense<0.000000e+00> : vector<2x128xf32>
    %379 = tpu.matmul %376, %338, %cst_195 {dimension_numbers = #tpu.dot_dimension_numbers<[1], [0], [0], [1], [0, 0, 1, 1], [], []>} : vector<2x128xf32>, vector<128x128xf32>, vector<2x128xf32> -> vector<2x128xf32>
    %380 = arith.addf %378, %379 : vector<2x128xf32>
    %381 = arith.negf %380 : vector<2x128xf32>
    %382 = math.exp %381 : vector<2x128xf32>
    %cst_196 = arith.constant 1.000000e+00 : f32
    %383 = vector.broadcast %cst_196 : f32 to vector<2x128xf32>
    %384 = arith.addf %383, %382 : vector<2x128xf32>
    %385 = arith.divf %383, %384 : vector<2x128xf32>
    %386 = math.tanh %380 : vector<2x128xf32>
    %c96_i32_197 = arith.constant 96 : i32
    %387 = tpu.dynamic_rotate %385 by %c96_i32_197 dim 1 : vector<2x128xf32>, i32 -> vector<2x128xf32>
    %c64_i32_198 = arith.constant 64 : i32
    %388 = tpu.dynamic_rotate %386 by %c64_i32_198 dim 1 : vector<2x128xf32>, i32 -> vector<2x128xf32>
    %c32_i32_199 = arith.constant 32 : i32
    %389 = tpu.dynamic_rotate %385 by %c32_i32_199 dim 1 : vector<2x128xf32>, i32 -> vector<2x128xf32>
    %390 = arith.mulf %387, %374 : vector<2x128xf32>
    %391 = arith.mulf %385, %388 : vector<2x128xf32>
    %392 = arith.addf %390, %391 : vector<2x128xf32>
    %393 = math.tanh %392 : vector<2x128xf32>
    %394 = arith.mulf %389, %393 : vector<2x128xf32>
    %c3_200 = arith.constant 3 : index
    %c0_201 = arith.constant 0 : index
    %c0_202 = arith.constant 0 : index
    %395 = vector.load %arg13[%c3_200, %c0_201, %c0_202] : memref<15x2x128xf32, #tpu.memory_space<vmem>>, vector<1x2x128xf32>
    %396 = vector.shape_cast %395 : vector<1x2x128xf32> to vector<2x128xf32>
    %cst_203 = arith.constant dense<0.000000e+00> : vector<2x128xf32>
    %397 = tpu.matmul %394, %338, %cst_203 {dimension_numbers = #tpu.dot_dimension_numbers<[1], [0], [0], [1], [0, 0, 1, 1], [], []>} : vector<2x128xf32>, vector<128x128xf32>, vector<2x128xf32> -> vector<2x128xf32>
    %398 = arith.addf %396, %397 : vector<2x128xf32>
    %399 = arith.negf %398 : vector<2x128xf32>
    %400 = math.exp %399 : vector<2x128xf32>
    %cst_204 = arith.constant 1.000000e+00 : f32
    %401 = vector.broadcast %cst_204 : f32 to vector<2x128xf32>
    %402 = arith.addf %401, %400 : vector<2x128xf32>
    %403 = arith.divf %401, %402 : vector<2x128xf32>
    %404 = math.tanh %398 : vector<2x128xf32>
    %c96_i32_205 = arith.constant 96 : i32
    %405 = tpu.dynamic_rotate %403 by %c96_i32_205 dim 1 : vector<2x128xf32>, i32 -> vector<2x128xf32>
    %c64_i32_206 = arith.constant 64 : i32
    %406 = tpu.dynamic_rotate %404 by %c64_i32_206 dim 1 : vector<2x128xf32>, i32 -> vector<2x128xf32>
    %c32_i32_207 = arith.constant 32 : i32
    %407 = tpu.dynamic_rotate %403 by %c32_i32_207 dim 1 : vector<2x128xf32>, i32 -> vector<2x128xf32>
    %408 = arith.mulf %405, %392 : vector<2x128xf32>
    %409 = arith.mulf %403, %406 : vector<2x128xf32>
    %410 = arith.addf %408, %409 : vector<2x128xf32>
    %411 = math.tanh %410 : vector<2x128xf32>
    %412 = arith.mulf %407, %411 : vector<2x128xf32>
    %c4_208 = arith.constant 4 : index
    %c0_209 = arith.constant 0 : index
    %c0_210 = arith.constant 0 : index
    %413 = vector.load %arg13[%c4_208, %c0_209, %c0_210] : memref<15x2x128xf32, #tpu.memory_space<vmem>>, vector<1x2x128xf32>
    %414 = vector.shape_cast %413 : vector<1x2x128xf32> to vector<2x128xf32>
    %cst_211 = arith.constant dense<0.000000e+00> : vector<2x128xf32>
    %415 = tpu.matmul %412, %338, %cst_211 {dimension_numbers = #tpu.dot_dimension_numbers<[1], [0], [0], [1], [0, 0, 1, 1], [], []>} : vector<2x128xf32>, vector<128x128xf32>, vector<2x128xf32> -> vector<2x128xf32>
    %416 = arith.addf %414, %415 : vector<2x128xf32>
    %417 = arith.negf %416 : vector<2x128xf32>
    %418 = math.exp %417 : vector<2x128xf32>
    %cst_212 = arith.constant 1.000000e+00 : f32
    %419 = vector.broadcast %cst_212 : f32 to vector<2x128xf32>
    %420 = arith.addf %419, %418 : vector<2x128xf32>
    %421 = arith.divf %419, %420 : vector<2x128xf32>
    %422 = math.tanh %416 : vector<2x128xf32>
    %c96_i32_213 = arith.constant 96 : i32
    %423 = tpu.dynamic_rotate %421 by %c96_i32_213 dim 1 : vector<2x128xf32>, i32 -> vector<2x128xf32>
    %c64_i32_214 = arith.constant 64 : i32
    %424 = tpu.dynamic_rotate %422 by %c64_i32_214 dim 1 : vector<2x128xf32>, i32 -> vector<2x128xf32>
    %c32_i32_215 = arith.constant 32 : i32
    %425 = tpu.dynamic_rotate %421 by %c32_i32_215 dim 1 : vector<2x128xf32>, i32 -> vector<2x128xf32>
    %426 = arith.mulf %423, %410 : vector<2x128xf32>
    %427 = arith.mulf %421, %424 : vector<2x128xf32>
    %428 = arith.addf %426, %427 : vector<2x128xf32>
    %429 = math.tanh %428 : vector<2x128xf32>
    %430 = arith.mulf %425, %429 : vector<2x128xf32>
    %c5_216 = arith.constant 5 : index
    %c0_217 = arith.constant 0 : index
    %c0_218 = arith.constant 0 : index
    %431 = vector.load %arg13[%c5_216, %c0_217, %c0_218] : memref<15x2x128xf32, #tpu.memory_space<vmem>>, vector<1x2x128xf32>
    %432 = vector.shape_cast %431 : vector<1x2x128xf32> to vector<2x128xf32>
    %cst_219 = arith.constant dense<0.000000e+00> : vector<2x128xf32>
    %433 = tpu.matmul %430, %338, %cst_219 {dimension_numbers = #tpu.dot_dimension_numbers<[1], [0], [0], [1], [0, 0, 1, 1], [], []>} : vector<2x128xf32>, vector<128x128xf32>, vector<2x128xf32> -> vector<2x128xf32>
    %434 = arith.addf %432, %433 : vector<2x128xf32>
    %435 = arith.negf %434 : vector<2x128xf32>
    %436 = math.exp %435 : vector<2x128xf32>
    %cst_220 = arith.constant 1.000000e+00 : f32
    %437 = vector.broadcast %cst_220 : f32 to vector<2x128xf32>
    %438 = arith.addf %437, %436 : vector<2x128xf32>
    %439 = arith.divf %437, %438 : vector<2x128xf32>
    %440 = math.tanh %434 : vector<2x128xf32>
    %c96_i32_221 = arith.constant 96 : i32
    %441 = tpu.dynamic_rotate %439 by %c96_i32_221 dim 1 : vector<2x128xf32>, i32 -> vector<2x128xf32>
    %c64_i32_222 = arith.constant 64 : i32
    %442 = tpu.dynamic_rotate %440 by %c64_i32_222 dim 1 : vector<2x128xf32>, i32 -> vector<2x128xf32>
    %c32_i32_223 = arith.constant 32 : i32
    %443 = tpu.dynamic_rotate %439 by %c32_i32_223 dim 1 : vector<2x128xf32>, i32 -> vector<2x128xf32>
    %444 = arith.mulf %441, %428 : vector<2x128xf32>
    %445 = arith.mulf %439, %442 : vector<2x128xf32>
    %446 = arith.addf %444, %445 : vector<2x128xf32>
    %447 = math.tanh %446 : vector<2x128xf32>
    %448 = arith.mulf %443, %447 : vector<2x128xf32>
    %c6_224 = arith.constant 6 : index
    %c0_225 = arith.constant 0 : index
    %c0_226 = arith.constant 0 : index
    %449 = vector.load %arg13[%c6_224, %c0_225, %c0_226] : memref<15x2x128xf32, #tpu.memory_space<vmem>>, vector<1x2x128xf32>
    %450 = vector.shape_cast %449 : vector<1x2x128xf32> to vector<2x128xf32>
    %cst_227 = arith.constant dense<0.000000e+00> : vector<2x128xf32>
    %451 = tpu.matmul %448, %338, %cst_227 {dimension_numbers = #tpu.dot_dimension_numbers<[1], [0], [0], [1], [0, 0, 1, 1], [], []>} : vector<2x128xf32>, vector<128x128xf32>, vector<2x128xf32> -> vector<2x128xf32>
    %452 = arith.addf %450, %451 : vector<2x128xf32>
    %453 = arith.negf %452 : vector<2x128xf32>
    %454 = math.exp %453 : vector<2x128xf32>
    %cst_228 = arith.constant 1.000000e+00 : f32
    %455 = vector.broadcast %cst_228 : f32 to vector<2x128xf32>
    %456 = arith.addf %455, %454 : vector<2x128xf32>
    %457 = arith.divf %455, %456 : vector<2x128xf32>
    %458 = math.tanh %452 : vector<2x128xf32>
    %c96_i32_229 = arith.constant 96 : i32
    %459 = tpu.dynamic_rotate %457 by %c96_i32_229 dim 1 : vector<2x128xf32>, i32 -> vector<2x128xf32>
    %c64_i32_230 = arith.constant 64 : i32
    %460 = tpu.dynamic_rotate %458 by %c64_i32_230 dim 1 : vector<2x128xf32>, i32 -> vector<2x128xf32>
    %c32_i32_231 = arith.constant 32 : i32
    %461 = tpu.dynamic_rotate %457 by %c32_i32_231 dim 1 : vector<2x128xf32>, i32 -> vector<2x128xf32>
    %462 = arith.mulf %459, %446 : vector<2x128xf32>
    %463 = arith.mulf %457, %460 : vector<2x128xf32>
    %464 = arith.addf %462, %463 : vector<2x128xf32>
    %465 = math.tanh %464 : vector<2x128xf32>
    %466 = arith.mulf %461, %465 : vector<2x128xf32>
    %c7_232 = arith.constant 7 : index
    %c0_233 = arith.constant 0 : index
    %c0_234 = arith.constant 0 : index
    %467 = vector.load %arg13[%c7_232, %c0_233, %c0_234] : memref<15x2x128xf32, #tpu.memory_space<vmem>>, vector<1x2x128xf32>
    %468 = vector.shape_cast %467 : vector<1x2x128xf32> to vector<2x128xf32>
    %cst_235 = arith.constant dense<0.000000e+00> : vector<2x128xf32>
    %469 = tpu.matmul %466, %338, %cst_235 {dimension_numbers = #tpu.dot_dimension_numbers<[1], [0], [0], [1], [0, 0, 1, 1], [], []>} : vector<2x128xf32>, vector<128x128xf32>, vector<2x128xf32> -> vector<2x128xf32>
    %470 = arith.addf %468, %469 : vector<2x128xf32>
    %471 = arith.negf %470 : vector<2x128xf32>
    %472 = math.exp %471 : vector<2x128xf32>
    %cst_236 = arith.constant 1.000000e+00 : f32
    %473 = vector.broadcast %cst_236 : f32 to vector<2x128xf32>
    %474 = arith.addf %473, %472 : vector<2x128xf32>
    %475 = arith.divf %473, %474 : vector<2x128xf32>
    %476 = math.tanh %470 : vector<2x128xf32>
    %c96_i32_237 = arith.constant 96 : i32
    %477 = tpu.dynamic_rotate %475 by %c96_i32_237 dim 1 : vector<2x128xf32>, i32 -> vector<2x128xf32>
    %c64_i32_238 = arith.constant 64 : i32
    %478 = tpu.dynamic_rotate %476 by %c64_i32_238 dim 1 : vector<2x128xf32>, i32 -> vector<2x128xf32>
    %c32_i32_239 = arith.constant 32 : i32
    %479 = tpu.dynamic_rotate %475 by %c32_i32_239 dim 1 : vector<2x128xf32>, i32 -> vector<2x128xf32>
    %480 = arith.mulf %477, %464 : vector<2x128xf32>
    %481 = arith.mulf %475, %478 : vector<2x128xf32>
    %482 = arith.addf %480, %481 : vector<2x128xf32>
    %483 = math.tanh %482 : vector<2x128xf32>
    %484 = arith.mulf %479, %483 : vector<2x128xf32>
    %c8_240 = arith.constant 8 : index
    %c0_241 = arith.constant 0 : index
    %c0_242 = arith.constant 0 : index
    %485 = vector.load %arg13[%c8_240, %c0_241, %c0_242] : memref<15x2x128xf32, #tpu.memory_space<vmem>>, vector<1x2x128xf32>
    %486 = vector.shape_cast %485 : vector<1x2x128xf32> to vector<2x128xf32>
    %cst_243 = arith.constant dense<0.000000e+00> : vector<2x128xf32>
    %487 = tpu.matmul %484, %338, %cst_243 {dimension_numbers = #tpu.dot_dimension_numbers<[1], [0], [0], [1], [0, 0, 1, 1], [], []>} : vector<2x128xf32>, vector<128x128xf32>, vector<2x128xf32> -> vector<2x128xf32>
    %488 = arith.addf %486, %487 : vector<2x128xf32>
    %489 = arith.negf %488 : vector<2x128xf32>
    %490 = math.exp %489 : vector<2x128xf32>
    %cst_244 = arith.constant 1.000000e+00 : f32
    %491 = vector.broadcast %cst_244 : f32 to vector<2x128xf32>
    %492 = arith.addf %491, %490 : vector<2x128xf32>
    %493 = arith.divf %491, %492 : vector<2x128xf32>
    %494 = math.tanh %488 : vector<2x128xf32>
    %c96_i32_245 = arith.constant 96 : i32
    %495 = tpu.dynamic_rotate %493 by %c96_i32_245 dim 1 : vector<2x128xf32>, i32 -> vector<2x128xf32>
    %c64_i32_246 = arith.constant 64 : i32
    %496 = tpu.dynamic_rotate %494 by %c64_i32_246 dim 1 : vector<2x128xf32>, i32 -> vector<2x128xf32>
    %c32_i32_247 = arith.constant 32 : i32
    %497 = tpu.dynamic_rotate %493 by %c32_i32_247 dim 1 : vector<2x128xf32>, i32 -> vector<2x128xf32>
    %498 = arith.mulf %495, %482 : vector<2x128xf32>
    %499 = arith.mulf %493, %496 : vector<2x128xf32>
    %500 = arith.addf %498, %499 : vector<2x128xf32>
    %501 = math.tanh %500 : vector<2x128xf32>
    %502 = arith.mulf %497, %501 : vector<2x128xf32>
    %c9_248 = arith.constant 9 : index
    %c0_249 = arith.constant 0 : index
    %c0_250 = arith.constant 0 : index
    %503 = vector.load %arg13[%c9_248, %c0_249, %c0_250] : memref<15x2x128xf32, #tpu.memory_space<vmem>>, vector<1x2x128xf32>
    %504 = vector.shape_cast %503 : vector<1x2x128xf32> to vector<2x128xf32>
    %cst_251 = arith.constant dense<0.000000e+00> : vector<2x128xf32>
    %505 = tpu.matmul %502, %338, %cst_251 {dimension_numbers = #tpu.dot_dimension_numbers<[1], [0], [0], [1], [0, 0, 1, 1], [], []>} : vector<2x128xf32>, vector<128x128xf32>, vector<2x128xf32> -> vector<2x128xf32>
    %506 = arith.addf %504, %505 : vector<2x128xf32>
    %507 = arith.negf %506 : vector<2x128xf32>
    %508 = math.exp %507 : vector<2x128xf32>
    %cst_252 = arith.constant 1.000000e+00 : f32
    %509 = vector.broadcast %cst_252 : f32 to vector<2x128xf32>
    %510 = arith.addf %509, %508 : vector<2x128xf32>
    %511 = arith.divf %509, %510 : vector<2x128xf32>
    %512 = math.tanh %506 : vector<2x128xf32>
    %c96_i32_253 = arith.constant 96 : i32
    %513 = tpu.dynamic_rotate %511 by %c96_i32_253 dim 1 : vector<2x128xf32>, i32 -> vector<2x128xf32>
    %c64_i32_254 = arith.constant 64 : i32
    %514 = tpu.dynamic_rotate %512 by %c64_i32_254 dim 1 : vector<2x128xf32>, i32 -> vector<2x128xf32>
    %c32_i32_255 = arith.constant 32 : i32
    %515 = tpu.dynamic_rotate %511 by %c32_i32_255 dim 1 : vector<2x128xf32>, i32 -> vector<2x128xf32>
    %516 = arith.mulf %513, %500 : vector<2x128xf32>
    %517 = arith.mulf %511, %514 : vector<2x128xf32>
    %518 = arith.addf %516, %517 : vector<2x128xf32>
    %519 = math.tanh %518 : vector<2x128xf32>
    %520 = arith.mulf %515, %519 : vector<2x128xf32>
    %c10_256 = arith.constant 10 : index
    %c0_257 = arith.constant 0 : index
    %c0_258 = arith.constant 0 : index
    %521 = vector.load %arg13[%c10_256, %c0_257, %c0_258] : memref<15x2x128xf32, #tpu.memory_space<vmem>>, vector<1x2x128xf32>
    %522 = vector.shape_cast %521 : vector<1x2x128xf32> to vector<2x128xf32>
    %cst_259 = arith.constant dense<0.000000e+00> : vector<2x128xf32>
    %523 = tpu.matmul %520, %338, %cst_259 {dimension_numbers = #tpu.dot_dimension_numbers<[1], [0], [0], [1], [0, 0, 1, 1], [], []>} : vector<2x128xf32>, vector<128x128xf32>, vector<2x128xf32> -> vector<2x128xf32>
    %524 = arith.addf %522, %523 : vector<2x128xf32>
    %525 = arith.negf %524 : vector<2x128xf32>
    %526 = math.exp %525 : vector<2x128xf32>
    %cst_260 = arith.constant 1.000000e+00 : f32
    %527 = vector.broadcast %cst_260 : f32 to vector<2x128xf32>
    %528 = arith.addf %527, %526 : vector<2x128xf32>
    %529 = arith.divf %527, %528 : vector<2x128xf32>
    %530 = math.tanh %524 : vector<2x128xf32>
    %c96_i32_261 = arith.constant 96 : i32
    %531 = tpu.dynamic_rotate %529 by %c96_i32_261 dim 1 : vector<2x128xf32>, i32 -> vector<2x128xf32>
    %c64_i32_262 = arith.constant 64 : i32
    %532 = tpu.dynamic_rotate %530 by %c64_i32_262 dim 1 : vector<2x128xf32>, i32 -> vector<2x128xf32>
    %c32_i32_263 = arith.constant 32 : i32
    %533 = tpu.dynamic_rotate %529 by %c32_i32_263 dim 1 : vector<2x128xf32>, i32 -> vector<2x128xf32>
    %534 = arith.mulf %531, %518 : vector<2x128xf32>
    %535 = arith.mulf %529, %532 : vector<2x128xf32>
    %536 = arith.addf %534, %535 : vector<2x128xf32>
    %537 = math.tanh %536 : vector<2x128xf32>
    %538 = arith.mulf %533, %537 : vector<2x128xf32>
    %c11_264 = arith.constant 11 : index
    %c0_265 = arith.constant 0 : index
    %c0_266 = arith.constant 0 : index
    %539 = vector.load %arg13[%c11_264, %c0_265, %c0_266] : memref<15x2x128xf32, #tpu.memory_space<vmem>>, vector<1x2x128xf32>
    %540 = vector.shape_cast %539 : vector<1x2x128xf32> to vector<2x128xf32>
    %cst_267 = arith.constant dense<0.000000e+00> : vector<2x128xf32>
    %541 = tpu.matmul %538, %338, %cst_267 {dimension_numbers = #tpu.dot_dimension_numbers<[1], [0], [0], [1], [0, 0, 1, 1], [], []>} : vector<2x128xf32>, vector<128x128xf32>, vector<2x128xf32> -> vector<2x128xf32>
    %542 = arith.addf %540, %541 : vector<2x128xf32>
    %543 = arith.negf %542 : vector<2x128xf32>
    %544 = math.exp %543 : vector<2x128xf32>
    %cst_268 = arith.constant 1.000000e+00 : f32
    %545 = vector.broadcast %cst_268 : f32 to vector<2x128xf32>
    %546 = arith.addf %545, %544 : vector<2x128xf32>
    %547 = arith.divf %545, %546 : vector<2x128xf32>
    %548 = math.tanh %542 : vector<2x128xf32>
    %c96_i32_269 = arith.constant 96 : i32
    %549 = tpu.dynamic_rotate %547 by %c96_i32_269 dim 1 : vector<2x128xf32>, i32 -> vector<2x128xf32>
    %c64_i32_270 = arith.constant 64 : i32
    %550 = tpu.dynamic_rotate %548 by %c64_i32_270 dim 1 : vector<2x128xf32>, i32 -> vector<2x128xf32>
    %c32_i32_271 = arith.constant 32 : i32
    %551 = tpu.dynamic_rotate %547 by %c32_i32_271 dim 1 : vector<2x128xf32>, i32 -> vector<2x128xf32>
    %552 = arith.mulf %549, %536 : vector<2x128xf32>
    %553 = arith.mulf %547, %550 : vector<2x128xf32>
    %554 = arith.addf %552, %553 : vector<2x128xf32>
    %555 = math.tanh %554 : vector<2x128xf32>
    %556 = arith.mulf %551, %555 : vector<2x128xf32>
    %c12_272 = arith.constant 12 : index
    %c0_273 = arith.constant 0 : index
    %c0_274 = arith.constant 0 : index
    %557 = vector.load %arg13[%c12_272, %c0_273, %c0_274] : memref<15x2x128xf32, #tpu.memory_space<vmem>>, vector<1x2x128xf32>
    %558 = vector.shape_cast %557 : vector<1x2x128xf32> to vector<2x128xf32>
    %cst_275 = arith.constant dense<0.000000e+00> : vector<2x128xf32>
    %559 = tpu.matmul %556, %338, %cst_275 {dimension_numbers = #tpu.dot_dimension_numbers<[1], [0], [0], [1], [0, 0, 1, 1], [], []>} : vector<2x128xf32>, vector<128x128xf32>, vector<2x128xf32> -> vector<2x128xf32>
    %560 = arith.addf %558, %559 : vector<2x128xf32>
    %561 = arith.negf %560 : vector<2x128xf32>
    %562 = math.exp %561 : vector<2x128xf32>
    %cst_276 = arith.constant 1.000000e+00 : f32
    %563 = vector.broadcast %cst_276 : f32 to vector<2x128xf32>
    %564 = arith.addf %563, %562 : vector<2x128xf32>
    %565 = arith.divf %563, %564 : vector<2x128xf32>
    %566 = math.tanh %560 : vector<2x128xf32>
    %c96_i32_277 = arith.constant 96 : i32
    %567 = tpu.dynamic_rotate %565 by %c96_i32_277 dim 1 : vector<2x128xf32>, i32 -> vector<2x128xf32>
    %c64_i32_278 = arith.constant 64 : i32
    %568 = tpu.dynamic_rotate %566 by %c64_i32_278 dim 1 : vector<2x128xf32>, i32 -> vector<2x128xf32>
    %c32_i32_279 = arith.constant 32 : i32
    %569 = tpu.dynamic_rotate %565 by %c32_i32_279 dim 1 : vector<2x128xf32>, i32 -> vector<2x128xf32>
    %570 = arith.mulf %567, %554 : vector<2x128xf32>
    %571 = arith.mulf %565, %568 : vector<2x128xf32>
    %572 = arith.addf %570, %571 : vector<2x128xf32>
    %573 = math.tanh %572 : vector<2x128xf32>
    %574 = arith.mulf %569, %573 : vector<2x128xf32>
    %c13_280 = arith.constant 13 : index
    %c0_281 = arith.constant 0 : index
    %c0_282 = arith.constant 0 : index
    %575 = vector.load %arg13[%c13_280, %c0_281, %c0_282] : memref<15x2x128xf32, #tpu.memory_space<vmem>>, vector<1x2x128xf32>
    %576 = vector.shape_cast %575 : vector<1x2x128xf32> to vector<2x128xf32>
    %cst_283 = arith.constant dense<0.000000e+00> : vector<2x128xf32>
    %577 = tpu.matmul %574, %338, %cst_283 {dimension_numbers = #tpu.dot_dimension_numbers<[1], [0], [0], [1], [0, 0, 1, 1], [], []>} : vector<2x128xf32>, vector<128x128xf32>, vector<2x128xf32> -> vector<2x128xf32>
    %578 = arith.addf %576, %577 : vector<2x128xf32>
    %579 = arith.negf %578 : vector<2x128xf32>
    %580 = math.exp %579 : vector<2x128xf32>
    %cst_284 = arith.constant 1.000000e+00 : f32
    %581 = vector.broadcast %cst_284 : f32 to vector<2x128xf32>
    %582 = arith.addf %581, %580 : vector<2x128xf32>
    %583 = arith.divf %581, %582 : vector<2x128xf32>
    %584 = math.tanh %578 : vector<2x128xf32>
    %c96_i32_285 = arith.constant 96 : i32
    %585 = tpu.dynamic_rotate %583 by %c96_i32_285 dim 1 : vector<2x128xf32>, i32 -> vector<2x128xf32>
    %c64_i32_286 = arith.constant 64 : i32
    %586 = tpu.dynamic_rotate %584 by %c64_i32_286 dim 1 : vector<2x128xf32>, i32 -> vector<2x128xf32>
    %c32_i32_287 = arith.constant 32 : i32
    %587 = tpu.dynamic_rotate %583 by %c32_i32_287 dim 1 : vector<2x128xf32>, i32 -> vector<2x128xf32>
    %588 = arith.mulf %585, %572 : vector<2x128xf32>
    %589 = arith.mulf %583, %586 : vector<2x128xf32>
    %590 = arith.addf %588, %589 : vector<2x128xf32>
    %591 = math.tanh %590 : vector<2x128xf32>
    %592 = arith.mulf %587, %591 : vector<2x128xf32>
    %c14_288 = arith.constant 14 : index
    %c0_289 = arith.constant 0 : index
    %c0_290 = arith.constant 0 : index
    %593 = vector.load %arg13[%c14_288, %c0_289, %c0_290] : memref<15x2x128xf32, #tpu.memory_space<vmem>>, vector<1x2x128xf32>
    %594 = vector.shape_cast %593 : vector<1x2x128xf32> to vector<2x128xf32>
    %cst_291 = arith.constant dense<0.000000e+00> : vector<2x128xf32>
    %595 = tpu.matmul %592, %338, %cst_291 {dimension_numbers = #tpu.dot_dimension_numbers<[1], [0], [0], [1], [0, 0, 1, 1], [], []>} : vector<2x128xf32>, vector<128x128xf32>, vector<2x128xf32> -> vector<2x128xf32>
    %596 = arith.addf %594, %595 : vector<2x128xf32>
    %597 = arith.negf %596 : vector<2x128xf32>
    %598 = math.exp %597 : vector<2x128xf32>
    %cst_292 = arith.constant 1.000000e+00 : f32
    %599 = vector.broadcast %cst_292 : f32 to vector<2x128xf32>
    %600 = arith.addf %599, %598 : vector<2x128xf32>
    %601 = arith.divf %599, %600 : vector<2x128xf32>
    %602 = math.tanh %596 : vector<2x128xf32>
    %c96_i32_293 = arith.constant 96 : i32
    %603 = tpu.dynamic_rotate %601 by %c96_i32_293 dim 1 : vector<2x128xf32>, i32 -> vector<2x128xf32>
    %c64_i32_294 = arith.constant 64 : i32
    %604 = tpu.dynamic_rotate %602 by %c64_i32_294 dim 1 : vector<2x128xf32>, i32 -> vector<2x128xf32>
    %c32_i32_295 = arith.constant 32 : i32
    %605 = tpu.dynamic_rotate %601 by %c32_i32_295 dim 1 : vector<2x128xf32>, i32 -> vector<2x128xf32>
    %606 = arith.mulf %603, %590 : vector<2x128xf32>
    %607 = arith.mulf %601, %604 : vector<2x128xf32>
    %608 = arith.addf %606, %607 : vector<2x128xf32>
    %609 = math.tanh %608 : vector<2x128xf32>
    %610 = arith.mulf %605, %609 : vector<2x128xf32>
    %c0_296 = arith.constant 0 : index
    %c0_297 = arith.constant 0 : index
    %611 = vector.load %arg8[%c0_296, %c0_297] : memref<128x32xf32, #tpu.memory_space<vmem>>, vector<128x32xf32>
    %cst_298 = arith.constant dense<0.000000e+00> : vector<2x32xf32>
    %612 = tpu.matmul %610, %611, %cst_298 {dimension_numbers = #tpu.dot_dimension_numbers<[1], [0], [0], [1], [0, 0, 1, 1], [], []>} : vector<2x128xf32>, vector<128x32xf32>, vector<2x32xf32> -> vector<2x32xf32>
    %c0_299 = arith.constant 0 : index
    %c0_300 = arith.constant 0 : index
    %613 = vector.load %arg9[%c0_299, %c0_300] : memref<1x32xf32, #tpu.memory_space<vmem>>, vector<1x32xf32>
    %614 = vector.broadcast %613 : vector<1x32xf32> to vector<2x32xf32>
    %615 = arith.addf %612, %614 : vector<2x32xf32>
    %c0_301 = arith.constant 0 : index
    %c0_302 = arith.constant 0 : index
    %616 = vector.load %arg10[%c0_301, %c0_302] : memref<32x1xf32, #tpu.memory_space<vmem>>, vector<32x1xf32>
    %cst_303 = arith.constant dense<0.000000e+00> : vector<2x1xf32>
    %617 = tpu.matmul %615, %616, %cst_303 {dimension_numbers = #tpu.dot_dimension_numbers<[1], [0], [0], [1], [0, 0, 1, 1], [], []>} : vector<2x32xf32>, vector<32x1xf32>, vector<2x1xf32> -> vector<2x1xf32>
    %c0_304 = arith.constant 0 : index
    %c0_305 = arith.constant 0 : index
    %618 = vector.load %arg11[%c0_304, %c0_305] : memref<1x1xf32, #tpu.memory_space<vmem>>, vector<1x1xf32>
    %619 = vector.broadcast %618 : vector<1x1xf32> to vector<2x1xf32>
    %620 = arith.addf %617, %619 : vector<2x1xf32>
    %c0_306 = arith.constant 0 : index
    %c0_307 = arith.constant 0 : index
    %621 = vector.load %arg12[%c0_306, %c0_307] : memref<2x1xf32, #tpu.memory_space<vmem>>, vector<2x1xf32>
    tpu.vector_store %arg12[%c0_306, %c0_307], %620 {strides = array<i32>} : memref<2x1xf32, #tpu.memory_space<vmem>>, vector<2x1xf32>,
    return
  }
  func.func @transform_0(%arg0: i32) -> (i32, i32, i32) {
    %c0_i32 = arith.constant 0 : i32
    %c0_i32_0 = arith.constant 0 : i32
    %c0_i32_1 = arith.constant 0 : i32
    return %c0_i32, %arg0, %c0_i32_0 : i32, i32, i32
  }
  func.func @transform_1(%arg0: i32) -> (i32, i32) {
    %c0_i32 = arith.constant 0 : i32
    %c0_i32_0 = arith.constant 0 : i32
    %c0_i32_1 = arith.constant 0 : i32
    return %c0_i32, %c0_i32_0 : i32, i32
  }
  func.func @transform_2(%arg0: i32) -> (i32, i32) {
    %c0_i32 = arith.constant 0 : i32
    %c0_i32_0 = arith.constant 0 : i32
    %c0_i32_1 = arith.constant 0 : i32
    return %c0_i32, %c0_i32_0 : i32, i32
  }
  func.func @transform_3(%arg0: i32) -> (i32, i32) {
    %c0_i32 = arith.constant 0 : i32
    %c0_i32_0 = arith.constant 0 : i32
    %c0_i32_1 = arith.constant 0 : i32
    return %c0_i32, %c0_i32_0 : i32, i32
  }
  func.func @transform_4(%arg0: i32) -> (i32, i32) {
    %c0_i32 = arith.constant 0 : i32
    %c0_i32_0 = arith.constant 0 : i32
    %c0_i32_1 = arith.constant 0 : i32
    return %c0_i32, %c0_i32_0 : i32, i32
  }
  func.func @transform_5(%arg0: i32) -> (i32, i32) {
    %c0_i32 = arith.constant 0 : i32
    %c0_i32_0 = arith.constant 0 : i32
    %c0_i32_1 = arith.constant 0 : i32
    return %c0_i32, %c0_i32_0 : i32, i32
  }
  func.func @transform_6(%arg0: i32) -> (i32, i32) {
    %c0_i32 = arith.constant 0 : i32
    %c0_i32_0 = arith.constant 0 : i32
    %c0_i32_1 = arith.constant 0 : i32
    return %c0_i32, %c0_i32_0 : i32, i32
  }
  func.func @transform_7(%arg0: i32) -> (i32, i32) {
    %c0_i32 = arith.constant 0 : i32
    %c0_i32_0 = arith.constant 0 : i32
    %c0_i32_1 = arith.constant 0 : i32
    return %c0_i32, %c0_i32_0 : i32, i32
  }
  func.func @transform_8(%arg0: i32) -> (i32, i32) {
    %c0_i32 = arith.constant 0 : i32
    %c0_i32_0 = arith.constant 0 : i32
    %c0_i32_1 = arith.constant 0 : i32
    return %c0_i32, %c0_i32_0 : i32, i32
  }
  func.func @transform_9(%arg0: i32) -> (i32, i32) {
    %c0_i32 = arith.constant 0 : i32
    %c0_i32_0 = arith.constant 0 : i32
    %c0_i32_1 = arith.constant 0 : i32
    return %c0_i32, %c0_i32_0 : i32, i32
  }
  func.func @transform_10(%arg0: i32) -> (i32, i32) {
    %c0_i32 = arith.constant 0 : i32
    %c0_i32_0 = arith.constant 0 : i32
    %c0_i32_1 = arith.constant 0 : i32
    return %c0_i32, %c0_i32_0 : i32, i32
  }
  func.func @transform_11(%arg0: i32) -> (i32, i32) {
    %c0_i32 = arith.constant 0 : i32
    %c0_i32_0 = arith.constant 0 : i32
    return %arg0, %c0_i32 : i32, i32
  }
}

</mosaic_0001>

<llo_original>
// kernel: forward.2
$region0: #{forward.2}
  #allocation0 [shape = 'u32[]', space=smem, size = 0x4, offset = 0x4, fixed_abs, tag = 'smem constant byte address 0x4 - core index']
  #allocation1 [shape = 'u32[144,128]{1,0:T(1,128)}', space=vmem, size = 0x12000, scoped, tag = 'internal scratch']
  %s0 = inlined_call_operand.vmem [shape: f32[2,32], index: 0, kind: input, shape index: {}]
  %s1 = inlined_call_operand.vmem [shape: f32[1,128], index: 1, kind: input, shape index: {}]
  %s2 = inlined_call_operand.vmem [shape: f32[1,128], index: 2, kind: input, shape index: {}]
  %s3 = inlined_call_operand.vmem [shape: f32[1,128], index: 3, kind: input, shape index: {}]
  %s4 = inlined_call_operand.vmem [shape: f32[1,128], index: 4, kind: input, shape index: {}]
  %s5 = inlined_call_operand.vmem [shape: bf16[128,128], index: 5, kind: input, shape index: {}]
  %s6 = inlined_call_operand.vmem [shape: f32[1,128], index: 6, kind: input, shape index: {}]
  %s7 = inlined_call_operand.vmem [shape: f32[2,15,128], index: 7, kind: output, shape index: {}]
  %s8 = sld [smem:[#allocation0]]
  $region38: #{forward.2} parent=0
    _
  %s10 = ssub.s32 1, %s8
  %s11 = scalar_select 0, %s10, %s8
  // Predicated region
  $region2: #{forward.2} parent=0 // pred_check
    _
  $region3: #{forward.2} parent=0 // pred_check_branch
    %13 = sbr.rel (0) target = $region5
  $region4: #{forward.2} parent=0 // pred_region
    _
  $region5: #{forward.2} parent=0 // pred_fallthru
    _
  // Predicated region
  $region6: #{forward.2} parent=0 // pred_check
    _
  $region7: #{forward.2} parent=0 // pred_check_branch
    %15 = sbr.rel (0) target = $region9
  $region8: #{forward.2} parent=0 // pred_region
    _
  $region9: #{forward.2} parent=0 // pred_fallthru
    _
  // Predicated region
  $region10: #{forward.2} parent=0 // pred_check
    _
  $region11: #{forward.2} parent=0 // pred_check_branch
    %17 = sbr.rel (0) target = $region13
  $region12: #{forward.2} parent=0 // pred_region
    _
  $region13: #{forward.2} parent=0 // pred_fallthru
    _
  // Predicated region
  $region14: #{forward.2} parent=0 // pred_check
    _
  $region15: #{forward.2} parent=0 // pred_check_branch
    %19 = sbr.rel (0) target = $region17
  $region16: #{forward.2} parent=0 // pred_region
    _
  $region17: #{forward.2} parent=0 // pred_fallthru
    _
  // Predicated region
  $region18: #{forward.2} parent=0 // pred_check
    _
  $region19: #{forward.2} parent=0 // pred_check_branch
    %21 = sbr.rel (0) target = $region21
  $region20: #{forward.2} parent=0 // pred_region
    _
  $region21: #{forward.2} parent=0 // pred_fallthru
    _
  // Predicated region
  $region22: #{forward.2} parent=0 // pred_check
    _
  $region23: #{forward.2} parent=0 // pred_check_branch
    %23 = sbr.rel (0) target = $region25
  $region24: #{forward.2} parent=0 // pred_region
    _
  $region25: #{forward.2} parent=0 // pred_fallthru
    _
  // Predicated region
  $region26: #{forward.2} parent=0 // pred_check
    _
  $region27: #{forward.2} parent=0 // pred_check_branch
    %25 = sbr.rel (0) target = $region29
  $region28: #{forward.2} parent=0 // pred_region
    _
  $region29: #{forward.2} parent=0 // pred_fallthru
    _
  %v27 = vld [vmem:[%s0] sm:$0x3]
  %v28 = vld [vmem:[%s1] sm:$0x1]
  %v29 = vld [vmem:[%s2] sm:$0x1]
  %v30 = vld [vmem:[%s3] sm:$0x1]
  %v31 = vld [vmem:[%s4] sm:$0x1]
  %v32 = vlaneseq
  %v33 = vshrl.u32 %v32, 7
  %v34 = vsub.s32 0, %v33
  %v35 = vrot.slane %v27, %v34
  %37 = vbcast.lane.b32.xlu0 %v35, 256
  %v38 = vpop.permute.xlu0 %37
  %s40 = sor.u32 256, 8
  %41 = vbcast.lane.b32.xlu0 %v35, %s40
  %v42 = vpop.permute.xlu0 %41
  %s44 = sor.u32 256, 16
  %45 = vbcast.lane.b32.xlu0 %v35, %s44
  %v46 = vpop.permute.xlu0 %45
  %s48 = sor.u32 256, 24
  %49 = vbcast.lane.b32.xlu0 %v35, %s48
  %v50 = vpop.permute.xlu0 %49
  %v51 = vlaneseq
  %v52 = vshrl.u32 %v51, 7
  %v53 = vsub.s32 1, %v52
  %v54 = vrot.slane %v27, %v53
  %56 = vbcast.lane.b32.xlu0 %v54, 256
  %v57 = vpop.permute.xlu0 %56
  %s59 = sor.u32 256, 8
  %60 = vbcast.lane.b32.xlu0 %v54, %s59
  %v61 = vpop.permute.xlu0 %60
  %s63 = sor.u32 256, 16
  %64 = vbcast.lane.b32.xlu0 %v54, %s63
  %v65 = vpop.permute.xlu0 %64
  %s67 = sor.u32 256, 24
  %68 = vbcast.lane.b32.xlu0 %v54, %s67
  %v69 = vpop.permute.xlu0 %68
  %s71 = sor.u32 256, 1
  %72 = vbcast.lane.b32.xlu0 %v35, %s71
  %v73 = vpop.permute.xlu0 %72
  %s75 = sor.u32 256, 9
  %76 = vbcast.lane.b32.xlu0 %v35, %s75
  %v77 = vpop.permute.xlu0 %76
  %s79 = sor.u32 256, 17
  %80 = vbcast.lane.b32.xlu0 %v35, %s79
  %v81 = vpop.permute.xlu0 %80
  %s83 = sor.u32 256, 25
  %84 = vbcast.lane.b32.xlu0 %v35, %s83
  %v85 = vpop.permute.xlu0 %84
  %s87 = sor.u32 256, 1
  %88 = vbcast.lane.b32.xlu0 %v54, %s87
  %v89 = vpop.permute.xlu0 %88
  %s91 = sor.u32 256, 9
  %92 = vbcast.lane.b32.xlu0 %v54, %s91
  %v93 = vpop.permute.xlu0 %92
  %s95 = sor.u32 256, 17
  %96 = vbcast.lane.b32.xlu0 %v54, %s95
  %v97 = vpop.permute.xlu0 %96
  %s99 = sor.u32 256, 25
  %100 = vbcast.lane.b32.xlu0 %v54, %s99
  %v101 = vpop.permute.xlu0 %100
  %s103 = sor.u32 256, 2
  %104 = vbcast.lane.b32.xlu0 %v35, %s103
  %v105 = vpop.permute.xlu0 %104
  %s107 = sor.u32 256, 10
  %108 = vbcast.lane.b32.xlu0 %v35, %s107
  %v109 = vpop.permute.xlu0 %108
  %s111 = sor.u32 256, 18
  %112 = vbcast.lane.b32.xlu0 %v35, %s111
  %v113 = vpop.permute.xlu0 %112
  %s115 = sor.u32 256, 26
  %116 = vbcast.lane.b32.xlu0 %v35, %s115
  %v117 = vpop.permute.xlu0 %116
  %s119 = sor.u32 256, 2
  %120 = vbcast.lane.b32.xlu0 %v54, %s119
  %v121 = vpop.permute.xlu0 %120
  %s123 = sor.u32 256, 10
  %124 = vbcast.lane.b32.xlu0 %v54, %s123
  %v125 = vpop.permute.xlu0 %124
  %s127 = sor.u32 256, 18
  %128 = vbcast.lane.b32.xlu0 %v54, %s127
  %v129 = vpop.permute.xlu0 %128
  %s131 = sor.u32 256, 26
  %132 = vbcast.lane.b32.xlu0 %v54, %s131
  %v133 = vpop.permute.xlu0 %132
  %v135 = vlaneseq
  %v136 = vshrl.u32 %v135, 7
  %v137 = vsub.s32 0, %v136
  %v138 = vrot.slane %v28, %v137
  %v140 = vmul.f32 %v38, %v138
  %v141 = vmul.f32 %v42, %v138
  %v142 = vmul.f32 %v46, %v138
  %v143 = vmul.f32 %v50, %v138
  %v144 = vmul.f32 %v57, %v138
  %v145 = vmul.f32 %v61, %v138
  %v146 = vmul.f32 %v65, %v138
  %v147 = vmul.f32 %v69, %v138
  %v149 = vlaneseq
  %v150 = vshrl.u32 %v149, 7
  %v151 = vsub.s32 0, %v150
  %v152 = vrot.slane %v29, %v151
  %v154 = vmul.f32 %v73, %v152
  %v155 = vmul.f32 %v77, %v152
  %v156 = vmul.f32 %v81, %v152
  %v157 = vmul.f32 %v85, %v152
  %v158 = vmul.f32 %v89, %v152
  %v159 = vmul.f32 %v93, %v152
  %v160 = vmul.f32 %v97, %v152
  %v161 = vmul.f32 %v101, %v152
  %v162 = vadd.f32 %v140, %v154
  %v163 = vadd.f32 %v141, %v155
  %v164 = vadd.f32 %v142, %v156
  %v165 = vadd.f32 %v143, %v157
  %v166 = vadd.f32 %v144, %v158
  %v167 = vadd.f32 %v145, %v159
  %v168 = vadd.f32 %v146, %v160
  %v169 = vadd.f32 %v147, %v161
  %v171 = vlaneseq
  %v172 = vshrl.u32 %v171, 7
  %v173 = vsub.s32 0, %v172
  %v174 = vrot.slane %v30, %v173
  %v176 = vmul.f32 %v105, %v174
  %v177 = vmul.f32 %v109, %v174
  %v178 = vmul.f32 %v113, %v174
  %v179 = vmul.f32 %v117, %v174
  %v180 = vmul.f32 %v121, %v174
  %v181 = vmul.f32 %v125, %v174
  %v182 = vmul.f32 %v129, %v174
  %v183 = vmul.f32 %v133, %v174
  %v184 = vadd.f32 %v162, %v176
  %v185 = vadd.f32 %v163, %v177
  %v186 = vadd.f32 %v164, %v178
  %v187 = vadd.f32 %v165, %v179
  %v188 = vadd.f32 %v166, %v180
  %v189 = vadd.f32 %v167, %v181
  %v190 = vadd.f32 %v168, %v182
  %v191 = vadd.f32 %v169, %v183
  %v193 = vlaneseq
  %v194 = vshrl.u32 %v193, 7
  %v195 = vsub.s32 0, %v194
  %v196 = vrot.slane %v31, %v195
  %v198 = vadd.f32 %v184, %v196
  %v199 = vadd.f32 %v185, %v196
  %v200 = vadd.f32 %v186, %v196
  %v201 = vadd.f32 %v187, %v196
  %v202 = vadd.f32 %v188, %v196
  %v203 = vadd.f32 %v189, %v196
  %v204 = vadd.f32 %v190, %v196
  %v205 = vadd.f32 %v191, %v196
  %v206 = vmax.f32 %v198, 0.0
  %v207 = vmax.f32 %v199, 0.0
  %v208 = vmax.f32 %v200, 0.0
  %v209 = vmax.f32 %v201, 0.0
  %v210 = vmax.f32 %v202, 0.0
  %v211 = vmax.f32 %v203, 0.0
  %v212 = vmax.f32 %v204, 0.0
  %v213 = vmax.f32 %v205, 0.0
  %v222 = vcombine.high %v206, %v206
  %v224 = vunpack.c.l.s4 1983009808
  %v225 = vunpack.c.0.s8 %v224
  %v226 = vlaneseq
  %v227 = vshrl.u32 %v226, 7
  %v228 = vsub.s32 %v225, %v227
  %v229 = vrot.slane %v206, %v228
  %v231 = vunpack.c.l.s4 1983009808
  %v232 = vunpack.c.0.s8 %v231
  %v233 = vlaneseq
  %v234 = vshrl.u32 %v233, 7
  %v235 = vsub.s32 %v232, %v234
  %v236 = vrot.slane %v222, %v235
  %v237 = vcombine.high %v229, %v229
  %v238 = vcombine.high %v236, %v236
  %v239 = vcombine.high %v207, %v207
  %v241 = vunpack.c.l.s4 1983009808
  %v242 = vunpack.c.0.s8 %v241
  %v243 = vlaneseq
  %v244 = vshrl.u32 %v243, 7
  %v245 = vsub.s32 %v242, %v244
  %v246 = vrot.slane %v207, %v245
  %v248 = vunpack.c.l.s4 1983009808
  %v249 = vunpack.c.0.s8 %v248
  %v250 = vlaneseq
  %v251 = vshrl.u32 %v250, 7
  %v252 = vsub.s32 %v249, %v251
  %v253 = vrot.slane %v239, %v252
  %v254 = vcombine.high %v246, %v246
  %v255 = vcombine.high %v253, %v253
  %v256 = vcombine.high %v208, %v208
  %v258 = vunpack.c.l.s4 1983009808
  %v259 = vunpack.c.0.s8 %v258
  %v260 = vlaneseq
  %v261 = vshrl.u32 %v260, 7
  %v262 = vsub.s32 %v259, %v261
  %v263 = vrot.slane %v208, %v262
  %v265 = vunpack.c.l.s4 1983009808
  %v266 = vunpack.c.0.s8 %v265
  %v267 = vlaneseq
  %v268 = vshrl.u32 %v267, 7
  %v269 = vsub.s32 %v266, %v268
  %v270 = vrot.slane %v256, %v269
  %v271 = vcombine.high %v263, %v263
  %v272 = vcombine.high %v270, %v270
  %v273 = vcombine.high %v209, %v209
  %v275 = vunpack.c.l.s4 1983009808
  %v276 = vunpack.c.0.s8 %v275
  %v277 = vlaneseq
  %v278 = vshrl.u32 %v277, 7
  %v279 = vsub.s32 %v276, %v278
  %v280 = vrot.slane %v209, %v279
  %v282 = vunpack.c.l.s4 1983009808
  %v283 = vunpack.c.0.s8 %v282
  %v284 = vlaneseq
  %v285 = vshrl.u32 %v284, 7
  %v286 = vsub.s32 %v283, %v285
  %v287 = vrot.slane %v273, %v286
  %v288 = vcombine.high %v280, %v280
  %v289 = vcombine.high %v210, %v210
  %v291 = vunpack.c.l.s4 1983009808
  %v292 = vunpack.c.0.s8 %v291
  %v293 = vlaneseq
  %v294 = vshrl.u32 %v293, 7
  %v295 = vsub.s32 %v292, %v294
  %v296 = vrot.slane %v210, %v295
  %v298 = vunpack.c.l.s4 1983009808
  %v299 = vunpack.c.0.s8 %v298
  %v300 = vlaneseq
  %v301 = vshrl.u32 %v300, 7
  %v302 = vsub.s32 %v299, %v301
  %v303 = vrot.slane %v289, %v302
  %v304 = vcombine.high %v296, %v296
  %v305 = vcombine.high %v303, %v303
  %v306 = vcombine.high %v211, %v211
  %v308 = vunpack.c.l.s4 1983009808
  %v309 = vunpack.c.0.s8 %v308
  %v310 = vlaneseq
  %v311 = vshrl.u32 %v310, 7
  %v312 = vsub.s32 %v309, %v311
  %v313 = vrot.slane %v211, %v312
  %v315 = vunpack.c.l.s4 1983009808
  %v316 = vunpack.c.0.s8 %v315
  %v317 = vlaneseq
  %v318 = vshrl.u32 %v317, 7
  %v319 = vsub.s32 %v316, %v318
  %v320 = vrot.slane %v306, %v319
  %v321 = vcombine.high %v313, %v313
  %v322 = vcombine.high %v320, %v320
  %v323 = vcombine.high %v212, %v212
  %v325 = vunpack.c.l.s4 1983009808
  %v326 = vunpack.c.0.s8 %v325
  %v327 = vlaneseq
  %v328 = vshrl.u32 %v327, 7
  %v329 = vsub.s32 %v326, %v328
  %v330 = vrot.slane %v212, %v329
  %v332 = vunpack.c.l.s4 1983009808
  %v333 = vunpack.c.0.s8 %v332
  %v334 = vlaneseq
  %v335 = vshrl.u32 %v334, 7
  %v336 = vsub.s32 %v333, %v335
  %v337 = vrot.slane %v323, %v336
  %v338 = vcombine.high %v330, %v330
  %v339 = vcombine.high %v337, %v337
  %v340 = vcombine.high %v213, %v213
  %v342 = vunpack.c.l.s4 1983009808
  %v343 = vunpack.c.0.s8 %v342
  %v344 = vlaneseq
  %v345 = vshrl.u32 %v344, 7
  %v346 = vsub.s32 %v343, %v345
  %v347 = vrot.slane %v213, %v346
  %v349 = vunpack.c.l.s4 1983009808
  %v350 = vunpack.c.0.s8 %v349
  %v351 = vlaneseq
  %v352 = vshrl.u32 %v351, 7
  %v353 = vsub.s32 %v350, %v352
  %v354 = vrot.slane %v340, %v353
  %v355 = vcombine.high %v347, %v347
  %v356 = vcombine.low %v229, %v237
  %v357 = vcombine.low %v236, %v238
  %v359 = vunpack.c.l.s4 1983009808
  %v360 = vunpack.c.0.s8 %v359
  %v361 = vlaneseq
  %v362 = vshrl.u32 %v361, 7
  %v363 = vsub.s32 %v360, %v362
  %v364 = vrot.slane %v356, %v363
  %v366 = vunpack.c.l.s4 1983009808
  %v367 = vunpack.c.0.s8 %v366
  %v368 = vlaneseq
  %v369 = vshrl.u32 %v368, 7
  %v370 = vsub.s32 %v367, %v369
  %v371 = vrot.slane %v357, %v370
  %v372 = vcombine.low %v364, %v371
  %v373 = vcombine.low %v246, %v254
  %v374 = vcombine.low %v253, %v255
  %v376 = vunpack.c.l.s4 1983009808
  %v377 = vunpack.c.0.s8 %v376
  %v378 = vlaneseq
  %v379 = vshrl.u32 %v378, 7
  %v380 = vsub.s32 %v377, %v379
  %v381 = vrot.slane %v373, %v380
  %v383 = vunpack.c.l.s4 1983009808
  %v384 = vunpack.c.0.s8 %v383
  %v385 = vlaneseq
  %v386 = vshrl.u32 %v385, 7
  %v387 = vsub.s32 %v384, %v386
  %v388 = vrot.slane %v374, %v387
  %v389 = vcombine.low %v381, %v388
  %v390 = vcombine.low %v263, %v271
  %v391 = vcombine.low %v270, %v272
  %v393 = vunpack.c.l.s4 1983009808
  %v394 = vunpack.c.0.s8 %v393
  %v395 = vlaneseq
  %v396 = vshrl.u32 %v395, 7
  %v397 = vsub.s32 %v394, %v396
  %v398 = vrot.slane %v390, %v397
  %v400 = vunpack.c.l.s4 1983009808
  %v401 = vunpack.c.0.s8 %v400
  %v402 = vlaneseq
  %v403 = vshrl.u32 %v402, 7
  %v404 = vsub.s32 %v401, %v403
  %v405 = vrot.slane %v391, %v404
  %v406 = vcombine.low %v398, %v405
  %v407 = vcombine.low %v280, %v288
  %v408 = vcombine.low %v287, %v296
  %v410 = vunpack.c.l.s4 1983009808
  %v411 = vunpack.c.0.s8 %v410
  %v412 = vlaneseq
  %v413 = vshrl.u32 %v412, 7
  %v414 = vsub.s32 %v411, %v413
  %v415 = vrot.slane %v407, %v414
  %v417 = vunpack.c.l.s4 1983009808
  %v418 = vunpack.c.0.s8 %v417
  %v419 = vlaneseq
  %v420 = vshrl.u32 %v419, 7
  %v421 = vsub.s32 %v418, %v420
  %v422 = vrot.slane %v408, %v421
  %v423 = vcombine.low %v415, %v422
  %v424 = vcombine.low %v304, %v303
  %v425 = vcombine.low %v305, %v313
  %v427 = vunpack.c.l.s4 1983009808
  %v428 = vunpack.c.0.s8 %v427
  %v429 = vlaneseq
  %v430 = vshrl.u32 %v429, 7
  %v431 = vsub.s32 %v428, %v430
  %v432 = vrot.slane %v424, %v431
  %v434 = vunpack.c.l.s4 1983009808
  %v435 = vunpack.c.0.s8 %v434
  %v436 = vlaneseq
  %v437 = vshrl.u32 %v436, 7
  %v438 = vsub.s32 %v435, %v437
  %v439 = vrot.slane %v425, %v438
  %v440 = vcombine.low %v432, %v439
  %v441 = vcombine.low %v321, %v320
  %v442 = vcombine.low %v322, %v330
  %v444 = vunpack.c.l.s4 1983009808
  %v445 = vunpack.c.0.s8 %v444
  %v446 = vlaneseq
  %v447 = vshrl.u32 %v446, 7
  %v448 = vsub.s32 %v445, %v447
  %v449 = vrot.slane %v441, %v448
  %v451 = vunpack.c.l.s4 1983009808
  %v452 = vunpack.c.0.s8 %v451
  %v453 = vlaneseq
  %v454 = vshrl.u32 %v453, 7
  %v455 = vsub.s32 %v452, %v454
  %v456 = vrot.slane %v442, %v455
  %v457 = vcombine.low %v449, %v456
  %v458 = vcombine.low %v338, %v337
  %v459 = vcombine.low %v339, %v347
  %v461 = vunpack.c.l.s4 1983009808
  %v462 = vunpack.c.0.s8 %v461
  %v463 = vlaneseq
  %v464 = vshrl.u32 %v463, 7
  %v465 = vsub.s32 %v462, %v464
  %v466 = vrot.slane %v458, %v465
  %v468 = vunpack.c.l.s4 1983009808
  %v469 = vunpack.c.0.s8 %v468
  %v470 = vlaneseq
  %v471 = vshrl.u32 %v470, 7
  %v472 = vsub.s32 %v469, %v471
  %v473 = vrot.slane %v459, %v472
  %v474 = vcombine.low %v466, %v473
  %v475 = vcombine.low %v355, %v354
  %v477 = vunpack.c.l.s4 1983009808
  %v478 = vunpack.c.0.s8 %v477
  %v479 = vlaneseq
  %v480 = vshrl.u32 %v479, 7
  %v481 = vsub.s32 %v478, %v480
  %v482 = vrot.slane %v475, %v481
  %v491 = vpack.c.bf16 %v389, %v372
  %v492 = vpack.c.bf16 %v423, %v406
  %v493 = vpack.c.bf16 %v457, %v440
  %v494 = vpack.c.bf16 %v482, %v474
  %v495 = vld [vmem:[%s5] sm:$0xf]
  %v496 = vld [vmem:[%s5 + $0x4] sm:$0xf]
  %v497 = vld [vmem:[%s5 + $0x8] sm:$0xf]
  %v498 = vld [vmem:[%s5 + $0xc] sm:$0xf]
  %v499 = vld [vmem:[%s5 + $0x10] sm:$0xf]
  %v500 = vld [vmem:[%s5 + $0x14] sm:$0xf]
  %v501 = vld [vmem:[%s5 + $0x18] sm:$0xf]
  %v502 = vld [vmem:[%s5 + $0x1c] sm:$0xf]
  %v503 = vld [vmem:[%s5 + $0x20] sm:$0xf]
  %v504 = vld [vmem:[%s5 + $0x24] sm:$0xf]
  %v505 = vld [vmem:[%s5 + $0x28] sm:$0xf]
  %v506 = vld [vmem:[%s5 + $0x2c] sm:$0xf]
  %v507 = vld [vmem:[%s5 + $0x30] sm:$0xf]
  %v508 = vld [vmem:[%s5 + $0x34] sm:$0xf]
  %v509 = vld [vmem:[%s5 + $0x38] sm:$0xf]
  %v510 = vld [vmem:[%s5 + $0x3c] sm:$0xf]
  %v511 = vld [vmem:[%s6] sm:$0x1]
  %v513 = vlaneseq
  %v514 = vshrl.u32 %v513, 7
  %v515 = vsub.s32 0, %v514
  %v516 = vrot.slane %v511, %v515
  %v534 = vunpack.c.l.b16 %v495
  %v535 = vunpack.c.l.b16 %v496
  %v536 = vunpack.c.l.b16 %v497
  %v537 = vunpack.c.l.b16 %v498
  %v538 = vunpack.c.l.b16 %v499
  %v539 = vunpack.c.l.b16 %v500
  %v540 = vunpack.c.l.b16 %v501
  %v541 = vunpack.c.l.b16 %v502
  %v542 = vunpack.c.l.b16 %v503
  %v543 = vunpack.c.l.b16 %v504
  %v544 = vunpack.c.l.b16 %v505
  %v545 = vunpack.c.l.b16 %v506
  %v546 = vunpack.c.l.b16 %v507
  %v547 = vunpack.c.l.b16 %v508
  %v548 = vunpack.c.l.b16 %v509
  %v549 = vunpack.c.l.b16 %v510
  %v550 = vpack.c.b16 %v535, %v534
  %v551 = vpack.c.b16 %v537, %v536
  %v552 = vpack.c.b16 %v539, %v538
  %v553 = vpack.c.b16 %v541, %v540
  %v554 = vpack.c.b16 %v543, %v542
  %v555 = vpack.c.b16 %v545, %v544
  %v556 = vpack.c.b16 %v547, %v546
  %v557 = vpack.c.b16 %v549, %v548
  %566 = vmatprep.subr.bf16.mxu0 0
  %567 = vmatpush1.bf16.msra.mxu0 %v557
  %568 = vmatprep.subr.bf16.mxu0 0
  %569 = vmatpush1.bf16.msra.mxu0 %v556
  %570 = vmatprep.subr.bf16.mxu0 0
  %571 = vmatpush1.bf16.msra.mxu0 %v555
  %572 = vmatprep.subr.bf16.mxu0 0
  %573 = vmatpush1.bf16.msra.mxu0 %v554
  %574 = vmatprep.subr.bf16.mxu0 0
  %575 = vmatpush1.bf16.msra.mxu0 %v553
  %576 = vmatprep.subr.bf16.mxu0 0
  %577 = vmatpush1.bf16.msra.mxu0 %v552
  %578 = vmatprep.subr.bf16.mxu0 0
  %579 = vmatpush1.bf16.msra.mxu0 %v551
  %580 = vmatprep.subr.bf16.mxu0 0
  %581 = vmatpush1.bf16.msra.mxu0 %v550
  %582 = vmatprep.subr.bf16.mxu0 0
  %583 = vmatpush2.bf16.msra.mxu0 0
  %584 = vmatprep.subr.bf16.mxu0 0
  %585 = vmatpush2.bf16.msra.mxu0 0
  %586 = vmatprep.subr.bf16.mxu0 0
  %587 = vmatpush2.bf16.msra.mxu0 0
  %588 = vmatprep.subr.bf16.mxu0 0
  %589 = vmatpush2.bf16.msra.mxu0 0
  %590 = vmatprep.subr.bf16.mxu0 0
  %591 = vmatpush2.bf16.msra.mxu0 0
  %592 = vmatprep.subr.bf16.mxu0 0
  %593 = vmatpush2.bf16.msra.mxu0 0
  %594 = vmatprep.subr.bf16.mxu0 0
  %595 = vmatpush2.bf16.msra.mxu0 0
  %596 = vmatprep.subr.bf16.mxu0 0
  %597 = vmatpush2.bf16.msra.mxu0 0
  %598 = vmatprep.mubr.bf16.mxu0 0
  %599 = vmatmul.mubr.bf16.gmra.mxu0 %v491
  %v600 = vpop.f32.mrf.mxu0
  %v601 = vadd.f32 %v516, %v600
  %v602 = vpop.f32.mrf.mxu0
  %v603 = vpop.f32.mrf.mxu0
  %v604 = vadd.f32 %v516, %v603
  %v605 = vpop.f32.mrf.mxu0
  %606 = vmatprep.mubr.bf16.mxu0 0
  %607 = vmatmul.mubr.bf16.gmra.mxu0 %v492
  %v608 = vpop.f32.mrf.mxu0
  %v609 = vadd.f32 %v516, %v608
  %v610 = vpop.f32.mrf.mxu0
  %v611 = vpop.f32.mrf.mxu0
  %v612 = vadd.f32 %v516, %v611
  %v613 = vpop.f32.mrf.mxu0
  %614 = vmatprep.mubr.bf16.mxu0 0
  %615 = vmatmul.mubr.bf16.gmra.mxu0 %v493
  %v616 = vpop.f32.mrf.mxu0
  %v617 = vadd.f32 %v516, %v616
  %v618 = vpop.f32.mrf.mxu0
  %v619 = vpop.f32.mrf.mxu0
  %v620 = vadd.f32 %v516, %v619
  %v621 = vpop.f32.mrf.mxu0
  %622 = vmatprep.mubr.bf16.mxu0 0
  %623 = vmatmul.mubr.bf16.gmra.mxu0 %v494
  %v624 = vpop.f32.mrf.mxu0
  %v625 = vadd.f32 %v516, %v624
  %v626 = vpop.f32.mrf.mxu0
  %v627 = vpop.f32.mrf.mxu0
  %v628 = vadd.f32 %v516, %v627
  %v629 = vpop.f32.mrf.mxu0
  %630 = vdwg.mxu0
  %v631 = vmax.f32 %v601, 0.0
  %v632 = vmax.f32 %v604, 0.0
  %v633 = vmax.f32 %v609, 0.0
  %v634 = vmax.f32 %v612, 0.0
  %v635 = vmax.f32 %v617, 0.0
  %v636 = vmax.f32 %v620, 0.0
  %v637 = vmax.f32 %v625, 0.0
  %v638 = vmax.f32 %v628, 0.0
  %v647 = vcombine.high %v631, %v631
  %v649 = vunpack.c.l.s4 1983009808
  %v650 = vunpack.c.0.s8 %v649
  %v651 = vlaneseq
  %v652 = vshrl.u32 %v651, 7
  %v653 = vsub.s32 %v650, %v652
  %v654 = vrot.slane %v631, %v653
  %v656 = vunpack.c.l.s4 1983009808
  %v657 = vunpack.c.0.s8 %v656
  %v658 = vlaneseq
  %v659 = vshrl.u32 %v658, 7
  %v660 = vsub.s32 %v657, %v659
  %v661 = vrot.slane %v647, %v660
  %v662 = vcombine.high %v654, %v654
  %v663 = vcombine.high %v661, %v661
  %v664 = vcombine.high %v632, %v632
  %v666 = vunpack.c.l.s4 1983009808
  %v667 = vunpack.c.0.s8 %v666
  %v668 = vlaneseq
  %v669 = vshrl.u32 %v668, 7
  %v670 = vsub.s32 %v667, %v669
  %v671 = vrot.slane %v632, %v670
  %v673 = vunpack.c.l.s4 1983009808
  %v674 = vunpack.c.0.s8 %v673
  %v675 = vlaneseq
  %v676 = vshrl.u32 %v675, 7
  %v677 = vsub.s32 %v674, %v676
  %v678 = vrot.slane %v664, %v677
  %v679 = vcombine.high %v671, %v671
  %v680 = vcombine.high %v678, %v678
  %v681 = vcombine.high %v633, %v633
  %v683 = vunpack.c.l.s4 1983009808
  %v684 = vunpack.c.0.s8 %v683
  %v685 = vlaneseq
  %v686 = vshrl.u32 %v685, 7
  %v687 = vsub.s32 %v684, %v686
  %v688 = vrot.slane %v633, %v687
  %v690 = vunpack.c.l.s4 1983009808
  %v691 = vunpack.c.0.s8 %v690
  %v692 = vlaneseq
  %v693 = vshrl.u32 %v692, 7
  %v694 = vsub.s32 %v691, %v693
  %v695 = vrot.slane %v681, %v694
  %v696 = vcombine.high %v688, %v688
  %v697 = vcombine.high %v695, %v695
  %v698 = vcombine.high %v634, %v634
  %v700 = vunpack.c.l.s4 1983009808
  %v701 = vunpack.c.0.s8 %v700
  %v702 = vlaneseq
  %v703 = vshrl.u32 %v702, 7
  %v704 = vsub.s32 %v701, %v703
  %v705 = vrot.slane %v634, %v704
  %v707 = vunpack.c.l.s4 1983009808
  %v708 = vunpack.c.0.s8 %v707
  %v709 = vlaneseq
  %v710 = vshrl.u32 %v709, 7
  %v711 = vsub.s32 %v708, %v710
  %v712 = vrot.slane %v698, %v711
  %v713 = vcombine.high %v705, %v705
  %v714 = vcombine.high %v712, %v712
  %v715 = vcombine.high %v635, %v635
  %v717 = vunpack.c.l.s4 1983009808
  %v718 = vunpack.c.0.s8 %v717
  %v719 = vlaneseq
  %v720 = vshrl.u32 %v719, 7
  %v721 = vsub.s32 %v718, %v720
  %v722 = vrot.slane %v635, %v721
  %v724 = vunpack.c.l.s4 1983009808
  %v725 = vunpack.c.0.s8 %v724
  %v726 = vlaneseq
  %v727 = vshrl.u32 %v726, 7
  %v728 = vsub.s32 %v725, %v727
  %v729 = vrot.slane %v715, %v728
  %v730 = vcombine.high %v722, %v722
  %v731 = vcombine.high %v729, %v729
  %v732 = vcombine.high %v636, %v636
  %v734 = vunpack.c.l.s4 1983009808
  %v735 = vunpack.c.0.s8 %v734
  %v736 = vlaneseq
  %v737 = vshrl.u32 %v736, 7
  %v738 = vsub.s32 %v735, %v737
  %v739 = vrot.slane %v636, %v738
  %v741 = vunpack.c.l.s4 1983009808
  %v742 = vunpack.c.0.s8 %v741
  %v743 = vlaneseq
  %v744 = vshrl.u32 %v743, 7
  %v745 = vsub.s32 %v742, %v744
  %v746 = vrot.slane %v732, %v745
  %v747 = vcombine.high %v739, %v739
  %v748 = vcombine.high %v746, %v746
  %v749 = vcombine.high %v637, %v637
  %v751 = vunpack.c.l.s4 1983009808
  %v752 = vunpack.c.0.s8 %v751
  %v753 = vlaneseq
  %v754 = vshrl.u32 %v753, 7
  %v755 = vsub.s32 %v752, %v754
  %v756 = vrot.slane %v637, %v755
  %v758 = vunpack.c.l.s4 1983009808
  %v759 = vunpack.c.0.s8 %v758
  %v760 = vlaneseq
  %v761 = vshrl.u32 %v760, 7
  %v762 = vsub.s32 %v759, %v761
  %v763 = vrot.slane %v749, %v762
  %v764 = vcombine.high %v756, %v756
  %v765 = vcombine.high %v763, %v763
  %v767 = vunpack.c.l.s4 1983009808
  %v768 = vunpack.c.0.s8 %v767
  %v769 = vlaneseq
  %v770 = vshrl.u32 %v769, 7
  %v771 = vsub.s32 %v768, %v770
  %v772 = vrot.slane %v638, %v771
  %v773 = vcombine.high %v772, %v772
  %vm804 = vcmask 1041408
  %v805 = vsel %vm804, %v654, -inf
  %v806 = vrot.slane %v805, 4
  %v807 = vmax.f32 %v805, %v806
  %v808 = vrot.slane %v807, 2
  %v809 = vmax.f32 %v807, %v808
  %v810 = vrot.slane %v809, 1
  %v811 = vmax.f32 %v809, %v810
  %v812 = vsel %vm804, %v662, -inf
  %v813 = vrot.slane %v812, 4
  %v814 = vmax.f32 %v812, %v813
  %v815 = vrot.slane %v814, 2
  %v816 = vmax.f32 %v814, %v815
  %v817 = vrot.slane %v816, 1
  %v818 = vmax.f32 %v816, %v817
  %v819 = vsel %vm804, %v661, -inf
  %v820 = vrot.slane %v819, 4
  %v821 = vmax.f32 %v819, %v820
  %v822 = vrot.slane %v821, 2
  %v823 = vmax.f32 %v821, %v822
  %v824 = vrot.slane %v823, 1
  %v825 = vmax.f32 %v823, %v824
  %v826 = vsel %vm804, %v663, -inf
  %v827 = vrot.slane %v826, 4
  %v828 = vmax.f32 %v826, %v827
  %v829 = vrot.slane %v828, 2
  %v830 = vmax.f32 %v828, %v829
  %v831 = vrot.slane %v830, 1
  %v832 = vmax.f32 %v830, %v831
  %v833 = vsel %vm804, %v671, -inf
  %v834 = vrot.slane %v833, 4
  %v835 = vmax.f32 %v833, %v834
  %v836 = vrot.slane %v835, 2
  %v837 = vmax.f32 %v835, %v836
  %v838 = vrot.slane %v837, 1
  %v839 = vmax.f32 %v837, %v838
  %v840 = vsel %vm804, %v679, -inf
  %v841 = vrot.slane %v840, 4
  %v842 = vmax.f32 %v840, %v841
  %v843 = vrot.slane %v842, 2
  %v844 = vmax.f32 %v842, %v843
  %v845 = vrot.slane %v844, 1
  %v846 = vmax.f32 %v844, %v845
  %v847 = vsel %vm804, %v678, -inf
  %v848 = vrot.slane %v847, 4
  %v849 = vmax.f32 %v847, %v848
  %v850 = vrot.slane %v849, 2
  %v851 = vmax.f32 %v849, %v850
  %v852 = vrot.slane %v851, 1
  %v853 = vmax.f32 %v851, %v852
  %v854 = vsel %vm804, %v680, -inf
  %v855 = vrot.slane %v854, 4
  %v856 = vmax.f32 %v854, %v855
  %v857 = vrot.slane %v856, 2
  %v858 = vmax.f32 %v856, %v857
  %v859 = vrot.slane %v858, 1
  %v860 = vmax.f32 %v858, %v859
  %v861 = vsel %vm804, %v688, -inf
  %v862 = vrot.slane %v861, 4
  %v863 = vmax.f32 %v861, %v862
  %v864 = vrot.slane %v863, 2
  %v865 = vmax.f32 %v863, %v864
  %v866 = vrot.slane %v865, 1
  %v867 = vmax.f32 %v865, %v866
  %v868 = vsel %vm804, %v696, -inf
  %v869 = vrot.slane %v868, 4
  %v870 = vmax.f32 %v868, %v869
  %v871 = vrot.slane %v870, 2
  %v872 = vmax.f32 %v870, %v871
  %v873 = vrot.slane %v872, 1
  %v874 = vmax.f32 %v872, %v873
  %v875 = vsel %vm804, %v695, -inf
  %v876 = vrot.slane %v875, 4
  %v877 = vmax.f32 %v875, %v876
  %v878 = vrot.slane %v877, 2
  %v879 = vmax.f32 %v877, %v878
  %v880 = vrot.slane %v879, 1
  %v881 = vmax.f32 %v879, %v880
  %v882 = vsel %vm804, %v697, -inf
  %v883 = vrot.slane %v882, 4
  %v884 = vmax.f32 %v882, %v883
  %v885 = vrot.slane %v884, 2
  %v886 = vmax.f32 %v884, %v885
  %v887 = vrot.slane %v886, 1
  %v888 = vmax.f32 %v886, %v887
  %v889 = vsel %vm804, %v705, -inf
  %v890 = vrot.slane %v889, 4
  %v891 = vmax.f32 %v889, %v890
  %v892 = vrot.slane %v891, 2
  %v893 = vmax.f32 %v891, %v892
  %v894 = vrot.slane %v893, 1
  %v895 = vmax.f32 %v893, %v894
  %v896 = vsel %vm804, %v713, -inf
  %v897 = vrot.slane %v896, 4
  %v898 = vmax.f32 %v896, %v897
  %v899 = vrot.slane %v898, 2
  %v900 = vmax.f32 %v898, %v899
  %v901 = vrot.slane %v900, 1
  %v902 = vmax.f32 %v900, %v901
  %v903 = vsel %vm804, %v712, -inf
  %v904 = vrot.slane %v903, 4
  %v905 = vmax.f32 %v903, %v904
  %v906 = vrot.slane %v905, 2
  %v907 = vmax.f32 %v905, %v906
  %v908 = vrot.slane %v907, 1
  %v909 = vmax.f32 %v907, %v908
  %v910 = vsel %vm804, %v714, -inf
  %v911 = vrot.slane %v910, 4
  %v912 = vmax.f32 %v910, %v911
  %v913 = vrot.slane %v912, 2
  %v914 = vmax.f32 %v912, %v913
  %v915 = vrot.slane %v914, 1
  %v916 = vmax.f32 %v914, %v915
  %v917 = vsel %vm804, %v722, -inf
  %v918 = vrot.slane %v917, 4
  %v919 = vmax.f32 %v917, %v918
  %v920 = vrot.slane %v919, 2
  %v921 = vmax.f32 %v919, %v920
  %v922 = vrot.slane %v921, 1
  %v923 = vmax.f32 %v921, %v922
  %v924 = vsel %vm804, %v730, -inf
  %v925 = vrot.slane %v924, 4
  %v926 = vmax.f32 %v924, %v925
  %v927 = vrot.slane %v926, 2
  %v928 = vmax.f32 %v926, %v927
  %v929 = vrot.slane %v928, 1
  %v930 = vmax.f32 %v928, %v929
  %v931 = vsel %vm804, %v729, -inf
  %v932 = vrot.slane %v931, 4
  %v933 = vmax.f32 %v931, %v932
  %v934 = vrot.slane %v933, 2
  %v935 = vmax.f32 %v933, %v934
  %v936 = vrot.slane %v935, 1
  %v937 = vmax.f32 %v935, %v936
  %v938 = vsel %vm804, %v731, -inf
  %v939 = vrot.slane %v938, 4
  %v940 = vmax.f32 %v938, %v939
  %v941 = vrot.slane %v940, 2
  %v942 = vmax.f32 %v940, %v941
  %v943 = vrot.slane %v942, 1
  %v944 = vmax.f32 %v942, %v943
  %v945 = vsel %vm804, %v739, -inf
  %v946 = vrot.slane %v945, 4
  %v947 = vmax.f32 %v945, %v946
  %v948 = vrot.slane %v947, 2
  %v949 = vmax.f32 %v947, %v948
  %v950 = vrot.slane %v949, 1
  %v951 = vmax.f32 %v949, %v950
  %v952 = vsel %vm804, %v747, -inf
  %v953 = vrot.slane %v952, 4
  %v954 = vmax.f32 %v952, %v953
  %v955 = vrot.slane %v954, 2
  %v956 = vmax.f32 %v954, %v955
  %v957 = vrot.slane %v956, 1
  %v958 = vmax.f32 %v956, %v957
  %v959 = vsel %vm804, %v746, -inf
  %v960 = vrot.slane %v959, 4
  %v961 = vmax.f32 %v959, %v960
  %v962 = vrot.slane %v961, 2
  %v963 = vmax.f32 %v961, %v962
  %v964 = vrot.slane %v963, 1
  %v965 = vmax.f32 %v963, %v964
  %v966 = vsel %vm804, %v748, -inf
  %v967 = vrot.slane %v966, 4
  %v968 = vmax.f32 %v966, %v967
  %v969 = vrot.slane %v968, 2
  %v970 = vmax.f32 %v968, %v969
  %v971 = vrot.slane %v970, 1
  %v972 = vmax.f32 %v970, %v971
  %v973 = vsel %vm804, %v756, -inf
  %v974 = vrot.slane %v973, 4
  %v975 = vmax.f32 %v973, %v974
  %v976 = vrot.slane %v975, 2
  %v977 = vmax.f32 %v975, %v976
  %v978 = vrot.slane %v977, 1
  %v979 = vmax.f32 %v977, %v978
  %v980 = vsel %vm804, %v764, -inf
  %v981 = vrot.slane %v980, 4
  %v982 = vmax.f32 %v980, %v981
  %v983 = vrot.slane %v982, 2
  %v984 = vmax.f32 %v982, %v983
  %v985 = vrot.slane %v984, 1
  %v986 = vmax.f32 %v984, %v985
  %v987 = vsel %vm804, %v763, -inf
  %v988 = vrot.slane %v987, 4
  %v989 = vmax.f32 %v987, %v988
  %v990 = vrot.slane %v989, 2
  %v991 = vmax.f32 %v989, %v990
  %v992 = vrot.slane %v991, 1
  %v993 = vmax.f32 %v991, %v992
  %v994 = vsel %vm804, %v765, -inf
  %v995 = vrot.slane %v994, 4
  %v996 = vmax.f32 %v994, %v995
  %v997 = vrot.slane %v996, 2
  %v998 = vmax.f32 %v996, %v997
  %v999 = vrot.slane %v998, 1
  %v1000 = vmax.f32 %v998, %v999
  %v1001 = vsel %vm804, %v772, -inf
  %v1002 = vrot.slane %v1001, 4
  %v1003 = vmax.f32 %v1001, %v1002
  %v1004 = vrot.slane %v1003, 2
  %v1005 = vmax.f32 %v1003, %v1004
  %v1006 = vrot.slane %v1005, 1
  %v1007 = vmax.f32 %v1005, %v1006
  %v1008 = vsel %vm804, %v773, -inf
  %v1009 = vrot.slane %v1008, 4
  %v1010 = vmax.f32 %v1008, %v1009
  %v1011 = vrot.slane %v1010, 2
  %v1012 = vmax.f32 %v1010, %v1011
  %v1013 = vrot.slane %v1012, 1
  %v1014 = vmax.f32 %v1012, %v1013
  %vm1045 = vcmask 1041409
  %v1046 = vsel %vm1045, %v818, %v811
  %vm1047 = vcmask 1042434
  %v1048 = vsel %vm1047, %v825, %v1046
  %vm1049 = vcmask 1043459
  %v1050 = vsel %vm1049, %v832, %v1048
  %vm1051 = vcmask 1044484
  %v1052 = vsel %vm1051, %v839, %v1050
  %vm1053 = vcmask 1045509
  %v1054 = vsel %vm1053, %v846, %v1052
  %vm1055 = vcmask 1046534
  %v1056 = vsel %vm1055, %v853, %v1054
  %vm1057 = vcmask 1047559
  %v1058 = vsel %vm1057, %v860, %v1056
  %v1059 = vsel %vm1045, %v874, %v867
  %v1060 = vsel %vm1047, %v881, %v1059
  %v1061 = vsel %vm1049, %v888, %v1060
  %v1062 = vsel %vm1051, %v895, %v1061
  %v1063 = vsel %vm1053, %v902, %v1062
  %v1064 = vsel %vm1055, %v909, %v1063
  %v1065 = vsel %vm1045, %v923, %v916
  %v1066 = vsel %vm1047, %v930, %v1065
  %v1067 = vsel %vm1049, %v937, %v1066
  %v1068 = vsel %vm1051, %v944, %v1067
  %v1069 = vsel %vm1053, %v951, %v1068
  %v1070 = vsel %vm1055, %v958, %v1069
  %v1071 = vsel %vm1057, %v965, %v1070
  %v1072 = vsel %vm1045, %v979, %v972
  %v1073 = vsel %vm1047, %v986, %v1072
  %v1074 = vsel %vm1049, %v993, %v1073
  %v1075 = vsel %vm1051, %v1000, %v1074
  %v1076 = vsel %vm1053, %v1007, %v1075
  %v1077 = vsel %vm1055, %v1014, %v1076
  %1082 = vst [vmem:[%s7] sm:$0xff] %v1058
  %1083 = vst [vmem:[%s7 + $0x8] sm:$0x7f] %v1064
  %1084 = vst [vmem:[%s7 + $0x10] sm:$0xff] %v1071
  %1085 = vst [vmem:[%s7 + $0x18] sm:$0x7f] %v1077
  // Predicated region
  $region30: #{forward.2} parent=0 // pred_check
    _
  $region31: #{forward.2} parent=0 // pred_check_branch
    %1087 = sbr.rel (0) target = $region33
  $region32: #{forward.2} parent=0 // pred_region
    _
  $region33: #{forward.2} parent=0 // pred_fallthru
    _
  // Predicated region
  $region34: #{forward.2} parent=0 // pred_check
    _
  $region35: #{forward.2} parent=0 // pred_check_branch
    %1089 = sbr.rel (0) target = $region37
  $region36: #{forward.2} parent=0 // pred_region
    _
  $region37: #{forward.2} parent=0 // pred_fallthru
    _

// kernel: forward.3
$region0: #{forward.3}
  #allocation0 [shape = 'u32[]', space=smem, size = 0x4, offset = 0x4, fixed_abs, tag = 'smem constant byte address 0x4 - core index']
  #allocation1 [shape = 'u32[144,128]{1,0:T(1,128)}', space=vmem, size = 0x12000, scoped, tag = 'internal scratch']
  #allocation2 [shape = 'f32[15,2,128]{2,1,0:T(2,128)}', space=vmem, size = 0x3c00, scoped, tag = 'scratch operand']
  #allocation3 [shape = 'f32[15,2,128]{2,1,0:T(2,128)}', space=vmem, size = 0x3c00, scoped, tag = 'scratch operand']
  #allocation4 [shape = 'f32[1,1]{1,0:T(1,128)S(1)}', space=vmem, size = 0x200, scoped, tag = 'scoped memory for forward.3']
  %s0 = inlined_call_operand.vmem [shape: f32[15,2,128], index: 0, kind: input, shape index: {}]
  %s1 = inlined_call_operand.vmem [shape: bf16[128,128], index: 1, kind: input, shape index: {}]
  %s2 = inlined_call_operand.vmem [shape: f32[128,128], index: 2, kind: input, shape index: {}]
  %s3 = inlined_call_operand.vmem [shape: f32[1,128], index: 3, kind: input, shape index: {}]
  %s4 = inlined_call_operand.vmem [shape: bf16[128,128], index: 4, kind: input, shape index: {}]
  %s5 = inlined_call_operand.vmem [shape: f32[128,128], index: 5, kind: input, shape index: {}]
  %s6 = inlined_call_operand.vmem [shape: f32[1,128], index: 6, kind: input, shape index: {}]
  %s7 = inlined_call_operand.vmem [shape: f32[128,32], index: 7, kind: input, shape index: {}]
  %s8 = inlined_call_operand.vmem [shape: f32[1,32], index: 8, kind: input, shape index: {}]
  %s9 = inlined_call_operand.vmem [shape: f32[32,1], index: 9, kind: input, shape index: {}]
  %s10 = inlined_call_operand.<no memory space> [shape: f32[1,1], index: 10, kind: input, shape index: {}]
  %s11 = inlined_call_operand.vmem [shape: f32[2,1], index: 11, kind: output, shape index: {}]
  %s12 = sld [smem:[#allocation0]]
  $region54: #{forward.3} parent=0
    _
  %s14 = ssub.s32 1, %s12
  %s15 = scalar_select 0, %s14, %s12
  %v16 = vstv %s10
  %17 = vst [vmem:[#allocation4] sm:$0x1] %v16
  // Predicated region
  $region2: #{forward.3} parent=0 // pred_check
    _
  $region3: #{forward.3} parent=0 // pred_check_branch
    %19 = sbr.rel (0) target = $region5
  $region4: #{forward.3} parent=0 // pred_region
    _
  $region5: #{forward.3} parent=0 // pred_fallthru
    _
  // Predicated region
  $region6: #{forward.3} parent=0 // pred_check
    _
  $region7: #{forward.3} parent=0 // pred_check_branch
    %21 = sbr.rel (0) target = $region9
  $region8: #{forward.3} parent=0 // pred_region
    _
  $region9: #{forward.3} parent=0 // pred_fallthru
    _
  // Predicated region
  $region10: #{forward.3} parent=0 // pred_check
    _
  $region11: #{forward.3} parent=0 // pred_check_branch
    %23 = sbr.rel (0) target = $region13
  $region12: #{forward.3} parent=0 // pred_region
    _
  $region13: #{forward.3} parent=0 // pred_fallthru
    _
  // Predicated region
  $region14: #{forward.3} parent=0 // pred_check
    _
  $region15: #{forward.3} parent=0 // pred_check_branch
    %25 = sbr.rel (0) target = $region17
  $region16: #{forward.3} parent=0 // pred_region
    _
  $region17: #{forward.3} parent=0 // pred_fallthru
    _
  // Predicated region
  $region18: #{forward.3} parent=0 // pred_check
    _
  $region19: #{forward.3} parent=0 // pred_check_branch
    %27 = sbr.rel (0) target = $region21
  $region20: #{forward.3} parent=0 // pred_region
    _
  $region21: #{forward.3} parent=0 // pred_fallthru
    _
  // Predicated region
  $region22: #{forward.3} parent=0 // pred_check
    _
  $region23: #{forward.3} parent=0 // pred_check_branch
    %29 = sbr.rel (0) target = $region25
  $region24: #{forward.3} parent=0 // pred_region
    _
  $region25: #{forward.3} parent=0 // pred_fallthru
    _
  // Predicated region
  $region26: #{forward.3} parent=0 // pred_check
    _
  $region27: #{forward.3} parent=0 // pred_check_branch
    %31 = sbr.rel (0) target = $region29
  $region28: #{forward.3} parent=0 // pred_region
    _
  $region29: #{forward.3} parent=0 // pred_fallthru
    _
  // Predicated region
  $region30: #{forward.3} parent=0 // pred_check
    _
  $region31: #{forward.3} parent=0 // pred_check_branch
    %33 = sbr.rel (0) target = $region33
  $region32: #{forward.3} parent=0 // pred_region
    _
  $region33: #{forward.3} parent=0 // pred_fallthru
    _
  // Predicated region
  $region34: #{forward.3} parent=0 // pred_check
    _
  $region35: #{forward.3} parent=0 // pred_check_branch
    %35 = sbr.rel (0) target = $region37
  $region36: #{forward.3} parent=0 // pred_region
    _
  $region37: #{forward.3} parent=0 // pred_fallthru
    _
  // Predicated region
  $region38: #{forward.3} parent=0 // pred_check
    _
  $region39: #{forward.3} parent=0 // pred_check_branch
    %37 = sbr.rel (0) target = $region41
  $region40: #{forward.3} parent=0 // pred_region
    _
  $region41: #{forward.3} parent=0 // pred_fallthru
    _
  // Predicated region
  $region42: #{forward.3} parent=0 // pred_check
    _
  $region43: #{forward.3} parent=0 // pred_check_branch
    %39 = sbr.rel (0) target = $region45
  $region44: #{forward.3} parent=0 // pred_region
    _
  $region45: #{forward.3} parent=0 // pred_fallthru
    _
  %v41 = vld [vmem:[%s0] sm:$0x3]
  %v42 = vld [vmem:[%s0 + $0x2] sm:$0x3]
  %v43 = vld [vmem:[%s0 + $0x4] sm:$0x3]
  %v44 = vld [vmem:[%s0 + $0x6] sm:$0x3]
  %v45 = vld [vmem:[%s0 + $0x8] sm:$0x3]
  %v46 = vld [vmem:[%s0 + $0xa] sm:$0x3]
  %v47 = vld [vmem:[%s0 + $0xc] sm:$0x3]
  %v48 = vld [vmem:[%s0 + $0xe] sm:$0x3]
  %v49 = vld [vmem:[%s0 + $0x10] sm:$0x3]
  %v50 = vld [vmem:[%s0 + $0x12] sm:$0x3]
  %v51 = vld [vmem:[%s0 + $0x14] sm:$0x3]
  %v52 = vld [vmem:[%s0 + $0x16] sm:$0x3]
  %v53 = vld [vmem:[%s0 + $0x18] sm:$0x3]
  %v54 = vld [vmem:[%s0 + $0x1a] sm:$0x3]
  %v55 = vld [vmem:[%s0 + $0x1c] sm:$0x3]
  %v71 = vcombine.low %v41, %v42
  %v72 = vcombine.low %v43, %v44
  %v74 = vunpack.c.l.s4 1983009808
  %v75 = vunpack.c.0.s8 %v74
  %v76 = vlaneseq
  %v77 = vshrl.u32 %v76, 7
  %v78 = vsub.s32 %v75, %v77
  %v79 = vrot.slane %v71, %v78
  %v81 = vunpack.c.l.s4 1983009808
  %v82 = vunpack.c.0.s8 %v81
  %v83 = vlaneseq
  %v84 = vshrl.u32 %v83, 7
  %v85 = vsub.s32 %v82, %v84
  %v86 = vrot.slane %v72, %v85
  %v87 = vcombine.low %v79, %v86
  %v88 = vcombine.low %v45, %v46
  %v89 = vcombine.low %v47, %v48
  %v91 = vunpack.c.l.s4 1983009808
  %v92 = vunpack.c.0.s8 %v91
  %v93 = vlaneseq
  %v94 = vshrl.u32 %v93, 7
  %v95 = vsub.s32 %v92, %v94
  %v96 = vrot.slane %v88, %v95
  %v98 = vunpack.c.l.s4 1983009808
  %v99 = vunpack.c.0.s8 %v98
  %v100 = vlaneseq
  %v101 = vshrl.u32 %v100, 7
  %v102 = vsub.s32 %v99, %v101
  %v103 = vrot.slane %v89, %v102
  %v104 = vcombine.low %v96, %v103
  %v105 = vcombine.low %v49, %v50
  %v106 = vcombine.low %v51, %v52
  %v108 = vunpack.c.l.s4 1983009808
  %v109 = vunpack.c.0.s8 %v108
  %v110 = vlaneseq
  %v111 = vshrl.u32 %v110, 7
  %v112 = vsub.s32 %v109, %v111
  %v113 = vrot.slane %v105, %v112
  %v115 = vunpack.c.l.s4 1983009808
  %v116 = vunpack.c.0.s8 %v115
  %v117 = vlaneseq
  %v118 = vshrl.u32 %v117, 7
  %v119 = vsub.s32 %v116, %v118
  %v120 = vrot.slane %v106, %v119
  %v121 = vcombine.low %v113, %v120
  %v122 = vcombine.low %v53, %v54
  %v124 = vunpack.c.l.s4 1983009808
  %v125 = vunpack.c.0.s8 %v124
  %v126 = vlaneseq
  %v127 = vshrl.u32 %v126, 7
  %v128 = vsub.s32 %v125, %v127
  %v129 = vrot.slane %v122, %v128
  %v131 = vunpack.c.l.s4 1983009808
  %v132 = vunpack.c.0.s8 %v131
  %v133 = vlaneseq
  %v134 = vshrl.u32 %v133, 7
  %v135 = vsub.s32 %v132, %v134
  %v136 = vrot.slane %v55, %v135
  %v137 = vcombine.low %v129, %v136
  %v142 = vpack.c.bf16 %v104, %v87
  %v143 = vpack.c.bf16 %v137, %v121
  %v144 = vld [vmem:[%s1] sm:$0xf]
  %v145 = vld [vmem:[%s1 + $0x4] sm:$0xf]
  %v146 = vld [vmem:[%s1 + $0x8] sm:$0xf]
  %v147 = vld [vmem:[%s1 + $0xc] sm:$0xf]
  %v148 = vld [vmem:[%s1 + $0x10] sm:$0xf]
  %v149 = vld [vmem:[%s1 + $0x14] sm:$0xf]
  %v150 = vld [vmem:[%s1 + $0x18] sm:$0xf]
  %v151 = vld [vmem:[%s1 + $0x1c] sm:$0xf]
  %v152 = vld [vmem:[%s1 + $0x20] sm:$0xf]
  %v153 = vld [vmem:[%s1 + $0x24] sm:$0xf]
  %v154 = vld [vmem:[%s1 + $0x28] sm:$0xf]
  %v155 = vld [vmem:[%s1 + $0x2c] sm:$0xf]
  %v156 = vld [vmem:[%s1 + $0x30] sm:$0xf]
  %v157 = vld [vmem:[%s1 + $0x34] sm:$0xf]
  %v158 = vld [vmem:[%s1 + $0x38] sm:$0xf]
  %v159 = vld [vmem:[%s1 + $0x3c] sm:$0xf]
  %v160 = vld [vmem:[%s3] sm:$0x1]
  %v162 = vlaneseq
  %v163 = vshrl.u32 %v162, 7
  %v164 = vsub.s32 0, %v163
  %v165 = vrot.slane %v160, %v164
  %v183 = vunpack.c.l.b16 %v144
  %v184 = vunpack.c.l.b16 %v145
  %v185 = vunpack.c.l.b16 %v146
  %v186 = vunpack.c.l.b16 %v147
  %v187 = vunpack.c.l.b16 %v148
  %v188 = vunpack.c.l.b16 %v149
  %v189 = vunpack.c.l.b16 %v150
  %v190 = vunpack.c.l.b16 %v151
  %v191 = vunpack.c.l.b16 %v152
  %v192 = vunpack.c.l.b16 %v153
  %v193 = vunpack.c.l.b16 %v154
  %v194 = vunpack.c.l.b16 %v155
  %v195 = vunpack.c.l.b16 %v156
  %v196 = vunpack.c.l.b16 %v157
  %v197 = vunpack.c.l.b16 %v158
  %v198 = vunpack.c.l.b16 %v159
  %v199 = vpack.c.b16 %v184, %v183
  %v200 = vpack.c.b16 %v186, %v185
  %v201 = vpack.c.b16 %v188, %v187
  %v202 = vpack.c.b16 %v190, %v189
  %v203 = vpack.c.b16 %v192, %v191
  %v204 = vpack.c.b16 %v194, %v193
  %v205 = vpack.c.b16 %v196, %v195
  %v206 = vpack.c.b16 %v198, %v197
  %215 = vmatprep.subr.bf16.mxu0 0
  %216 = vmatpush1.bf16.msra.mxu0 %v206
  %217 = vmatprep.subr.bf16.mxu0 0
  %218 = vmatpush1.bf16.msra.mxu0 %v205
  %219 = vmatprep.subr.bf16.mxu0 0
  %220 = vmatpush1.bf16.msra.mxu0 %v204
  %221 = vmatprep.subr.bf16.mxu0 0
  %222 = vmatpush1.bf16.msra.mxu0 %v203
  %223 = vmatprep.subr.bf16.mxu0 0
  %224 = vmatpush1.bf16.msra.mxu0 %v202
  %225 = vmatprep.subr.bf16.mxu0 0
  %226 = vmatpush1.bf16.msra.mxu0 %v201
  %227 = vmatprep.subr.bf16.mxu0 0
  %228 = vmatpush1.bf16.msra.mxu0 %v200
  %229 = vmatprep.subr.bf16.mxu0 0
  %230 = vmatpush1.bf16.msra.mxu0 %v199
  %231 = vmatprep.subr.bf16.mxu0 0
  %232 = vmatpush2.bf16.msra.mxu0 0
  %233 = vmatprep.subr.bf16.mxu0 0
  %234 = vmatpush2.bf16.msra.mxu0 0
  %235 = vmatprep.subr.bf16.mxu0 0
  %236 = vmatpush2.bf16.msra.mxu0 0
  %237 = vmatprep.subr.bf16.mxu0 0
  %238 = vmatpush2.bf16.msra.mxu0 0
  %239 = vmatprep.subr.bf16.mxu0 0
  %240 = vmatpush2.bf16.msra.mxu0 0
  %241 = vmatprep.subr.bf16.mxu0 0
  %242 = vmatpush2.bf16.msra.mxu0 0
  %243 = vmatprep.subr.bf16.mxu0 0
  %244 = vmatpush2.bf16.msra.mxu0 0
  %245 = vmatprep.subr.bf16.mxu0 0
  %246 = vmatpush2.bf16.msra.mxu0 0
  %247 = vmatprep.mubr.bf16.mxu0 0
  %248 = vmatmul.mubr.bf16.gmra.mxu0 %v142
  %v249 = vpop.f32.mrf.mxu0
  %v250 = vadd.f32 %v165, %v249
  %v251 = vpop.f32.mrf.mxu0
  %v252 = vpop.f32.mrf.mxu0
  %v253 = vadd.f32 %v165, %v252
  %v254 = vpop.f32.mrf.mxu0
  %255 = vmatprep.mubr.bf16.mxu0 0
  %256 = vmatmul.mubr.bf16.gmra.mxu0 %v143
  %v257 = vpop.f32.mrf.mxu0
  %v258 = vadd.f32 %v165, %v257
  %v259 = vpop.f32.mrf.mxu0
  %v260 = vpop.f32.mrf.mxu0
  %v261 = vadd.f32 %v165, %v260
  %v262 = vpop.f32.mrf.mxu0
  %263 = vdwg.mxu0
  %v268 = vcombine.high %v250, %v250
  %v270 = vunpack.c.l.s4 1983009808
  %v271 = vunpack.c.0.s8 %v270
  %v272 = vlaneseq
  %v273 = vshrl.u32 %v272, 7
  %v274 = vsub.s32 %v271, %v273
  %v275 = vrot.slane %v250, %v274
  %v277 = vunpack.c.l.s4 1983009808
  %v278 = vunpack.c.0.s8 %v277
  %v279 = vlaneseq
  %v280 = vshrl.u32 %v279, 7
  %v281 = vsub.s32 %v278, %v280
  %v282 = vrot.slane %v268, %v281
  %v283 = vcombine.high %v275, %v275
  %v284 = vcombine.high %v282, %v282
  %v285 = vcombine.high %v253, %v253
  %v287 = vunpack.c.l.s4 1983009808
  %v288 = vunpack.c.0.s8 %v287
  %v289 = vlaneseq
  %v290 = vshrl.u32 %v289, 7
  %v291 = vsub.s32 %v288, %v290
  %v292 = vrot.slane %v253, %v291
  %v294 = vunpack.c.l.s4 1983009808
  %v295 = vunpack.c.0.s8 %v294
  %v296 = vlaneseq
  %v297 = vshrl.u32 %v296, 7
  %v298 = vsub.s32 %v295, %v297
  %v299 = vrot.slane %v285, %v298
  %v300 = vcombine.high %v292, %v292
  %v301 = vcombine.high %v299, %v299
  %v302 = vcombine.high %v258, %v258
  %v304 = vunpack.c.l.s4 1983009808
  %v305 = vunpack.c.0.s8 %v304
  %v306 = vlaneseq
  %v307 = vshrl.u32 %v306, 7
  %v308 = vsub.s32 %v305, %v307
  %v309 = vrot.slane %v258, %v308
  %v311 = vunpack.c.l.s4 1983009808
  %v312 = vunpack.c.0.s8 %v311
  %v313 = vlaneseq
  %v314 = vshrl.u32 %v313, 7
  %v315 = vsub.s32 %v312, %v314
  %v316 = vrot.slane %v302, %v315
  %v317 = vcombine.high %v309, %v309
  %v318 = vcombine.high %v316, %v316
  %v319 = vcombine.high %v261, %v261
  %v321 = vunpack.c.l.s4 1983009808
  %v322 = vunpack.c.0.s8 %v321
  %v323 = vlaneseq
  %v324 = vshrl.u32 %v323, 7
  %v325 = vsub.s32 %v322, %v324
  %v326 = vrot.slane %v261, %v325
  %v328 = vunpack.c.l.s4 1983009808
  %v329 = vunpack.c.0.s8 %v328
  %v330 = vlaneseq
  %v331 = vshrl.u32 %v330, 7
  %v332 = vsub.s32 %v329, %v331
  %v333 = vrot.slane %v319, %v332
  %v334 = vcombine.high %v326, %v326
  %350 = vst [vmem:[#allocation2] sm:$0x3] %v275
  %351 = vst [vmem:[#allocation2 + $0x2] sm:$0x3] %v283
  %352 = vst [vmem:[#allocation2 + $0x4] sm:$0x3] %v282
  %353 = vst [vmem:[#allocation2 + $0x6] sm:$0x3] %v284
  %354 = vst [vmem:[#allocation2 + $0x8] sm:$0x3] %v292
  %355 = vst [vmem:[#allocation2 + $0xa] sm:$0x3] %v300
  %356 = vst [vmem:[#allocation2 + $0xc] sm:$0x3] %v299
  %357 = vst [vmem:[#allocation2 + $0xe] sm:$0x3] %v301
  %358 = vst [vmem:[#allocation2 + $0x10] sm:$0x3] %v309
  %359 = vst [vmem:[#allocation2 + $0x12] sm:$0x3] %v317
  %360 = vst [vmem:[#allocation2 + $0x14] sm:$0x3] %v316
  %361 = vst [vmem:[#allocation2 + $0x16] sm:$0x3] %v318
  %362 = vst [vmem:[#allocation2 + $0x18] sm:$0x3] %v326
  %363 = vst [vmem:[#allocation2 + $0x1a] sm:$0x3] %v334
  %364 = vst [vmem:[#allocation2 + $0x1c] sm:$0x3] %v333
  %v365 = vld [vmem:[%s2] sm:$0xff]
  %v366 = vld [vmem:[%s2 + $0x8] sm:$0xff]
  %v367 = vld [vmem:[%s2 + $0x10] sm:$0xff]
  %v368 = vld [vmem:[%s2 + $0x18] sm:$0xff]
  %v369 = vld [vmem:[%s2 + $0x20] sm:$0xff]
  %v370 = vld [vmem:[%s2 + $0x28] sm:$0xff]
  %v371 = vld [vmem:[%s2 + $0x30] sm:$0xff]
  %v372 = vld [vmem:[%s2 + $0x38] sm:$0xff]
  %v373 = vld [vmem:[%s2 + $0x40] sm:$0xff]
  %v374 = vld [vmem:[%s2 + $0x48] sm:$0xff]
  %v375 = vld [vmem:[%s2 + $0x50] sm:$0xff]
  %v376 = vld [vmem:[%s2 + $0x58] sm:$0xff]
  %v377 = vld [vmem:[%s2 + $0x60] sm:$0xff]
  %v378 = vld [vmem:[%s2 + $0x68] sm:$0xff]
  %v379 = vld [vmem:[%s2 + $0x70] sm:$0xff]
  %v380 = vld [vmem:[%s2 + $0x78] sm:$0xff]
  %v381 = vld [vmem:[#allocation2] sm:$0x3]
  %382 = vmatprep.subr.mxu0 0.0
  %383 = vmatpush1.msra.mxu0 %v380
  %384 = vmatprep.subr.mxu0 0.0
  %385 = vmatpush1.msra.mxu0 %v379
  %386 = vmatprep.subr.mxu0 0.0
  %387 = vmatpush1.msra.mxu0 %v378
  %388 = vmatprep.subr.mxu0 0.0
  %389 = vmatpush1.msra.mxu0 %v377
  %390 = vmatprep.subr.mxu0 0.0
  %391 = vmatpush1.msra.mxu0 %v376
  %392 = vmatprep.subr.mxu0 0.0
  %393 = vmatpush1.msra.mxu0 %v375
  %394 = vmatprep.subr.mxu0 0.0
  %395 = vmatpush1.msra.mxu0 %v374
  %396 = vmatprep.subr.mxu0 0.0
  %397 = vmatpush1.msra.mxu0 %v373
  %398 = vmatprep.subr.mxu0 0.0
  %399 = vmatpush1.msra.mxu0 %v372
  %400 = vmatprep.subr.mxu0 0.0
  %401 = vmatpush1.msra.mxu0 %v371
  %402 = vmatprep.subr.mxu0 0.0
  %403 = vmatpush1.msra.mxu0 %v370
  %404 = vmatprep.subr.mxu0 0.0
  %405 = vmatpush1.msra.mxu0 %v369
  %406 = vmatprep.subr.mxu0 0.0
  %407 = vmatpush1.msra.mxu0 %v368
  %408 = vmatprep.subr.mxu0 0.0
  %409 = vmatpush1.msra.mxu0 %v367
  %410 = vmatprep.subr.mxu0 0.0
  %411 = vmatpush1.msra.mxu0 %v366
  %412 = vmatprep.subr.mxu0 0.0
  %413 = vmatpush1.msra.mxu0 %v365
  %414 = vmatprep.subr.mxu0 0.0
  %415 = vmatpush2.msra.mxu0 0.0
  %416 = vmatprep.subr.mxu0 0.0
  %417 = vmatpush2.msra.mxu0 0.0
  %418 = vmatprep.subr.mxu0 0.0
  %419 = vmatpush2.msra.mxu0 0.0
  %420 = vmatprep.subr.mxu0 0.0
  %421 = vmatpush2.msra.mxu0 0.0
  %422 = vmatprep.subr.mxu0 0.0
  %423 = vmatpush2.msra.mxu0 0.0
  %424 = vmatprep.subr.mxu0 0.0
  %425 = vmatpush2.msra.mxu0 0.0
  %426 = vmatprep.subr.mxu0 0.0
  %427 = vmatpush2.msra.mxu0 0.0
  %428 = vmatprep.subr.mxu0 0.0
  %429 = vmatpush2.msra.mxu0 0.0
  %430 = vmatprep.subr.mxu0 0.0
  %431 = vmatpush2.msra.mxu0 0.0
  %432 = vmatprep.subr.mxu0 0.0
  %433 = vmatpush2.msra.mxu0 0.0
  %434 = vmatprep.subr.mxu0 0.0
  %435 = vmatpush2.msra.mxu0 0.0
  %436 = vmatprep.subr.mxu0 0.0
  %437 = vmatpush2.msra.mxu0 0.0
  %438 = vmatprep.subr.mxu0 0.0
  %439 = vmatpush2.msra.mxu0 0.0
  %440 = vmatprep.subr.mxu0 0.0
  %441 = vmatpush2.msra.mxu0 0.0
  %442 = vmatprep.subr.mxu0 0.0
  %443 = vmatpush2.msra.mxu0 0.0
  %444 = vmatprep.subr.mxu0 0.0
  %445 = vmatpush2.msra.mxu0 0.0
  %446 = vmatprep.mubr.f32.mxu0 0.0
  %447 = vmatmul.mubr.f32.gmra.mxu0 0.0
  %v448 = vpop.f32.mrf.mxu0
  %v449 = vadd.f32 0.0, %v448
  %v450 = vpop.f32.mrf.mxu0
  %451 = vdwg.mxu0
  %v452 = vadd.f32 %v381, %v449
  %v453 = vxor.u32 %v452, 2147483648
  %v454 = vmul.f32 %v453, 1.442695
  %v455 = vpow.pop %v454
  %v456 = vadd.f32 %v455, 1.0
  %v457 = vrcp.pop %v456
  %v458 = vmul.f32 1.0, %v457
  %v459 = vtanh.pop %v452
  %460 = vrot.lane.b32.xlu0 %v458, 96
  %v461 = vpop.permute.xlu0 %460
  %462 = vrot.lane.b32.xlu0 %v459, 64
  %v463 = vpop.permute.xlu0 %462
  %464 = vrot.lane.b32.xlu0 %v458, 32
  %v465 = vpop.permute.xlu0 %464
  %v466 = vmul.f32 %v461, 0.0
  %v467 = vmul.f32 %v458, %v463
  %v468 = vadd.f32 %v466, %v467
  %v469 = vtanh.pop %v468
  %v470 = vmul.f32 %v465, %v469
  %471 = vst [vmem:[#allocation3] sm:$0x3] %v470
  %s472 = scalar_lea.vmem [#allocation2], 2
  %v473 = vld [vmem:[%s472] sm:$0x3]
  %474 = vmatprep.subr.mxu0 0.0
  %475 = vmatpush1.msra.mxu0 %v380
  %476 = vmatprep.subr.mxu0 0.0
  %477 = vmatpush1.msra.mxu0 %v379
  %478 = vmatprep.subr.mxu0 0.0
  %479 = vmatpush1.msra.mxu0 %v378
  %480 = vmatprep.subr.mxu0 0.0
  %481 = vmatpush1.msra.mxu0 %v377
  %482 = vmatprep.subr.mxu0 0.0
  %483 = vmatpush1.msra.mxu0 %v376
  %484 = vmatprep.subr.mxu0 0.0
  %485 = vmatpush1.msra.mxu0 %v375
  %486 = vmatprep.subr.mxu0 0.0
  %487 = vmatpush1.msra.mxu0 %v374
  %488 = vmatprep.subr.mxu0 0.0
  %489 = vmatpush1.msra.mxu0 %v373
  %490 = vmatprep.subr.mxu0 0.0
  %491 = vmatpush1.msra.mxu0 %v372
  %492 = vmatprep.subr.mxu0 0.0
  %493 = vmatpush1.msra.mxu0 %v371
  %494 = vmatprep.subr.mxu0 0.0
  %495 = vmatpush1.msra.mxu0 %v370
  %496 = vmatprep.subr.mxu0 0.0
  %497 = vmatpush1.msra.mxu0 %v369
  %498 = vmatprep.subr.mxu0 0.0
  %499 = vmatpush1.msra.mxu0 %v368
  %500 = vmatprep.subr.mxu0 0.0
  %501 = vmatpush1.msra.mxu0 %v367
  %502 = vmatprep.subr.mxu0 0.0
  %503 = vmatpush1.msra.mxu0 %v366
  %504 = vmatprep.subr.mxu0 0.0
  %505 = vmatpush1.msra.mxu0 %v365
  %506 = vmatprep.subr.mxu0 0.0
  %507 = vmatpush2.msra.mxu0 0.0
  %508 = vmatprep.subr.mxu0 0.0
  %509 = vmatpush2.msra.mxu0 0.0
  %510 = vmatprep.subr.mxu0 0.0
  %511 = vmatpush2.msra.mxu0 0.0
  %512 = vmatprep.subr.mxu0 0.0
  %513 = vmatpush2.msra.mxu0 0.0
  %514 = vmatprep.subr.mxu0 0.0
  %515 = vmatpush2.msra.mxu0 0.0
  %516 = vmatprep.subr.mxu0 0.0
  %517 = vmatpush2.msra.mxu0 0.0
  %518 = vmatprep.subr.mxu0 0.0
  %519 = vmatpush2.msra.mxu0 0.0
  %520 = vmatprep.subr.mxu0 0.0
  %521 = vmatpush2.msra.mxu0 0.0
  %522 = vmatprep.subr.mxu0 0.0
  %523 = vmatpush2.msra.mxu0 0.0
  %524 = vmatprep.subr.mxu0 0.0
  %525 = vmatpush2.msra.mxu0 0.0
  %526 = vmatprep.subr.mxu0 0.0
  %527 = vmatpush2.msra.mxu0 0.0
  %528 = vmatprep.subr.mxu0 0.0
  %529 = vmatpush2.msra.mxu0 0.0
  %530 = vmatprep.subr.mxu0 0.0
  %531 = vmatpush2.msra.mxu0 0.0
  %532 = vmatprep.subr.mxu0 0.0
  %533 = vmatpush2.msra.mxu0 0.0
  %534 = vmatprep.subr.mxu0 0.0
  %535 = vmatpush2.msra.mxu0 0.0
  %536 = vmatprep.subr.mxu0 0.0
  %537 = vmatpush2.msra.mxu0 0.0
  %538 = vmatprep.mubr.f32.mxu0 0.0
  %539 = vmatmul.mubr.f32.gmra.mxu0 %v470
  %v540 = vpop.f32.mrf.mxu0
  %v541 = vadd.f32 0.0, %v540
  %v542 = vpop.f32.mrf.mxu0
  %543 = vdwg.mxu0
  %v544 = vadd.f32 %v473, %v541
  %v545 = vxor.u32 %v544, 2147483648
  %v546 = vmul.f32 %v545, 1.442695
  %v547 = vpow.pop %v546
  %v548 = vadd.f32 %v547, 1.0
  %v549 = vrcp.pop %v548
  %v550 = vmul.f32 1.0, %v549
  %v551 = vtanh.pop %v544
  %552 = vrot.lane.b32.xlu0 %v550, 96
  %v553 = vpop.permute.xlu0 %552
  %554 = vrot.lane.b32.xlu0 %v551, 64
  %v555 = vpop.permute.xlu0 %554
  %556 = vrot.lane.b32.xlu0 %v550, 32
  %v557 = vpop.permute.xlu0 %556
  %v558 = vmul.f32 %v553, %v468
  %v559 = vmul.f32 %v550, %v555
  %v560 = vadd.f32 %v558, %v559
  %v561 = vtanh.pop %v560
  %v562 = vmul.f32 %v557, %v561
  %s563 = scalar_lea.vmem [#allocation3], 2
  %564 = vst [vmem:[%s563] sm:$0x3] %v562
  %s565 = scalar_lea.vmem [#allocation2], 4
  %v566 = vld [vmem:[%s565] sm:$0x3]
  %567 = vmatprep.subr.mxu0 0.0
  %568 = vmatpush1.msra.mxu0 %v380
  %569 = vmatprep.subr.mxu0 0.0
  %570 = vmatpush1.msra.mxu0 %v379
  %571 = vmatprep.subr.mxu0 0.0
  %572 = vmatpush1.msra.mxu0 %v378
  %573 = vmatprep.subr.mxu0 0.0
  %574 = vmatpush1.msra.mxu0 %v377
  %575 = vmatprep.subr.mxu0 0.0
  %576 = vmatpush1.msra.mxu0 %v376
  %577 = vmatprep.subr.mxu0 0.0
  %578 = vmatpush1.msra.mxu0 %v375
  %579 = vmatprep.subr.mxu0 0.0
  %580 = vmatpush1.msra.mxu0 %v374
  %581 = vmatprep.subr.mxu0 0.0
  %582 = vmatpush1.msra.mxu0 %v373
  %583 = vmatprep.subr.mxu0 0.0
  %584 = vmatpush1.msra.mxu0 %v372
  %585 = vmatprep.subr.mxu0 0.0
  %586 = vmatpush1.msra.mxu0 %v371
  %587 = vmatprep.subr.mxu0 0.0
  %588 = vmatpush1.msra.mxu0 %v370
  %589 = vmatprep.subr.mxu0 0.0
  %590 = vmatpush1.msra.mxu0 %v369
  %591 = vmatprep.subr.mxu0 0.0
  %592 = vmatpush1.msra.mxu0 %v368
  %593 = vmatprep.subr.mxu0 0.0
  %594 = vmatpush1.msra.mxu0 %v367
  %595 = vmatprep.subr.mxu0 0.0
  %596 = vmatpush1.msra.mxu0 %v366
  %597 = vmatprep.subr.mxu0 0.0
  %598 = vmatpush1.msra.mxu0 %v365
  %599 = vmatprep.subr.mxu0 0.0
  %600 = vmatpush2.msra.mxu0 0.0
  %601 = vmatprep.subr.mxu0 0.0
  %602 = vmatpush2.msra.mxu0 0.0
  %603 = vmatprep.subr.mxu0 0.0
  %604 = vmatpush2.msra.mxu0 0.0
  %605 = vmatprep.subr.mxu0 0.0
  %606 = vmatpush2.msra.mxu0 0.0
  %607 = vmatprep.subr.mxu0 0.0
  %608 = vmatpush2.msra.mxu0 0.0
  %609 = vmatprep.subr.mxu0 0.0
  %610 = vmatpush2.msra.mxu0 0.0
  %611 = vmatprep.subr.mxu0 0.0
  %612 = vmatpush2.msra.mxu0 0.0
  %613 = vmatprep.subr.mxu0 0.0
  %614 = vmatpush2.msra.mxu0 0.0
  %615 = vmatprep.subr.mxu0 0.0
  %616 = vmatpush2.msra.mxu0 0.0
  %617 = vmatprep.subr.mxu0 0.0
  %618 = vmatpush2.msra.mxu0 0.0
  %619 = vmatprep.subr.mxu0 0.0
  %620 = vmatpush2.msra.mxu0 0.0
  %621 = vmatprep.subr.mxu0 0.0
  %622 = vmatpush2.msra.mxu0 0.0
  %623 = vmatprep.subr.mxu0 0.0
  %624 = vmatpush2.msra.mxu0 0.0
  %625 = vmatprep.subr.mxu0 0.0
  %626 = vmatpush2.msra.mxu0 0.0
  %627 = vmatprep.subr.mxu0 0.0
  %628 = vmatpush2.msra.mxu0 0.0
  %629 = vmatprep.subr.mxu0 0.0
  %630 = vmatpush2.msra.mxu0 0.0
  %631 = vmatprep.mubr.f32.mxu0 0.0
  %632 = vmatmul.mubr.f32.gmra.mxu0 %v562
  %v633 = vpop.f32.mrf.mxu0
  %v634 = vadd.f32 0.0, %v633
  %v635 = vpop.f32.mrf.mxu0
  %636 = vdwg.mxu0
  %v637 = vadd.f32 %v566, %v634
  %v638 = vxor.u32 %v637, 2147483648
  %v639 = vmul.f32 %v638, 1.442695
  %v640 = vpow.pop %v639
  %v641 = vadd.f32 %v640, 1.0
  %v642 = vrcp.pop %v641
  %v643 = vmul.f32 1.0, %v642
  %v644 = vtanh.pop %v637
  %645 = vrot.lane.b32.xlu0 %v643, 96
  %v646 = vpop.permute.xlu0 %645
  %647 = vrot.lane.b32.xlu0 %v644, 64
  %v648 = vpop.permute.xlu0 %647
  %649 = vrot.lane.b32.xlu0 %v643, 32
  %v650 = vpop.permute.xlu0 %649
  %v651 = vmul.f32 %v646, %v560
  %v652 = vmul.f32 %v643, %v648
  %v653 = vadd.f32 %v651, %v652
  %v654 = vtanh.pop %v653
  %v655 = vmul.f32 %v650, %v654
  %s656 = scalar_lea.vmem [#allocation3], 4
  %657 = vst [vmem:[%s656] sm:$0x3] %v655
  %s658 = scalar_lea.vmem [#allocation2], 6
  %v659 = vld [vmem:[%s658] sm:$0x3]
  %660 = vmatprep.subr.mxu0 0.0
  %661 = vmatpush1.msra.mxu0 %v380
  %662 = vmatprep.subr.mxu0 0.0
  %663 = vmatpush1.msra.mxu0 %v379
  %664 = vmatprep.subr.mxu0 0.0
  %665 = vmatpush1.msra.mxu0 %v378
  %666 = vmatprep.subr.mxu0 0.0
  %667 = vmatpush1.msra.mxu0 %v377
  %668 = vmatprep.subr.mxu0 0.0
  %669 = vmatpush1.msra.mxu0 %v376
  %670 = vmatprep.subr.mxu0 0.0
  %671 = vmatpush1.msra.mxu0 %v375
  %672 = vmatprep.subr.mxu0 0.0
  %673 = vmatpush1.msra.mxu0 %v374
  %674 = vmatprep.subr.mxu0 0.0
  %675 = vmatpush1.msra.mxu0 %v373
  %676 = vmatprep.subr.mxu0 0.0
  %677 = vmatpush1.msra.mxu0 %v372
  %678 = vmatprep.subr.mxu0 0.0
  %679 = vmatpush1.msra.mxu0 %v371
  %680 = vmatprep.subr.mxu0 0.0
  %681 = vmatpush1.msra.mxu0 %v370
  %682 = vmatprep.subr.mxu0 0.0
  %683 = vmatpush1.msra.mxu0 %v369
  %684 = vmatprep.subr.mxu0 0.0
  %685 = vmatpush1.msra.mxu0 %v368
  %686 = vmatprep.subr.mxu0 0.0
  %687 = vmatpush1.msra.mxu0 %v367
  %688 = vmatprep.subr.mxu0 0.0
  %689 = vmatpush1.msra.mxu0 %v366
  %690 = vmatprep.subr.mxu0 0.0
  %691 = vmatpush1.msra.mxu0 %v365
  %692 = vmatprep.subr.mxu0 0.0
  %693 = vmatpush2.msra.mxu0 0.0
  %694 = vmatprep.subr.mxu0 0.0
  %695 = vmatpush2.msra.mxu0 0.0
  %696 = vmatprep.subr.mxu0 0.0
  %697 = vmatpush2.msra.mxu0 0.0
  %698 = vmatprep.subr.mxu0 0.0
  %699 = vmatpush2.msra.mxu0 0.0
  %700 = vmatprep.subr.mxu0 0.0
  %701 = vmatpush2.msra.mxu0 0.0
  %702 = vmatprep.subr.mxu0 0.0
  %703 = vmatpush2.msra.mxu0 0.0
  %704 = vmatprep.subr.mxu0 0.0
  %705 = vmatpush2.msra.mxu0 0.0
  %706 = vmatprep.subr.mxu0 0.0
  %707 = vmatpush2.msra.mxu0 0.0
  %708 = vmatprep.subr.mxu0 0.0
  %709 = vmatpush2.msra.mxu0 0.0
  %710 = vmatprep.subr.mxu0 0.0
  %711 = vmatpush2.msra.mxu0 0.0
  %712 = vmatprep.subr.mxu0 0.0
  %713 = vmatpush2.msra.mxu0 0.0
  %714 = vmatprep.subr.mxu0 0.0
  %715 = vmatpush2.msra.mxu0 0.0
  %716 = vmatprep.subr.mxu0 0.0
  %717 = vmatpush2.msra.mxu0 0.0
  %718 = vmatprep.subr.mxu0 0.0
  %719 = vmatpush2.msra.mxu0 0.0
  %720 = vmatprep.subr.mxu0 0.0
  %721 = vmatpush2.msra.mxu0 0.0
  %722 = vmatprep.subr.mxu0 0.0
  %723 = vmatpush2.msra.mxu0 0.0
  %724 = vmatprep.mubr.f32.mxu0 0.0
  %725 = vmatmul.mubr.f32.gmra.mxu0 %v655
  %v726 = vpop.f32.mrf.mxu0
  %v727 = vadd.f32 0.0, %v726
  %v728 = vpop.f32.mrf.mxu0
  %729 = vdwg.mxu0
  %v730 = vadd.f32 %v659, %v727
  %v731 = vxor.u32 %v730, 2147483648
  %v732 = vmul.f32 %v731, 1.442695
  %v733 = vpow.pop %v732
  %v734 = vadd.f32 %v733, 1.0
  %v735 = vrcp.pop %v734
  %v736 = vmul.f32 1.0, %v735
  %v737 = vtanh.pop %v730
  %738 = vrot.lane.b32.xlu0 %v736, 96
  %v739 = vpop.permute.xlu0 %738
  %740 = vrot.lane.b32.xlu0 %v737, 64
  %v741 = vpop.permute.xlu0 %740
  %742 = vrot.lane.b32.xlu0 %v736, 32
  %v743 = vpop.permute.xlu0 %742
  %v744 = vmul.f32 %v739, %v653
  %v745 = vmul.f32 %v736, %v741
  %v746 = vadd.f32 %v744, %v745
  %v747 = vtanh.pop %v746
  %v748 = vmul.f32 %v743, %v747
  %s749 = scalar_lea.vmem [#allocation3], 6
  %750 = vst [vmem:[%s749] sm:$0x3] %v748
  %s751 = scalar_lea.vmem [#allocation2], 8
  %v752 = vld [vmem:[%s751] sm:$0x3]
  %753 = vmatprep.subr.mxu0 0.0
  %754 = vmatpush1.msra.mxu0 %v380
  %755 = vmatprep.subr.mxu0 0.0
  %756 = vmatpush1.msra.mxu0 %v379
  %757 = vmatprep.subr.mxu0 0.0
  %758 = vmatpush1.msra.mxu0 %v378
  %759 = vmatprep.subr.mxu0 0.0
  %760 = vmatpush1.msra.mxu0 %v377
  %761 = vmatprep.subr.mxu0 0.0
  %762 = vmatpush1.msra.mxu0 %v376
  %763 = vmatprep.subr.mxu0 0.0
  %764 = vmatpush1.msra.mxu0 %v375
  %765 = vmatprep.subr.mxu0 0.0
  %766 = vmatpush1.msra.mxu0 %v374
  %767 = vmatprep.subr.mxu0 0.0
  %768 = vmatpush1.msra.mxu0 %v373
  %769 = vmatprep.subr.mxu0 0.0
  %770 = vmatpush1.msra.mxu0 %v372
  %771 = vmatprep.subr.mxu0 0.0
  %772 = vmatpush1.msra.mxu0 %v371
  %773 = vmatprep.subr.mxu0 0.0
  %774 = vmatpush1.msra.mxu0 %v370
  %775 = vmatprep.subr.mxu0 0.0
  %776 = vmatpush1.msra.mxu0 %v369
  %777 = vmatprep.subr.mxu0 0.0
  %778 = vmatpush1.msra.mxu0 %v368
  %779 = vmatprep.subr.mxu0 0.0
  %780 = vmatpush1.msra.mxu0 %v367
  %781 = vmatprep.subr.mxu0 0.0
  %782 = vmatpush1.msra.mxu0 %v366
  %783 = vmatprep.subr.mxu0 0.0
  %784 = vmatpush1.msra.mxu0 %v365
  %785 = vmatprep.subr.mxu0 0.0
  %786 = vmatpush2.msra.mxu0 0.0
  %787 = vmatprep.subr.mxu0 0.0
  %788 = vmatpush2.msra.mxu0 0.0
  %789 = vmatprep.subr.mxu0 0.0
  %790 = vmatpush2.msra.mxu0 0.0
  %791 = vmatprep.subr.mxu0 0.0
  %792 = vmatpush2.msra.mxu0 0.0
  %793 = vmatprep.subr.mxu0 0.0
  %794 = vmatpush2.msra.mxu0 0.0
  %795 = vmatprep.subr.mxu0 0.0
  %796 = vmatpush2.msra.mxu0 0.0
  %797 = vmatprep.subr.mxu0 0.0
  %798 = vmatpush2.msra.mxu0 0.0
  %799 = vmatprep.subr.mxu0 0.0
  %800 = vmatpush2.msra.mxu0 0.0
  %801 = vmatprep.subr.mxu0 0.0
  %802 = vmatpush2.msra.mxu0 0.0
  %803 = vmatprep.subr.mxu0 0.0
  %804 = vmatpush2.msra.mxu0 0.0
  %805 = vmatprep.subr.mxu0 0.0
  %806 = vmatpush2.msra.mxu0 0.0
  %807 = vmatprep.subr.mxu0 0.0
  %808 = vmatpush2.msra.mxu0 0.0
  %809 = vmatprep.subr.mxu0 0.0
  %810 = vmatpush2.msra.mxu0 0.0
  %811 = vmatprep.subr.mxu0 0.0
  %812 = vmatpush2.msra.mxu0 0.0
  %813 = vmatprep.subr.mxu0 0.0
  %814 = vmatpush2.msra.mxu0 0.0
  %815 = vmatprep.subr.mxu0 0.0
  %816 = vmatpush2.msra.mxu0 0.0
  %817 = vmatprep.mubr.f32.mxu0 0.0
  %818 = vmatmul.mubr.f32.gmra.mxu0 %v748
  %v819 = vpop.f32.mrf.mxu0
  %v820 = vadd.f32 0.0, %v819
  %v821 = vpop.f32.mrf.mxu0
  %822 = vdwg.mxu0
  %v823 = vadd.f32 %v752, %v820
  %v824 = vxor.u32 %v823, 2147483648
  %v825 = vmul.f32 %v824, 1.442695
  %v826 = vpow.pop %v825
  %v827 = vadd.f32 %v826, 1.0
  %v828 = vrcp.pop %v827
  %v829 = vmul.f32 1.0, %v828
  %v830 = vtanh.pop %v823
  %831 = vrot.lane.b32.xlu0 %v829, 96
  %v832 = vpop.permute.xlu0 %831
  %833 = vrot.lane.b32.xlu0 %v830, 64
  %v834 = vpop.permute.xlu0 %833
  %835 = vrot.lane.b32.xlu0 %v829, 32
  %v836 = vpop.permute.xlu0 %835
  %v837 = vmul.f32 %v832, %v746
  %v838 = vmul.f32 %v829, %v834
  %v839 = vadd.f32 %v837, %v838
  %v840 = vtanh.pop %v839
  %v841 = vmul.f32 %v836, %v840
  %s842 = scalar_lea.vmem [#allocation3], 8
  %843 = vst [vmem:[%s842] sm:$0x3] %v841
  %s844 = scalar_lea.vmem [#allocation2], 10
  %v845 = vld [vmem:[%s844] sm:$0x3]
  %846 = vmatprep.subr.mxu0 0.0
  %847 = vmatpush1.msra.mxu0 %v380
  %848 = vmatprep.subr.mxu0 0.0
  %849 = vmatpush1.msra.mxu0 %v379
  %850 = vmatprep.subr.mxu0 0.0
  %851 = vmatpush1.msra.mxu0 %v378
  %852 = vmatprep.subr.mxu0 0.0
  %853 = vmatpush1.msra.mxu0 %v377
  %854 = vmatprep.subr.mxu0 0.0
  %855 = vmatpush1.msra.mxu0 %v376
  %856 = vmatprep.subr.mxu0 0.0
  %857 = vmatpush1.msra.mxu0 %v375
  %858 = vmatprep.subr.mxu0 0.0
  %859 = vmatpush1.msra.mxu0 %v374
  %860 = vmatprep.subr.mxu0 0.0
  %861 = vmatpush1.msra.mxu0 %v373
  %862 = vmatprep.subr.mxu0 0.0
  %863 = vmatpush1.msra.mxu0 %v372
  %864 = vmatprep.subr.mxu0 0.0
  %865 = vmatpush1.msra.mxu0 %v371
  %866 = vmatprep.subr.mxu0 0.0
  %867 = vmatpush1.msra.mxu0 %v370
  %868 = vmatprep.subr.mxu0 0.0
  %869 = vmatpush1.msra.mxu0 %v369
  %870 = vmatprep.subr.mxu0 0.0
  %871 = vmatpush1.msra.mxu0 %v368
  %872 = vmatprep.subr.mxu0 0.0
  %873 = vmatpush1.msra.mxu0 %v367
  %874 = vmatprep.subr.mxu0 0.0
  %875 = vmatpush1.msra.mxu0 %v366
  %876 = vmatprep.subr.mxu0 0.0
  %877 = vmatpush1.msra.mxu0 %v365
  %878 = vmatprep.subr.mxu0 0.0
  %879 = vmatpush2.msra.mxu0 0.0
  %880 = vmatprep.subr.mxu0 0.0
  %881 = vmatpush2.msra.mxu0 0.0
  %882 = vmatprep.subr.mxu0 0.0
  %883 = vmatpush2.msra.mxu0 0.0
  %884 = vmatprep.subr.mxu0 0.0
  %885 = vmatpush2.msra.mxu0 0.0
  %886 = vmatprep.subr.mxu0 0.0
  %887 = vmatpush2.msra.mxu0 0.0
  %888 = vmatprep.subr.mxu0 0.0
  %889 = vmatpush2.msra.mxu0 0.0
  %890 = vmatprep.subr.mxu0 0.0
  %891 = vmatpush2.msra.mxu0 0.0
  %892 = vmatprep.subr.mxu0 0.0
  %893 = vmatpush2.msra.mxu0 0.0
  %894 = vmatprep.subr.mxu0 0.0
  %895 = vmatpush2.msra.mxu0 0.0
  %896 = vmatprep.subr.mxu0 0.0
  %897 = vmatpush2.msra.mxu0 0.0
  %898 = vmatprep.subr.mxu0 0.0
  %899 = vmatpush2.msra.mxu0 0.0
  %900 = vmatprep.subr.mxu0 0.0
  %901 = vmatpush2.msra.mxu0 0.0
  %902 = vmatprep.subr.mxu0 0.0
  %903 = vmatpush2.msra.mxu0 0.0
  %904 = vmatprep.subr.mxu0 0.0
  %905 = vmatpush2.msra.mxu0 0.0
  %906 = vmatprep.subr.mxu0 0.0
  %907 = vmatpush2.msra.mxu0 0.0
  %908 = vmatprep.subr.mxu0 0.0
  %909 = vmatpush2.msra.mxu0 0.0
  %910 = vmatprep.mubr.f32.mxu0 0.0
  %911 = vmatmul.mubr.f32.gmra.mxu0 %v841
  %v912 = vpop.f32.mrf.mxu0
  %v913 = vadd.f32 0.0, %v912
  %v914 = vpop.f32.mrf.mxu0
  %915 = vdwg.mxu0
  %v916 = vadd.f32 %v845, %v913
  %v917 = vxor.u32 %v916, 2147483648
  %v918 = vmul.f32 %v917, 1.442695
  %v919 = vpow.pop %v918
  %v920 = vadd.f32 %v919, 1.0
  %v921 = vrcp.pop %v920
  %v922 = vmul.f32 1.0, %v921
  %v923 = vtanh.pop %v916
  %924 = vrot.lane.b32.xlu0 %v922, 96
  %v925 = vpop.permute.xlu0 %924
  %926 = vrot.lane.b32.xlu0 %v923, 64
  %v927 = vpop.permute.xlu0 %926
  %928 = vrot.lane.b32.xlu0 %v922, 32
  %v929 = vpop.permute.xlu0 %928
  %v930 = vmul.f32 %v925, %v839
  %v931 = vmul.f32 %v922, %v927
  %v932 = vadd.f32 %v930, %v931
  %v933 = vtanh.pop %v932
  %v934 = vmul.f32 %v929, %v933
  %s935 = scalar_lea.vmem [#allocation3], 10
  %936 = vst [vmem:[%s935] sm:$0x3] %v934
  %s937 = scalar_lea.vmem [#allocation2], 12
  %v938 = vld [vmem:[%s937] sm:$0x3]
  %939 = vmatprep.subr.mxu0 0.0
  %940 = vmatpush1.msra.mxu0 %v380
  %941 = vmatprep.subr.mxu0 0.0
  %942 = vmatpush1.msra.mxu0 %v379
  %943 = vmatprep.subr.mxu0 0.0
  %944 = vmatpush1.msra.mxu0 %v378
  %945 = vmatprep.subr.mxu0 0.0
  %946 = vmatpush1.msra.mxu0 %v377
  %947 = vmatprep.subr.mxu0 0.0
  %948 = vmatpush1.msra.mxu0 %v376
  %949 = vmatprep.subr.mxu0 0.0
  %950 = vmatpush1.msra.mxu0 %v375
  %951 = vmatprep.subr.mxu0 0.0
  %952 = vmatpush1.msra.mxu0 %v374
  %953 = vmatprep.subr.mxu0 0.0
  %954 = vmatpush1.msra.mxu0 %v373
  %955 = vmatprep.subr.mxu0 0.0
  %956 = vmatpush1.msra.mxu0 %v372
  %957 = vmatprep.subr.mxu0 0.0
  %958 = vmatpush1.msra.mxu0 %v371
  %959 = vmatprep.subr.mxu0 0.0
  %960 = vmatpush1.msra.mxu0 %v370
  %961 = vmatprep.subr.mxu0 0.0
  %962 = vmatpush1.msra.mxu0 %v369
  %963 = vmatprep.subr.mxu0 0.0
  %964 = vmatpush1.msra.mxu0 %v368
  %965 = vmatprep.subr.mxu0 0.0
  %966 = vmatpush1.msra.mxu0 %v367
  %967 = vmatprep.subr.mxu0 0.0
  %968 = vmatpush1.msra.mxu0 %v366
  %969 = vmatprep.subr.mxu0 0.0
  %970 = vmatpush1.msra.mxu0 %v365
  %971 = vmatprep.subr.mxu0 0.0
  %972 = vmatpush2.msra.mxu0 0.0
  %973 = vmatprep.subr.mxu0 0.0
  %974 = vmatpush2.msra.mxu0 0.0
  %975 = vmatprep.subr.mxu0 0.0
  %976 = vmatpush2.msra.mxu0 0.0
  %977 = vmatprep.subr.mxu0 0.0
  %978 = vmatpush2.msra.mxu0 0.0
  %979 = vmatprep.subr.mxu0 0.0
  %980 = vmatpush2.msra.mxu0 0.0
  %981 = vmatprep.subr.mxu0 0.0
  %982 = vmatpush2.msra.mxu0 0.0
  %983 = vmatprep.subr.mxu0 0.0
  %984 = vmatpush2.msra.mxu0 0.0
  %985 = vmatprep.subr.mxu0 0.0
  %986 = vmatpush2.msra.mxu0 0.0
  %987 = vmatprep.subr.mxu0 0.0
  %988 = vmatpush2.msra.mxu0 0.0
  %989 = vmatprep.subr.mxu0 0.0
  %990 = vmatpush2.msra.mxu0 0.0
  %991 = vmatprep.subr.mxu0 0.0
  %992 = vmatpush2.msra.mxu0 0.0
  %993 = vmatprep.subr.mxu0 0.0
  %994 = vmatpush2.msra.mxu0 0.0
  %995 = vmatprep.subr.mxu0 0.0
  %996 = vmatpush2.msra.mxu0 0.0
  %997 = vmatprep.subr.mxu0 0.0
  %998 = vmatpush2.msra.mxu0 0.0
  %999 = vmatprep.subr.mxu0 0.0
  %1000 = vmatpush2.msra.mxu0 0.0
  %1001 = vmatprep.subr.mxu0 0.0
  %1002 = vmatpush2.msra.mxu0 0.0
  %1003 = vmatprep.mubr.f32.mxu0 0.0
  %1004 = vmatmul.mubr.f32.gmra.mxu0 %v934
  %v1005 = vpop.f32.mrf.mxu0
  %v1006 = vadd.f32 0.0, %v1005
  %v1007 = vpop.f32.mrf.mxu0
  %1008 = vdwg.mxu0
  %v1009 = vadd.f32 %v938, %v1006
  %v1010 = vxor.u32 %v1009, 2147483648
  %v1011 = vmul.f32 %v1010, 1.442695
  %v1012 = vpow.pop %v1011
  %v1013 = vadd.f32 %v1012, 1.0
  %v1014 = vrcp.pop %v1013
  %v1015 = vmul.f32 1.0, %v1014
  %v1016 = vtanh.pop %v1009
  %1017 = vrot.lane.b32.xlu0 %v1015, 96
  %v1018 = vpop.permute.xlu0 %1017
  %1019 = vrot.lane.b32.xlu0 %v1016, 64
  %v1020 = vpop.permute.xlu0 %1019
  %1021 = vrot.lane.b32.xlu0 %v1015, 32
  %v1022 = vpop.permute.xlu0 %1021
  %v1023 = vmul.f32 %v1018, %v932
  %v1024 = vmul.f32 %v1015, %v1020
  %v1025 = vadd.f32 %v1023, %v1024
  %v1026 = vtanh.pop %v1025
  %v1027 = vmul.f32 %v1022, %v1026
  %s1028 = scalar_lea.vmem [#allocation3], 12
  %1029 = vst [vmem:[%s1028] sm:$0x3] %v1027
  %s1030 = scalar_lea.vmem [#allocation2], 14
  %v1031 = vld [vmem:[%s1030] sm:$0x3]
  %1032 = vmatprep.subr.mxu0 0.0
  %1033 = vmatpush1.msra.mxu0 %v380
  %1034 = vmatprep.subr.mxu0 0.0
  %1035 = vmatpush1.msra.mxu0 %v379
  %1036 = vmatprep.subr.mxu0 0.0
  %1037 = vmatpush1.msra.mxu0 %v378
  %1038 = vmatprep.subr.mxu0 0.0
  %1039 = vmatpush1.msra.mxu0 %v377
  %1040 = vmatprep.subr.mxu0 0.0
  %1041 = vmatpush1.msra.mxu0 %v376
  %1042 = vmatprep.subr.mxu0 0.0
  %1043 = vmatpush1.msra.mxu0 %v375
  %1044 = vmatprep.subr.mxu0 0.0
  %1045 = vmatpush1.msra.mxu0 %v374
  %1046 = vmatprep.subr.mxu0 0.0
  %1047 = vmatpush1.msra.mxu0 %v373
  %1048 = vmatprep.subr.mxu0 0.0
  %1049 = vmatpush1.msra.mxu0 %v372
  %1050 = vmatprep.subr.mxu0 0.0
  %1051 = vmatpush1.msra.mxu0 %v371
  %1052 = vmatprep.subr.mxu0 0.0
  %1053 = vmatpush1.msra.mxu0 %v370
  %1054 = vmatprep.subr.mxu0 0.0
  %1055 = vmatpush1.msra.mxu0 %v369
  %1056 = vmatprep.subr.mxu0 0.0
  %1057 = vmatpush1.msra.mxu0 %v368
  %1058 = vmatprep.subr.mxu0 0.0
  %1059 = vmatpush1.msra.mxu0 %v367
  %1060 = vmatprep.subr.mxu0 0.0
  %1061 = vmatpush1.msra.mxu0 %v366
  %1062 = vmatprep.subr.mxu0 0.0
  %1063 = vmatpush1.msra.mxu0 %v365
  %1064 = vmatprep.subr.mxu0 0.0
  %1065 = vmatpush2.msra.mxu0 0.0
  %1066 = vmatprep.subr.mxu0 0.0
  %1067 = vmatpush2.msra.mxu0 0.0
  %1068 = vmatprep.subr.mxu0 0.0
  %1069 = vmatpush2.msra.mxu0 0.0
  %1070 = vmatprep.subr.mxu0 0.0
  %1071 = vmatpush2.msra.mxu0 0.0
  %1072 = vmatprep.subr.mxu0 0.0
  %1073 = vmatpush2.msra.mxu0 0.0
  %1074 = vmatprep.subr.mxu0 0.0
  %1075 = vmatpush2.msra.mxu0 0.0
  %1076 = vmatprep.subr.mxu0 0.0
  %1077 = vmatpush2.msra.mxu0 0.0
  %1078 = vmatprep.subr.mxu0 0.0
  %1079 = vmatpush2.msra.mxu0 0.0
  %1080 = vmatprep.subr.mxu0 0.0
  %1081 = vmatpush2.msra.mxu0 0.0
  %1082 = vmatprep.subr.mxu0 0.0
  %1083 = vmatpush2.msra.mxu0 0.0
  %1084 = vmatprep.subr.mxu0 0.0
  %1085 = vmatpush2.msra.mxu0 0.0
  %1086 = vmatprep.subr.mxu0 0.0
  %1087 = vmatpush2.msra.mxu0 0.0
  %1088 = vmatprep.subr.mxu0 0.0
  %1089 = vmatpush2.msra.mxu0 0.0
  %1090 = vmatprep.subr.mxu0 0.0
  %1091 = vmatpush2.msra.mxu0 0.0
  %1092 = vmatprep.subr.mxu0 0.0
  %1093 = vmatpush2.msra.mxu0 0.0
  %1094 = vmatprep.subr.mxu0 0.0
  %1095 = vmatpush2.msra.mxu0 0.0
  %1096 = vmatprep.mubr.f32.mxu0 0.0
  %1097 = vmatmul.mubr.f32.gmra.mxu0 %v1027
  %v1098 = vpop.f32.mrf.mxu0
  %v1099 = vadd.f32 0.0, %v1098
  %v1100 = vpop.f32.mrf.mxu0
  %1101 = vdwg.mxu0
  %v1102 = vadd.f32 %v1031, %v1099
  %v1103 = vxor.u32 %v1102, 2147483648
  %v1104 = vmul.f32 %v1103, 1.442695
  %v1105 = vpow.pop %v1104
  %v1106 = vadd.f32 %v1105, 1.0
  %v1107 = vrcp.pop %v1106
  %v1108 = vmul.f32 1.0, %v1107
  %v1109 = vtanh.pop %v1102
  %1110 = vrot.lane.b32.xlu0 %v1108, 96
  %v1111 = vpop.permute.xlu0 %1110
  %1112 = vrot.lane.b32.xlu0 %v1109, 64
  %v1113 = vpop.permute.xlu0 %1112
  %1114 = vrot.lane.b32.xlu0 %v1108, 32
  %v1115 = vpop.permute.xlu0 %1114
  %v1116 = vmul.f32 %v1111, %v1025
  %v1117 = vmul.f32 %v1108, %v1113
  %v1118 = vadd.f32 %v1116, %v1117
  %v1119 = vtanh.pop %v1118
  %v1120 = vmul.f32 %v1115, %v1119
  %s1121 = scalar_lea.vmem [#allocation3], 14
  %1122 = vst [vmem:[%s1121] sm:$0x3] %v1120
  %s1123 = scalar_lea.vmem [#allocation2], 16
  %v1124 = vld [vmem:[%s1123] sm:$0x3]
  %1125 = vmatprep.subr.mxu0 0.0
  %1126 = vmatpush1.msra.mxu0 %v380
  %1127 = vmatprep.subr.mxu0 0.0
  %1128 = vmatpush1.msra.mxu0 %v379
  %1129 = vmatprep.subr.mxu0 0.0
  %1130 = vmatpush1.msra.mxu0 %v378
  %1131 = vmatprep.subr.mxu0 0.0
  %1132 = vmatpush1.msra.mxu0 %v377
  %1133 = vmatprep.subr.mxu0 0.0
  %1134 = vmatpush1.msra.mxu0 %v376
  %1135 = vmatprep.subr.mxu0 0.0
  %1136 = vmatpush1.msra.mxu0 %v375
  %1137 = vmatprep.subr.mxu0 0.0
  %1138 = vmatpush1.msra.mxu0 %v374
  %1139 = vmatprep.subr.mxu0 0.0
  %1140 = vmatpush1.msra.mxu0 %v373
  %1141 = vmatprep.subr.mxu0 0.0
  %1142 = vmatpush1.msra.mxu0 %v372
  %1143 = vmatprep.subr.mxu0 0.0
  %1144 = vmatpush1.msra.mxu0 %v371
  %1145 = vmatprep.subr.mxu0 0.0
  %1146 = vmatpush1.msra.mxu0 %v370
  %1147 = vmatprep.subr.mxu0 0.0
  %1148 = vmatpush1.msra.mxu0 %v369
  %1149 = vmatprep.subr.mxu0 0.0
  %1150 = vmatpush1.msra.mxu0 %v368
  %1151 = vmatprep.subr.mxu0 0.0
  %1152 = vmatpush1.msra.mxu0 %v367
  %1153 = vmatprep.subr.mxu0 0.0
  %1154 = vmatpush1.msra.mxu0 %v366
  %1155 = vmatprep.subr.mxu0 0.0
  %1156 = vmatpush1.msra.mxu0 %v365
  %1157 = vmatprep.subr.mxu0 0.0
  %1158 = vmatpush2.msra.mxu0 0.0
  %1159 = vmatprep.subr.mxu0 0.0
  %1160 = vmatpush2.msra.mxu0 0.0
  %1161 = vmatprep.subr.mxu0 0.0
  %1162 = vmatpush2.msra.mxu0 0.0
  %1163 = vmatprep.subr.mxu0 0.0
  %1164 = vmatpush2.msra.mxu0 0.0
  %1165 = vmatprep.subr.mxu0 0.0
  %1166 = vmatpush2.msra.mxu0 0.0
  %1167 = vmatprep.subr.mxu0 0.0
  %1168 = vmatpush2.msra.mxu0 0.0
  %1169 = vmatprep.subr.mxu0 0.0
  %1170 = vmatpush2.msra.mxu0 0.0
  %1171 = vmatprep.subr.mxu0 0.0
  %1172 = vmatpush2.msra.mxu0 0.0
  %1173 = vmatprep.subr.mxu0 0.0
  %1174 = vmatpush2.msra.mxu0 0.0
  %1175 = vmatprep.subr.mxu0 0.0
  %1176 = vmatpush2.msra.mxu0 0.0
  %1177 = vmatprep.subr.mxu0 0.0
  %1178 = vmatpush2.msra.mxu0 0.0
  %1179 = vmatprep.subr.mxu0 0.0
  %1180 = vmatpush2.msra.mxu0 0.0
  %1181 = vmatprep.subr.mxu0 0.0
  %1182 = vmatpush2.msra.mxu0 0.0
  %1183 = vmatprep.subr.mxu0 0.0
  %1184 = vmatpush2.msra.mxu0 0.0
  %1185 = vmatprep.subr.mxu0 0.0
  %1186 = vmatpush2.msra.mxu0 0.0
  %1187 = vmatprep.subr.mxu0 0.0
  %1188 = vmatpush2.msra.mxu0 0.0
  %1189 = vmatprep.mubr.f32.mxu0 0.0
  %1190 = vmatmul.mubr.f32.gmra.mxu0 %v1120
  %v1191 = vpop.f32.mrf.mxu0
  %v1192 = vadd.f32 0.0, %v1191
  %v1193 = vpop.f32.mrf.mxu0
  %1194 = vdwg.mxu0
  %v1195 = vadd.f32 %v1124, %v1192
  %v1196 = vxor.u32 %v1195, 2147483648
  %v1197 = vmul.f32 %v1196, 1.442695
  %v1198 = vpow.pop %v1197
  %v1199 = vadd.f32 %v1198, 1.0
  %v1200 = vrcp.pop %v1199
  %v1201 = vmul.f32 1.0, %v1200
  %v1202 = vtanh.pop %v1195
  %1203 = vrot.lane.b32.xlu0 %v1201, 96
  %v1204 = vpop.permute.xlu0 %1203
  %1205 = vrot.lane.b32.xlu0 %v1202, 64
  %v1206 = vpop.permute.xlu0 %1205
  %1207 = vrot.lane.b32.xlu0 %v1201, 32
  %v1208 = vpop.permute.xlu0 %1207
  %v1209 = vmul.f32 %v1204, %v1118
  %v1210 = vmul.f32 %v1201, %v1206
  %v1211 = vadd.f32 %v1209, %v1210
  %v1212 = vtanh.pop %v1211
  %v1213 = vmul.f32 %v1208, %v1212
  %s1214 = scalar_lea.vmem [#allocation3], 16
  %1215 = vst [vmem:[%s1214] sm:$0x3] %v1213
  %s1216 = scalar_lea.vmem [#allocation2], 18
  %v1217 = vld [vmem:[%s1216] sm:$0x3]
  %1218 = vmatprep.subr.mxu0 0.0
  %1219 = vmatpush1.msra.mxu0 %v380
  %1220 = vmatprep.subr.mxu0 0.0
  %1221 = vmatpush1.msra.mxu0 %v379
  %1222 = vmatprep.subr.mxu0 0.0
  %1223 = vmatpush1.msra.mxu0 %v378
  %1224 = vmatprep.subr.mxu0 0.0
  %1225 = vmatpush1.msra.mxu0 %v377
  %1226 = vmatprep.subr.mxu0 0.0
  %1227 = vmatpush1.msra.mxu0 %v376
  %1228 = vmatprep.subr.mxu0 0.0
  %1229 = vmatpush1.msra.mxu0 %v375
  %1230 = vmatprep.subr.mxu0 0.0
  %1231 = vmatpush1.msra.mxu0 %v374
  %1232 = vmatprep.subr.mxu0 0.0
  %1233 = vmatpush1.msra.mxu0 %v373
  %1234 = vmatprep.subr.mxu0 0.0
  %1235 = vmatpush1.msra.mxu0 %v372
  %1236 = vmatprep.subr.mxu0 0.0
  %1237 = vmatpush1.msra.mxu0 %v371
  %1238 = vmatprep.subr.mxu0 0.0
  %1239 = vmatpush1.msra.mxu0 %v370
  %1240 = vmatprep.subr.mxu0 0.0
  %1241 = vmatpush1.msra.mxu0 %v369
  %1242 = vmatprep.subr.mxu0 0.0
  %1243 = vmatpush1.msra.mxu0 %v368
  %1244 = vmatprep.subr.mxu0 0.0
  %1245 = vmatpush1.msra.mxu0 %v367
  %1246 = vmatprep.subr.mxu0 0.0
  %1247 = vmatpush1.msra.mxu0 %v366
  %1248 = vmatprep.subr.mxu0 0.0
  %1249 = vmatpush1.msra.mxu0 %v365
  %1250 = vmatprep.subr.mxu0 0.0
  %1251 = vmatpush2.msra.mxu0 0.0
  %1252 = vmatprep.subr.mxu0 0.0
  %1253 = vmatpush2.msra.mxu0 0.0
  %1254 = vmatprep.subr.mxu0 0.0
  %1255 = vmatpush2.msra.mxu0 0.0
  %1256 = vmatprep.subr.mxu0 0.0
  %1257 = vmatpush2.msra.mxu0 0.0
  %1258 = vmatprep.subr.mxu0 0.0
  %1259 = vmatpush2.msra.mxu0 0.0
  %1260 = vmatprep.subr.mxu0 0.0
  %1261 = vmatpush2.msra.mxu0 0.0
  %1262 = vmatprep.subr.mxu0 0.0
  %1263 = vmatpush2.msra.mxu0 0.0
  %1264 = vmatprep.subr.mxu0 0.0
  %1265 = vmatpush2.msra.mxu0 0.0
  %1266 = vmatprep.subr.mxu0 0.0
  %1267 = vmatpush2.msra.mxu0 0.0
  %1268 = vmatprep.subr.mxu0 0.0
  %1269 = vmatpush2.msra.mxu0 0.0
  %1270 = vmatprep.subr.mxu0 0.0
  %1271 = vmatpush2.msra.mxu0 0.0
  %1272 = vmatprep.subr.mxu0 0.0
  %1273 = vmatpush2.msra.mxu0 0.0
  %1274 = vmatprep.subr.mxu0 0.0
  %1275 = vmatpush2.msra.mxu0 0.0
  %1276 = vmatprep.subr.mxu0 0.0
  %1277 = vmatpush2.msra.mxu0 0.0
  %1278 = vmatprep.subr.mxu0 0.0
  %1279 = vmatpush2.msra.mxu0 0.0
  %1280 = vmatprep.subr.mxu0 0.0
  %1281 = vmatpush2.msra.mxu0 0.0
  %1282 = vmatprep.mubr.f32.mxu0 0.0
  %1283 = vmatmul.mubr.f32.gmra.mxu0 %v1213
  %v1284 = vpop.f32.mrf.mxu0
  %v1285 = vadd.f32 0.0, %v1284
  %v1286 = vpop.f32.mrf.mxu0
  %1287 = vdwg.mxu0
  %v1288 = vadd.f32 %v1217, %v1285
  %v1289 = vxor.u32 %v1288, 2147483648
  %v1290 = vmul.f32 %v1289, 1.442695
  %v1291 = vpow.pop %v1290
  %v1292 = vadd.f32 %v1291, 1.0
  %v1293 = vrcp.pop %v1292
  %v1294 = vmul.f32 1.0, %v1293
  %v1295 = vtanh.pop %v1288
  %1296 = vrot.lane.b32.xlu0 %v1294, 96
  %v1297 = vpop.permute.xlu0 %1296
  %1298 = vrot.lane.b32.xlu0 %v1295, 64
  %v1299 = vpop.permute.xlu0 %1298
  %1300 = vrot.lane.b32.xlu0 %v1294, 32
  %v1301 = vpop.permute.xlu0 %1300
  %v1302 = vmul.f32 %v1297, %v1211
  %v1303 = vmul.f32 %v1294, %v1299
  %v1304 = vadd.f32 %v1302, %v1303
  %v1305 = vtanh.pop %v1304
  %v1306 = vmul.f32 %v1301, %v1305
  %s1307 = scalar_lea.vmem [#allocation3], 18
  %1308 = vst [vmem:[%s1307] sm:$0x3] %v1306
  %s1309 = scalar_lea.vmem [#allocation2], 20
  %v1310 = vld [vmem:[%s1309] sm:$0x3]
  %1311 = vmatprep.subr.mxu0 0.0
  %1312 = vmatpush1.msra.mxu0 %v380
  %1313 = vmatprep.subr.mxu0 0.0
  %1314 = vmatpush1.msra.mxu0 %v379
  %1315 = vmatprep.subr.mxu0 0.0
  %1316 = vmatpush1.msra.mxu0 %v378
  %1317 = vmatprep.subr.mxu0 0.0
  %1318 = vmatpush1.msra.mxu0 %v377
  %1319 = vmatprep.subr.mxu0 0.0
  %1320 = vmatpush1.msra.mxu0 %v376
  %1321 = vmatprep.subr.mxu0 0.0
  %1322 = vmatpush1.msra.mxu0 %v375
  %1323 = vmatprep.subr.mxu0 0.0
  %1324 = vmatpush1.msra.mxu0 %v374
  %1325 = vmatprep.subr.mxu0 0.0
  %1326 = vmatpush1.msra.mxu0 %v373
  %1327 = vmatprep.subr.mxu0 0.0
  %1328 = vmatpush1.msra.mxu0 %v372
  %1329 = vmatprep.subr.mxu0 0.0
  %1330 = vmatpush1.msra.mxu0 %v371
  %1331 = vmatprep.subr.mxu0 0.0
  %1332 = vmatpush1.msra.mxu0 %v370
  %1333 = vmatprep.subr.mxu0 0.0
  %1334 = vmatpush1.msra.mxu0 %v369
  %1335 = vmatprep.subr.mxu0 0.0
  %1336 = vmatpush1.msra.mxu0 %v368
  %1337 = vmatprep.subr.mxu0 0.0
  %1338 = vmatpush1.msra.mxu0 %v367
  %1339 = vmatprep.subr.mxu0 0.0
  %1340 = vmatpush1.msra.mxu0 %v366
  %1341 = vmatprep.subr.mxu0 0.0
  %1342 = vmatpush1.msra.mxu0 %v365
  %1343 = vmatprep.subr.mxu0 0.0
  %1344 = vmatpush2.msra.mxu0 0.0
  %1345 = vmatprep.subr.mxu0 0.0
  %1346 = vmatpush2.msra.mxu0 0.0
  %1347 = vmatprep.subr.mxu0 0.0
  %1348 = vmatpush2.msra.mxu0 0.0
  %1349 = vmatprep.subr.mxu0 0.0
  %1350 = vmatpush2.msra.mxu0 0.0
  %1351 = vmatprep.subr.mxu0 0.0
  %1352 = vmatpush2.msra.mxu0 0.0
  %1353 = vmatprep.subr.mxu0 0.0
  %1354 = vmatpush2.msra.mxu0 0.0
  %1355 = vmatprep.subr.mxu0 0.0
  %1356 = vmatpush2.msra.mxu0 0.0
  %1357 = vmatprep.subr.mxu0 0.0
  %1358 = vmatpush2.msra.mxu0 0.0
  %1359 = vmatprep.subr.mxu0 0.0
  %1360 = vmatpush2.msra.mxu0 0.0
  %1361 = vmatprep.subr.mxu0 0.0
  %1362 = vmatpush2.msra.mxu0 0.0
  %1363 = vmatprep.subr.mxu0 0.0
  %1364 = vmatpush2.msra.mxu0 0.0
  %1365 = vmatprep.subr.mxu0 0.0
  %1366 = vmatpush2.msra.mxu0 0.0
  %1367 = vmatprep.subr.mxu0 0.0
  %1368 = vmatpush2.msra.mxu0 0.0
  %1369 = vmatprep.subr.mxu0 0.0
  %1370 = vmatpush2.msra.mxu0 0.0
  %1371 = vmatprep.subr.mxu0 0.0
  %1372 = vmatpush2.msra.mxu0 0.0
  %1373 = vmatprep.subr.mxu0 0.0
  %1374 = vmatpush2.msra.mxu0 0.0
  %1375 = vmatprep.mubr.f32.mxu0 0.0
  %1376 = vmatmul.mubr.f32.gmra.mxu0 %v1306
  %v1377 = vpop.f32.mrf.mxu0
  %v1378 = vadd.f32 0.0, %v1377
  %v1379 = vpop.f32.mrf.mxu0
  %1380 = vdwg.mxu0
  %v1381 = vadd.f32 %v1310, %v1378
  %v1382 = vxor.u32 %v1381, 2147483648
  %v1383 = vmul.f32 %v1382, 1.442695
  %v1384 = vpow.pop %v1383
  %v1385 = vadd.f32 %v1384, 1.0
  %v1386 = vrcp.pop %v1385
  %v1387 = vmul.f32 1.0, %v1386
  %v1388 = vtanh.pop %v1381
  %1389 = vrot.lane.b32.xlu0 %v1387, 96
  %v1390 = vpop.permute.xlu0 %1389
  %1391 = vrot.lane.b32.xlu0 %v1388, 64
  %v1392 = vpop.permute.xlu0 %1391
  %1393 = vrot.lane.b32.xlu0 %v1387, 32
  %v1394 = vpop.permute.xlu0 %1393
  %v1395 = vmul.f32 %v1390, %v1304
  %v1396 = vmul.f32 %v1387, %v1392
  %v1397 = vadd.f32 %v1395, %v1396
  %v1398 = vtanh.pop %v1397
  %v1399 = vmul.f32 %v1394, %v1398
  %s1400 = scalar_lea.vmem [#allocation3], 20
  %1401 = vst [vmem:[%s1400] sm:$0x3] %v1399
  %s1402 = scalar_lea.vmem [#allocation2], 22
  %v1403 = vld [vmem:[%s1402] sm:$0x3]
  %1404 = vmatprep.subr.mxu0 0.0
  %1405 = vmatpush1.msra.mxu0 %v380
  %1406 = vmatprep.subr.mxu0 0.0
  %1407 = vmatpush1.msra.mxu0 %v379
  %1408 = vmatprep.subr.mxu0 0.0
  %1409 = vmatpush1.msra.mxu0 %v378
  %1410 = vmatprep.subr.mxu0 0.0
  %1411 = vmatpush1.msra.mxu0 %v377
  %1412 = vmatprep.subr.mxu0 0.0
  %1413 = vmatpush1.msra.mxu0 %v376
  %1414 = vmatprep.subr.mxu0 0.0
  %1415 = vmatpush1.msra.mxu0 %v375
  %1416 = vmatprep.subr.mxu0 0.0
  %1417 = vmatpush1.msra.mxu0 %v374
  %1418 = vmatprep.subr.mxu0 0.0
  %1419 = vmatpush1.msra.mxu0 %v373
  %1420 = vmatprep.subr.mxu0 0.0
  %1421 = vmatpush1.msra.mxu0 %v372
  %1422 = vmatprep.subr.mxu0 0.0
  %1423 = vmatpush1.msra.mxu0 %v371
  %1424 = vmatprep.subr.mxu0 0.0
  %1425 = vmatpush1.msra.mxu0 %v370
  %1426 = vmatprep.subr.mxu0 0.0
  %1427 = vmatpush1.msra.mxu0 %v369
  %1428 = vmatprep.subr.mxu0 0.0
  %1429 = vmatpush1.msra.mxu0 %v368
  %1430 = vmatprep.subr.mxu0 0.0
  %1431 = vmatpush1.msra.mxu0 %v367
  %1432 = vmatprep.subr.mxu0 0.0
  %1433 = vmatpush1.msra.mxu0 %v366
  %1434 = vmatprep.subr.mxu0 0.0
  %1435 = vmatpush1.msra.mxu0 %v365
  %1436 = vmatprep.subr.mxu0 0.0
  %1437 = vmatpush2.msra.mxu0 0.0
  %1438 = vmatprep.subr.mxu0 0.0
  %1439 = vmatpush2.msra.mxu0 0.0
  %1440 = vmatprep.subr.mxu0 0.0
  %1441 = vmatpush2.msra.mxu0 0.0
  %1442 = vmatprep.subr.mxu0 0.0
  %1443 = vmatpush2.msra.mxu0 0.0
  %1444 = vmatprep.subr.mxu0 0.0
  %1445 = vmatpush2.msra.mxu0 0.0
  %1446 = vmatprep.subr.mxu0 0.0
  %1447 = vmatpush2.msra.mxu0 0.0
  %1448 = vmatprep.subr.mxu0 0.0
  %1449 = vmatpush2.msra.mxu0 0.0
  %1450 = vmatprep.subr.mxu0 0.0
  %1451 = vmatpush2.msra.mxu0 0.0
  %1452 = vmatprep.subr.mxu0 0.0
  %1453 = vmatpush2.msra.mxu0 0.0
  %1454 = vmatprep.subr.mxu0 0.0
  %1455 = vmatpush2.msra.mxu0 0.0
  %1456 = vmatprep.subr.mxu0 0.0
  %1457 = vmatpush2.msra.mxu0 0.0
  %1458 = vmatprep.subr.mxu0 0.0
  %1459 = vmatpush2.msra.mxu0 0.0
  %1460 = vmatprep.subr.mxu0 0.0
  %1461 = vmatpush2.msra.mxu0 0.0
  %1462 = vmatprep.subr.mxu0 0.0
  %1463 = vmatpush2.msra.mxu0 0.0
  %1464 = vmatprep.subr.mxu0 0.0
  %1465 = vmatpush2.msra.mxu0 0.0
  %1466 = vmatprep.subr.mxu0 0.0
  %1467 = vmatpush2.msra.mxu0 0.0
  %1468 = vmatprep.mubr.f32.mxu0 0.0
  %1469 = vmatmul.mubr.f32.gmra.mxu0 %v1399
  %v1470 = vpop.f32.mrf.mxu0
  %v1471 = vadd.f32 0.0, %v1470
  %v1472 = vpop.f32.mrf.mxu0
  %1473 = vdwg.mxu0
  %v1474 = vadd.f32 %v1403, %v1471
  %v1475 = vxor.u32 %v1474, 2147483648
  %v1476 = vmul.f32 %v1475, 1.442695
  %v1477 = vpow.pop %v1476
  %v1478 = vadd.f32 %v1477, 1.0
  %v1479 = vrcp.pop %v1478
  %v1480 = vmul.f32 1.0, %v1479
  %v1481 = vtanh.pop %v1474
  %1482 = vrot.lane.b32.xlu0 %v1480, 96
  %v1483 = vpop.permute.xlu0 %1482
  %1484 = vrot.lane.b32.xlu0 %v1481, 64
  %v1485 = vpop.permute.xlu0 %1484
  %1486 = vrot.lane.b32.xlu0 %v1480, 32
  %v1487 = vpop.permute.xlu0 %1486
  %v1488 = vmul.f32 %v1483, %v1397
  %v1489 = vmul.f32 %v1480, %v1485
  %v1490 = vadd.f32 %v1488, %v1489
  %v1491 = vtanh.pop %v1490
  %v1492 = vmul.f32 %v1487, %v1491
  %s1493 = scalar_lea.vmem [#allocation3], 22
  %1494 = vst [vmem:[%s1493] sm:$0x3] %v1492
  %s1495 = scalar_lea.vmem [#allocation2], 24
  %v1496 = vld [vmem:[%s1495] sm:$0x3]
  %1497 = vmatprep.subr.mxu0 0.0
  %1498 = vmatpush1.msra.mxu0 %v380
  %1499 = vmatprep.subr.mxu0 0.0
  %1500 = vmatpush1.msra.mxu0 %v379
  %1501 = vmatprep.subr.mxu0 0.0
  %1502 = vmatpush1.msra.mxu0 %v378
  %1503 = vmatprep.subr.mxu0 0.0
  %1504 = vmatpush1.msra.mxu0 %v377
  %1505 = vmatprep.subr.mxu0 0.0
  %1506 = vmatpush1.msra.mxu0 %v376
  %1507 = vmatprep.subr.mxu0 0.0
  %1508 = vmatpush1.msra.mxu0 %v375
  %1509 = vmatprep.subr.mxu0 0.0
  %1510 = vmatpush1.msra.mxu0 %v374
  %1511 = vmatprep.subr.mxu0 0.0
  %1512 = vmatpush1.msra.mxu0 %v373
  %1513 = vmatprep.subr.mxu0 0.0
  %1514 = vmatpush1.msra.mxu0 %v372
  %1515 = vmatprep.subr.mxu0 0.0
  %1516 = vmatpush1.msra.mxu0 %v371
  %1517 = vmatprep.subr.mxu0 0.0
  %1518 = vmatpush1.msra.mxu0 %v370
  %1519 = vmatprep.subr.mxu0 0.0
  %1520 = vmatpush1.msra.mxu0 %v369
  %1521 = vmatprep.subr.mxu0 0.0
  %1522 = vmatpush1.msra.mxu0 %v368
  %1523 = vmatprep.subr.mxu0 0.0
  %1524 = vmatpush1.msra.mxu0 %v367
  %1525 = vmatprep.subr.mxu0 0.0
  %1526 = vmatpush1.msra.mxu0 %v366
  %1527 = vmatprep.subr.mxu0 0.0
  %1528 = vmatpush1.msra.mxu0 %v365
  %1529 = vmatprep.subr.mxu0 0.0
  %1530 = vmatpush2.msra.mxu0 0.0
  %1531 = vmatprep.subr.mxu0 0.0
  %1532 = vmatpush2.msra.mxu0 0.0
  %1533 = vmatprep.subr.mxu0 0.0
  %1534 = vmatpush2.msra.mxu0 0.0
  %1535 = vmatprep.subr.mxu0 0.0
  %1536 = vmatpush2.msra.mxu0 0.0
  %1537 = vmatprep.subr.mxu0 0.0
  %1538 = vmatpush2.msra.mxu0 0.0
  %1539 = vmatprep.subr.mxu0 0.0
  %1540 = vmatpush2.msra.mxu0 0.0
  %1541 = vmatprep.subr.mxu0 0.0
  %1542 = vmatpush2.msra.mxu0 0.0
  %1543 = vmatprep.subr.mxu0 0.0
  %1544 = vmatpush2.msra.mxu0 0.0
  %1545 = vmatprep.subr.mxu0 0.0
  %1546 = vmatpush2.msra.mxu0 0.0
  %1547 = vmatprep.subr.mxu0 0.0
  %1548 = vmatpush2.msra.mxu0 0.0
  %1549 = vmatprep.subr.mxu0 0.0
  %1550 = vmatpush2.msra.mxu0 0.0
  %1551 = vmatprep.subr.mxu0 0.0
  %1552 = vmatpush2.msra.mxu0 0.0
  %1553 = vmatprep.subr.mxu0 0.0
  %1554 = vmatpush2.msra.mxu0 0.0
  %1555 = vmatprep.subr.mxu0 0.0
  %1556 = vmatpush2.msra.mxu0 0.0
  %1557 = vmatprep.subr.mxu0 0.0
  %1558 = vmatpush2.msra.mxu0 0.0
  %1559 = vmatprep.subr.mxu0 0.0
  %1560 = vmatpush2.msra.mxu0 0.0
  %1561 = vmatprep.mubr.f32.mxu0 0.0
  %1562 = vmatmul.mubr.f32.gmra.mxu0 %v1492
  %v1563 = vpop.f32.mrf.mxu0
  %v1564 = vadd.f32 0.0, %v1563
  %v1565 = vpop.f32.mrf.mxu0
  %1566 = vdwg.mxu0
  %v1567 = vadd.f32 %v1496, %v1564
  %v1568 = vxor.u32 %v1567, 2147483648
  %v1569 = vmul.f32 %v1568, 1.442695
  %v1570 = vpow.pop %v1569
  %v1571 = vadd.f32 %v1570, 1.0
  %v1572 = vrcp.pop %v1571
  %v1573 = vmul.f32 1.0, %v1572
  %v1574 = vtanh.pop %v1567
  %1575 = vrot.lane.b32.xlu0 %v1573, 96
  %v1576 = vpop.permute.xlu0 %1575
  %1577 = vrot.lane.b32.xlu0 %v1574, 64
  %v1578 = vpop.permute.xlu0 %1577
  %1579 = vrot.lane.b32.xlu0 %v1573, 32
  %v1580 = vpop.permute.xlu0 %1579
  %v1581 = vmul.f32 %v1576, %v1490
  %v1582 = vmul.f32 %v1573, %v1578
  %v1583 = vadd.f32 %v1581, %v1582
  %v1584 = vtanh.pop %v1583
  %v1585 = vmul.f32 %v1580, %v1584
  %s1586 = scalar_lea.vmem [#allocation3], 24
  %1587 = vst [vmem:[%s1586] sm:$0x3] %v1585
  %s1588 = scalar_lea.vmem [#allocation2], 26
  %v1589 = vld [vmem:[%s1588] sm:$0x3]
  %1590 = vmatprep.subr.mxu0 0.0
  %1591 = vmatpush1.msra.mxu0 %v380
  %1592 = vmatprep.subr.mxu0 0.0
  %1593 = vmatpush1.msra.mxu0 %v379
  %1594 = vmatprep.subr.mxu0 0.0
  %1595 = vmatpush1.msra.mxu0 %v378
  %1596 = vmatprep.subr.mxu0 0.0
  %1597 = vmatpush1.msra.mxu0 %v377
  %1598 = vmatprep.subr.mxu0 0.0
  %1599 = vmatpush1.msra.mxu0 %v376
  %1600 = vmatprep.subr.mxu0 0.0
  %1601 = vmatpush1.msra.mxu0 %v375
  %1602 = vmatprep.subr.mxu0 0.0
  %1603 = vmatpush1.msra.mxu0 %v374
  %1604 = vmatprep.subr.mxu0 0.0
  %1605 = vmatpush1.msra.mxu0 %v373
  %1606 = vmatprep.subr.mxu0 0.0
  %1607 = vmatpush1.msra.mxu0 %v372
  %1608 = vmatprep.subr.mxu0 0.0
  %1609 = vmatpush1.msra.mxu0 %v371
  %1610 = vmatprep.subr.mxu0 0.0
  %1611 = vmatpush1.msra.mxu0 %v370
  %1612 = vmatprep.subr.mxu0 0.0
  %1613 = vmatpush1.msra.mxu0 %v369
  %1614 = vmatprep.subr.mxu0 0.0
  %1615 = vmatpush1.msra.mxu0 %v368
  %1616 = vmatprep.subr.mxu0 0.0
  %1617 = vmatpush1.msra.mxu0 %v367
  %1618 = vmatprep.subr.mxu0 0.0
  %1619 = vmatpush1.msra.mxu0 %v366
  %1620 = vmatprep.subr.mxu0 0.0
  %1621 = vmatpush1.msra.mxu0 %v365
  %1622 = vmatprep.subr.mxu0 0.0
  %1623 = vmatpush2.msra.mxu0 0.0
  %1624 = vmatprep.subr.mxu0 0.0
  %1625 = vmatpush2.msra.mxu0 0.0
  %1626 = vmatprep.subr.mxu0 0.0
  %1627 = vmatpush2.msra.mxu0 0.0
  %1628 = vmatprep.subr.mxu0 0.0
  %1629 = vmatpush2.msra.mxu0 0.0
  %1630 = vmatprep.subr.mxu0 0.0
  %1631 = vmatpush2.msra.mxu0 0.0
  %1632 = vmatprep.subr.mxu0 0.0
  %1633 = vmatpush2.msra.mxu0 0.0
  %1634 = vmatprep.subr.mxu0 0.0
  %1635 = vmatpush2.msra.mxu0 0.0
  %1636 = vmatprep.subr.mxu0 0.0
  %1637 = vmatpush2.msra.mxu0 0.0
  %1638 = vmatprep.subr.mxu0 0.0
  %1639 = vmatpush2.msra.mxu0 0.0
  %1640 = vmatprep.subr.mxu0 0.0
  %1641 = vmatpush2.msra.mxu0 0.0
  %1642 = vmatprep.subr.mxu0 0.0
  %1643 = vmatpush2.msra.mxu0 0.0
  %1644 = vmatprep.subr.mxu0 0.0
  %1645 = vmatpush2.msra.mxu0 0.0
  %1646 = vmatprep.subr.mxu0 0.0
  %1647 = vmatpush2.msra.mxu0 0.0
  %1648 = vmatprep.subr.mxu0 0.0
  %1649 = vmatpush2.msra.mxu0 0.0
  %1650 = vmatprep.subr.mxu0 0.0
  %1651 = vmatpush2.msra.mxu0 0.0
  %1652 = vmatprep.subr.mxu0 0.0
  %1653 = vmatpush2.msra.mxu0 0.0
  %1654 = vmatprep.mubr.f32.mxu0 0.0
  %1655 = vmatmul.mubr.f32.gmra.mxu0 %v1585
  %v1656 = vpop.f32.mrf.mxu0
  %v1657 = vadd.f32 0.0, %v1656
  %v1658 = vpop.f32.mrf.mxu0
  %1659 = vdwg.mxu0
  %v1660 = vadd.f32 %v1589, %v1657
  %v1661 = vxor.u32 %v1660, 2147483648
  %v1662 = vmul.f32 %v1661, 1.442695
  %v1663 = vpow.pop %v1662
  %v1664 = vadd.f32 %v1663, 1.0
  %v1665 = vrcp.pop %v1664
  %v1666 = vmul.f32 1.0, %v1665
  %v1667 = vtanh.pop %v1660
  %1668 = vrot.lane.b32.xlu0 %v1666, 96
  %v1669 = vpop.permute.xlu0 %1668
  %1670 = vrot.lane.b32.xlu0 %v1667, 64
  %v1671 = vpop.permute.xlu0 %1670
  %1672 = vrot.lane.b32.xlu0 %v1666, 32
  %v1673 = vpop.permute.xlu0 %1672
  %v1674 = vmul.f32 %v1669, %v1583
  %v1675 = vmul.f32 %v1666, %v1671
  %v1676 = vadd.f32 %v1674, %v1675
  %v1677 = vtanh.pop %v1676
  %v1678 = vmul.f32 %v1673, %v1677
  %s1679 = scalar_lea.vmem [#allocation3], 26
  %1680 = vst [vmem:[%s1679] sm:$0x3] %v1678
  %s1681 = scalar_lea.vmem [#allocation2], 28
  %v1682 = vld [vmem:[%s1681] sm:$0x3]
  %1683 = vmatprep.subr.mxu0 0.0
  %1684 = vmatpush1.msra.mxu0 %v380
  %1685 = vmatprep.subr.mxu0 0.0
  %1686 = vmatpush1.msra.mxu0 %v379
  %1687 = vmatprep.subr.mxu0 0.0
  %1688 = vmatpush1.msra.mxu0 %v378
  %1689 = vmatprep.subr.mxu0 0.0
  %1690 = vmatpush1.msra.mxu0 %v377
  %1691 = vmatprep.subr.mxu0 0.0
  %1692 = vmatpush1.msra.mxu0 %v376
  %1693 = vmatprep.subr.mxu0 0.0
  %1694 = vmatpush1.msra.mxu0 %v375
  %1695 = vmatprep.subr.mxu0 0.0
  %1696 = vmatpush1.msra.mxu0 %v374
  %1697 = vmatprep.subr.mxu0 0.0
  %1698 = vmatpush1.msra.mxu0 %v373
  %1699 = vmatprep.subr.mxu0 0.0
  %1700 = vmatpush1.msra.mxu0 %v372
  %1701 = vmatprep.subr.mxu0 0.0
  %1702 = vmatpush1.msra.mxu0 %v371
  %1703 = vmatprep.subr.mxu0 0.0
  %1704 = vmatpush1.msra.mxu0 %v370
  %1705 = vmatprep.subr.mxu0 0.0
  %1706 = vmatpush1.msra.mxu0 %v369
  %1707 = vmatprep.subr.mxu0 0.0
  %1708 = vmatpush1.msra.mxu0 %v368
  %1709 = vmatprep.subr.mxu0 0.0
  %1710 = vmatpush1.msra.mxu0 %v367
  %1711 = vmatprep.subr.mxu0 0.0
  %1712 = vmatpush1.msra.mxu0 %v366
  %1713 = vmatprep.subr.mxu0 0.0
  %1714 = vmatpush1.msra.mxu0 %v365
  %1715 = vmatprep.subr.mxu0 0.0
  %1716 = vmatpush2.msra.mxu0 0.0
  %1717 = vmatprep.subr.mxu0 0.0
  %1718 = vmatpush2.msra.mxu0 0.0
  %1719 = vmatprep.subr.mxu0 0.0
  %1720 = vmatpush2.msra.mxu0 0.0
  %1721 = vmatprep.subr.mxu0 0.0
  %1722 = vmatpush2.msra.mxu0 0.0
  %1723 = vmatprep.subr.mxu0 0.0
  %1724 = vmatpush2.msra.mxu0 0.0
  %1725 = vmatprep.subr.mxu0 0.0
  %1726 = vmatpush2.msra.mxu0 0.0
  %1727 = vmatprep.subr.mxu0 0.0
  %1728 = vmatpush2.msra.mxu0 0.0
  %1729 = vmatprep.subr.mxu0 0.0
  %1730 = vmatpush2.msra.mxu0 0.0
  %1731 = vmatprep.subr.mxu0 0.0
  %1732 = vmatpush2.msra.mxu0 0.0
  %1733 = vmatprep.subr.mxu0 0.0
  %1734 = vmatpush2.msra.mxu0 0.0
  %1735 = vmatprep.subr.mxu0 0.0
  %1736 = vmatpush2.msra.mxu0 0.0
  %1737 = vmatprep.subr.mxu0 0.0
  %1738 = vmatpush2.msra.mxu0 0.0
  %1739 = vmatprep.subr.mxu0 0.0
  %1740 = vmatpush2.msra.mxu0 0.0
  %1741 = vmatprep.subr.mxu0 0.0
  %1742 = vmatpush2.msra.mxu0 0.0
  %1743 = vmatprep.subr.mxu0 0.0
  %1744 = vmatpush2.msra.mxu0 0.0
  %1745 = vmatprep.subr.mxu0 0.0
  %1746 = vmatpush2.msra.mxu0 0.0
  %1747 = vmatprep.mubr.f32.mxu0 0.0
  %1748 = vmatmul.mubr.f32.gmra.mxu0 %v1678
  %v1749 = vpop.f32.mrf.mxu0
  %v1750 = vadd.f32 0.0, %v1749
  %v1751 = vpop.f32.mrf.mxu0
  %1752 = vdwg.mxu0
  %v1753 = vadd.f32 %v1682, %v1750
  %v1754 = vxor.u32 %v1753, 2147483648
  %v1755 = vmul.f32 %v1754, 1.442695
  %v1756 = vpow.pop %v1755
  %v1757 = vadd.f32 %v1756, 1.0
  %v1758 = vrcp.pop %v1757
  %v1759 = vmul.f32 1.0, %v1758
  %v1760 = vtanh.pop %v1753
  %1761 = vrot.lane.b32.xlu0 %v1759, 96
  %v1762 = vpop.permute.xlu0 %1761
  %1763 = vrot.lane.b32.xlu0 %v1760, 64
  %v1764 = vpop.permute.xlu0 %1763
  %1765 = vrot.lane.b32.xlu0 %v1759, 32
  %v1766 = vpop.permute.xlu0 %1765
  %v1767 = vmul.f32 %v1762, %v1676
  %v1768 = vmul.f32 %v1759, %v1764
  %v1769 = vadd.f32 %v1767, %v1768
  %v1770 = vtanh.pop %v1769
  %v1771 = vmul.f32 %v1766, %v1770
  %s1772 = scalar_lea.vmem [#allocation3], 28
  %1773 = vst [vmem:[%s1772] sm:$0x3] %v1771
  %v1774 = vld [vmem:[#allocation3] sm:$0x3]
  %v1775 = vld [vmem:[#allocation3 + $0x2] sm:$0x3]
  %v1776 = vld [vmem:[#allocation3 + $0x4] sm:$0x3]
  %v1777 = vld [vmem:[#allocation3 + $0x6] sm:$0x3]
  %v1778 = vld [vmem:[#allocation3 + $0x8] sm:$0x3]
  %v1779 = vld [vmem:[#allocation3 + $0xa] sm:$0x3]
  %v1780 = vld [vmem:[#allocation3 + $0xc] sm:$0x3]
  %v1781 = vld [vmem:[#allocation3 + $0xe] sm:$0x3]
  %v1782 = vld [vmem:[#allocation3 + $0x10] sm:$0x3]
  %v1783 = vld [vmem:[#allocation3 + $0x12] sm:$0x3]
  %v1784 = vld [vmem:[#allocation3 + $0x14] sm:$0x3]
  %v1785 = vld [vmem:[#allocation3 + $0x16] sm:$0x3]
  %v1786 = vld [vmem:[#allocation3 + $0x18] sm:$0x3]
  %v1787 = vld [vmem:[#allocation3 + $0x1a] sm:$0x3]
  %v1788 = vld [vmem:[#allocation3 + $0x1c] sm:$0x3]
  %v1804 = vcombine.low %v1774, %v1775
  %v1805 = vcombine.low %v1776, %v1777
  %v1807 = vunpack.c.l.s4 1983009808
  %v1808 = vunpack.c.0.s8 %v1807
  %v1809 = vlaneseq
  %v1810 = vshrl.u32 %v1809, 7
  %v1811 = vsub.s32 %v1808, %v1810
  %v1812 = vrot.slane %v1804, %v1811
  %v1814 = vunpack.c.l.s4 1983009808
  %v1815 = vunpack.c.0.s8 %v1814
  %v1816 = vlaneseq
  %v1817 = vshrl.u32 %v1816, 7
  %v1818 = vsub.s32 %v1815, %v1817
  %v1819 = vrot.slane %v1805, %v1818
  %v1820 = vcombine.low %v1812, %v1819
  %v1821 = vcombine.low %v1778, %v1779
  %v1822 = vcombine.low %v1780, %v1781
  %v1824 = vunpack.c.l.s4 1983009808
  %v1825 = vunpack.c.0.s8 %v1824
  %v1826 = vlaneseq
  %v1827 = vshrl.u32 %v1826, 7
  %v1828 = vsub.s32 %v1825, %v1827
  %v1829 = vrot.slane %v1821, %v1828
  %v1831 = vunpack.c.l.s4 1983009808
  %v1832 = vunpack.c.0.s8 %v1831
  %v1833 = vlaneseq
  %v1834 = vshrl.u32 %v1833, 7
  %v1835 = vsub.s32 %v1832, %v1834
  %v1836 = vrot.slane %v1822, %v1835
  %v1837 = vcombine.low %v1829, %v1836
  %v1838 = vcombine.low %v1782, %v1783
  %v1839 = vcombine.low %v1784, %v1785
  %v1841 = vunpack.c.l.s4 1983009808
  %v1842 = vunpack.c.0.s8 %v1841
  %v1843 = vlaneseq
  %v1844 = vshrl.u32 %v1843, 7
  %v1845 = vsub.s32 %v1842, %v1844
  %v1846 = vrot.slane %v1838, %v1845
  %v1848 = vunpack.c.l.s4 1983009808
  %v1849 = vunpack.c.0.s8 %v1848
  %v1850 = vlaneseq
  %v1851 = vshrl.u32 %v1850, 7
  %v1852 = vsub.s32 %v1849, %v1851
  %v1853 = vrot.slane %v1839, %v1852
  %v1854 = vcombine.low %v1846, %v1853
  %v1855 = vcombine.low %v1786, %v1787
  %v1857 = vunpack.c.l.s4 1983009808
  %v1858 = vunpack.c.0.s8 %v1857
  %v1859 = vlaneseq
  %v1860 = vshrl.u32 %v1859, 7
  %v1861 = vsub.s32 %v1858, %v1860
  %v1862 = vrot.slane %v1855, %v1861
  %v1864 = vunpack.c.l.s4 1983009808
  %v1865 = vunpack.c.0.s8 %v1864
  %v1866 = vlaneseq
  %v1867 = vshrl.u32 %v1866, 7
  %v1868 = vsub.s32 %v1865, %v1867
  %v1869 = vrot.slane %v1788, %v1868
  %v1870 = vcombine.low %v1862, %v1869
  %v1875 = vpack.c.bf16 %v1837, %v1820
  %v1876 = vpack.c.bf16 %v1870, %v1854
  %v1877 = vld [vmem:[%s4] sm:$0xf]
  %v1878 = vld [vmem:[%s4 + $0x4] sm:$0xf]
  %v1879 = vld [vmem:[%s4 + $0x8] sm:$0xf]
  %v1880 = vld [vmem:[%s4 + $0xc] sm:$0xf]
  %v1881 = vld [vmem:[%s4 + $0x10] sm:$0xf]
  %v1882 = vld [vmem:[%s4 + $0x14] sm:$0xf]
  %v1883 = vld [vmem:[%s4 + $0x18] sm:$0xf]
  %v1884 = vld [vmem:[%s4 + $0x1c] sm:$0xf]
  %v1885 = vld [vmem:[%s4 + $0x20] sm:$0xf]
  %v1886 = vld [vmem:[%s4 + $0x24] sm:$0xf]
  %v1887 = vld [vmem:[%s4 + $0x28] sm:$0xf]
  %v1888 = vld [vmem:[%s4 + $0x2c] sm:$0xf]
  %v1889 = vld [vmem:[%s4 + $0x30] sm:$0xf]
  %v1890 = vld [vmem:[%s4 + $0x34] sm:$0xf]
  %v1891 = vld [vmem:[%s4 + $0x38] sm:$0xf]
  %v1892 = vld [vmem:[%s4 + $0x3c] sm:$0xf]
  %v1893 = vld [vmem:[%s6] sm:$0x1]
  %v1895 = vlaneseq
  %v1896 = vshrl.u32 %v1895, 7
  %v1897 = vsub.s32 0, %v1896
  %v1898 = vrot.slane %v1893, %v1897
  %v1916 = vunpack.c.l.b16 %v1877
  %v1917 = vunpack.c.l.b16 %v1878
  %v1918 = vunpack.c.l.b16 %v1879
  %v1919 = vunpack.c.l.b16 %v1880
  %v1920 = vunpack.c.l.b16 %v1881
  %v1921 = vunpack.c.l.b16 %v1882
  %v1922 = vunpack.c.l.b16 %v1883
  %v1923 = vunpack.c.l.b16 %v1884
  %v1924 = vunpack.c.l.b16 %v1885
  %v1925 = vunpack.c.l.b16 %v1886
  %v1926 = vunpack.c.l.b16 %v1887
  %v1927 = vunpack.c.l.b16 %v1888
  %v1928 = vunpack.c.l.b16 %v1889
  %v1929 = vunpack.c.l.b16 %v1890
  %v1930 = vunpack.c.l.b16 %v1891
  %v1931 = vunpack.c.l.b16 %v1892
  %v1932 = vpack.c.b16 %v1917, %v1916
  %v1933 = vpack.c.b16 %v1919, %v1918
  %v1934 = vpack.c.b16 %v1921, %v1920
  %v1935 = vpack.c.b16 %v1923, %v1922
  %v1936 = vpack.c.b16 %v1925, %v1924
  %v1937 = vpack.c.b16 %v1927, %v1926
  %v1938 = vpack.c.b16 %v1929, %v1928
  %v1939 = vpack.c.b16 %v1931, %v1930
  %1948 = vmatprep.subr.bf16.mxu0 0
  %1949 = vmatpush1.bf16.msra.mxu0 %v1939
  %1950 = vmatprep.subr.bf16.mxu0 0
  %1951 = vmatpush1.bf16.msra.mxu0 %v1938
  %1952 = vmatprep.subr.bf16.mxu0 0
  %1953 = vmatpush1.bf16.msra.mxu0 %v1937
  %1954 = vmatprep.subr.bf16.mxu0 0
  %1955 = vmatpush1.bf16.msra.mxu0 %v1936
  %1956 = vmatprep.subr.bf16.mxu0 0
  %1957 = vmatpush1.bf16.msra.mxu0 %v1935
  %1958 = vmatprep.subr.bf16.mxu0 0
  %1959 = vmatpush1.bf16.msra.mxu0 %v1934
  %1960 = vmatprep.subr.bf16.mxu0 0
  %1961 = vmatpush1.bf16.msra.mxu0 %v1933
  %1962 = vmatprep.subr.bf16.mxu0 0
  %1963 = vmatpush1.bf16.msra.mxu0 %v1932
  %1964 = vmatprep.subr.bf16.mxu0 0
  %1965 = vmatpush2.bf16.msra.mxu0 0
  %1966 = vmatprep.subr.bf16.mxu0 0
  %1967 = vmatpush2.bf16.msra.mxu0 0
  %1968 = vmatprep.subr.bf16.mxu0 0
  %1969 = vmatpush2.bf16.msra.mxu0 0
  %1970 = vmatprep.subr.bf16.mxu0 0
  %1971 = vmatpush2.bf16.msra.mxu0 0
  %1972 = vmatprep.subr.bf16.mxu0 0
  %1973 = vmatpush2.bf16.msra.mxu0 0
  %1974 = vmatprep.subr.bf16.mxu0 0
  %1975 = vmatpush2.bf16.msra.mxu0 0
  %1976 = vmatprep.subr.bf16.mxu0 0
  %1977 = vmatpush2.bf16.msra.mxu0 0
  %1978 = vmatprep.subr.bf16.mxu0 0
  %1979 = vmatpush2.bf16.msra.mxu0 0
  %1980 = vmatprep.mubr.bf16.mxu0 0
  %1981 = vmatmul.mubr.bf16.gmra.mxu0 %v1875
  %v1982 = vpop.f32.mrf.mxu0
  %v1983 = vadd.f32 %v1898, %v1982
  %v1984 = vpop.f32.mrf.mxu0
  %v1985 = vpop.f32.mrf.mxu0
  %v1986 = vadd.f32 %v1898, %v1985
  %v1987 = vpop.f32.mrf.mxu0
  %1988 = vmatprep.mubr.bf16.mxu0 0
  %1989 = vmatmul.mubr.bf16.gmra.mxu0 %v1876
  %v1990 = vpop.f32.mrf.mxu0
  %v1991 = vadd.f32 %v1898, %v1990
  %v1992 = vpop.f32.mrf.mxu0
  %v1993 = vpop.f32.mrf.mxu0
  %v1994 = vadd.f32 %v1898, %v1993
  %v1995 = vpop.f32.mrf.mxu0
  %1996 = vdwg.mxu0
  %v2001 = vcombine.high %v1983, %v1983
  %v2003 = vunpack.c.l.s4 1983009808
  %v2004 = vunpack.c.0.s8 %v2003
  %v2005 = vlaneseq
  %v2006 = vshrl.u32 %v2005, 7
  %v2007 = vsub.s32 %v2004, %v2006
  %v2008 = vrot.slane %v1983, %v2007
  %v2010 = vunpack.c.l.s4 1983009808
  %v2011 = vunpack.c.0.s8 %v2010
  %v2012 = vlaneseq
  %v2013 = vshrl.u32 %v2012, 7
  %v2014 = vsub.s32 %v2011, %v2013
  %v2015 = vrot.slane %v2001, %v2014
  %v2016 = vcombine.high %v2008, %v2008
  %v2017 = vcombine.high %v2015, %v2015
  %v2018 = vcombine.high %v1986, %v1986
  %v2020 = vunpack.c.l.s4 1983009808
  %v2021 = vunpack.c.0.s8 %v2020
  %v2022 = vlaneseq
  %v2023 = vshrl.u32 %v2022, 7
  %v2024 = vsub.s32 %v2021, %v2023
  %v2025 = vrot.slane %v1986, %v2024
  %v2027 = vunpack.c.l.s4 1983009808
  %v2028 = vunpack.c.0.s8 %v2027
  %v2029 = vlaneseq
  %v2030 = vshrl.u32 %v2029, 7
  %v2031 = vsub.s32 %v2028, %v2030
  %v2032 = vrot.slane %v2018, %v2031
  %v2033 = vcombine.high %v2025, %v2025
  %v2034 = vcombine.high %v2032, %v2032
  %v2035 = vcombine.high %v1991, %v1991
  %v2037 = vunpack.c.l.s4 1983009808
  %v2038 = vunpack.c.0.s8 %v2037
  %v2039 = vlaneseq
  %v2040 = vshrl.u32 %v2039, 7
  %v2041 = vsub.s32 %v2038, %v2040
  %v2042 = vrot.slane %v1991, %v2041
  %v2044 = vunpack.c.l.s4 1983009808
  %v2045 = vunpack.c.0.s8 %v2044
  %v2046 = vlaneseq
  %v2047 = vshrl.u32 %v2046, 7
  %v2048 = vsub.s32 %v2045, %v2047
  %v2049 = vrot.slane %v2035, %v2048
  %v2050 = vcombine.high %v2042, %v2042
  %v2051 = vcombine.high %v2049, %v2049
  %v2052 = vcombine.high %v1994, %v1994
  %v2054 = vunpack.c.l.s4 1983009808
  %v2055 = vunpack.c.0.s8 %v2054
  %v2056 = vlaneseq
  %v2057 = vshrl.u32 %v2056, 7
  %v2058 = vsub.s32 %v2055, %v2057
  %v2059 = vrot.slane %v1994, %v2058
  %v2061 = vunpack.c.l.s4 1983009808
  %v2062 = vunpack.c.0.s8 %v2061
  %v2063 = vlaneseq
  %v2064 = vshrl.u32 %v2063, 7
  %v2065 = vsub.s32 %v2062, %v2064
  %v2066 = vrot.slane %v2052, %v2065
  %v2067 = vcombine.high %v2059, %v2059
  %2083 = vst [vmem:[#allocation2] sm:$0x3] %v2008
  %2084 = vst [vmem:[#allocation2 + $0x2] sm:$0x3] %v2016
  %2085 = vst [vmem:[#allocation2 + $0x4] sm:$0x3] %v2015
  %2086 = vst [vmem:[#allocation2 + $0x6] sm:$0x3] %v2017
  %2087 = vst [vmem:[#allocation2 + $0x8] sm:$0x3] %v2025
  %2088 = vst [vmem:[#allocation2 + $0xa] sm:$0x3] %v2033
  %2089 = vst [vmem:[#allocation2 + $0xc] sm:$0x3] %v2032
  %2090 = vst [vmem:[#allocation2 + $0xe] sm:$0x3] %v2034
  %2091 = vst [vmem:[#allocation2 + $0x10] sm:$0x3] %v2042
  %2092 = vst [vmem:[#allocation2 + $0x12] sm:$0x3] %v2050
  %2093 = vst [vmem:[#allocation2 + $0x14] sm:$0x3] %v2049
  %2094 = vst [vmem:[#allocation2 + $0x16] sm:$0x3] %v2051
  %2095 = vst [vmem:[#allocation2 + $0x18] sm:$0x3] %v2059
  %2096 = vst [vmem:[#allocation2 + $0x1a] sm:$0x3] %v2067
  %2097 = vst [vmem:[#allocation2 + $0x1c] sm:$0x3] %v2066
  %v2098 = vld [vmem:[%s5] sm:$0xff]
  %v2099 = vld [vmem:[%s5 + $0x8] sm:$0xff]
  %v2100 = vld [vmem:[%s5 + $0x10] sm:$0xff]
  %v2101 = vld [vmem:[%s5 + $0x18] sm:$0xff]
  %v2102 = vld [vmem:[%s5 + $0x20] sm:$0xff]
  %v2103 = vld [vmem:[%s5 + $0x28] sm:$0xff]
  %v2104 = vld [vmem:[%s5 + $0x30] sm:$0xff]
  %v2105 = vld [vmem:[%s5 + $0x38] sm:$0xff]
  %v2106 = vld [vmem:[%s5 + $0x40] sm:$0xff]
  %v2107 = vld [vmem:[%s5 + $0x48] sm:$0xff]
  %v2108 = vld [vmem:[%s5 + $0x50] sm:$0xff]
  %v2109 = vld [vmem:[%s5 + $0x58] sm:$0xff]
  %v2110 = vld [vmem:[%s5 + $0x60] sm:$0xff]
  %v2111 = vld [vmem:[%s5 + $0x68] sm:$0xff]
  %v2112 = vld [vmem:[%s5 + $0x70] sm:$0xff]
  %v2113 = vld [vmem:[%s5 + $0x78] sm:$0xff]
  %v2114 = vld [vmem:[#allocation2] sm:$0x3]
  %2115 = vmatprep.subr.mxu0 0.0
  %2116 = vmatpush1.msra.mxu0 %v2113
  %2117 = vmatprep.subr.mxu0 0.0
  %2118 = vmatpush1.msra.mxu0 %v2112
  %2119 = vmatprep.subr.mxu0 0.0
  %2120 = vmatpush1.msra.mxu0 %v2111
  %2121 = vmatprep.subr.mxu0 0.0
  %2122 = vmatpush1.msra.mxu0 %v2110
  %2123 = vmatprep.subr.mxu0 0.0
  %2124 = vmatpush1.msra.mxu0 %v2109
  %2125 = vmatprep.subr.mxu0 0.0
  %2126 = vmatpush1.msra.mxu0 %v2108
  %2127 = vmatprep.subr.mxu0 0.0
  %2128 = vmatpush1.msra.mxu0 %v2107
  %2129 = vmatprep.subr.mxu0 0.0
  %2130 = vmatpush1.msra.mxu0 %v2106
  %2131 = vmatprep.subr.mxu0 0.0
  %2132 = vmatpush1.msra.mxu0 %v2105
  %2133 = vmatprep.subr.mxu0 0.0
  %2134 = vmatpush1.msra.mxu0 %v2104
  %2135 = vmatprep.subr.mxu0 0.0
  %2136 = vmatpush1.msra.mxu0 %v2103
  %2137 = vmatprep.subr.mxu0 0.0
  %2138 = vmatpush1.msra.mxu0 %v2102
  %2139 = vmatprep.subr.mxu0 0.0
  %2140 = vmatpush1.msra.mxu0 %v2101
  %2141 = vmatprep.subr.mxu0 0.0
  %2142 = vmatpush1.msra.mxu0 %v2100
  %2143 = vmatprep.subr.mxu0 0.0
  %2144 = vmatpush1.msra.mxu0 %v2099
  %2145 = vmatprep.subr.mxu0 0.0
  %2146 = vmatpush1.msra.mxu0 %v2098
  %2147 = vmatprep.subr.mxu0 0.0
  %2148 = vmatpush2.msra.mxu0 0.0
  %2149 = vmatprep.subr.mxu0 0.0
  %2150 = vmatpush2.msra.mxu0 0.0
  %2151 = vmatprep.subr.mxu0 0.0
  %2152 = vmatpush2.msra.mxu0 0.0
  %2153 = vmatprep.subr.mxu0 0.0
  %2154 = vmatpush2.msra.mxu0 0.0
  %2155 = vmatprep.subr.mxu0 0.0
  %2156 = vmatpush2.msra.mxu0 0.0
  %2157 = vmatprep.subr.mxu0 0.0
  %2158 = vmatpush2.msra.mxu0 0.0
  %2159 = vmatprep.subr.mxu0 0.0
  %2160 = vmatpush2.msra.mxu0 0.0
  %2161 = vmatprep.subr.mxu0 0.0
  %2162 = vmatpush2.msra.mxu0 0.0
  %2163 = vmatprep.subr.mxu0 0.0
  %2164 = vmatpush2.msra.mxu0 0.0
  %2165 = vmatprep.subr.mxu0 0.0
  %2166 = vmatpush2.msra.mxu0 0.0
  %2167 = vmatprep.subr.mxu0 0.0
  %2168 = vmatpush2.msra.mxu0 0.0
  %2169 = vmatprep.subr.mxu0 0.0
  %2170 = vmatpush2.msra.mxu0 0.0
  %2171 = vmatprep.subr.mxu0 0.0
  %2172 = vmatpush2.msra.mxu0 0.0
  %2173 = vmatprep.subr.mxu0 0.0
  %2174 = vmatpush2.msra.mxu0 0.0
  %2175 = vmatprep.subr.mxu0 0.0
  %2176 = vmatpush2.msra.mxu0 0.0
  %2177 = vmatprep.subr.mxu0 0.0
  %2178 = vmatpush2.msra.mxu0 0.0
  %2179 = vmatprep.mubr.f32.mxu0 0.0
  %2180 = vmatmul.mubr.f32.gmra.mxu0 0.0
  %v2181 = vpop.f32.mrf.mxu0
  %v2182 = vadd.f32 0.0, %v2181
  %v2183 = vpop.f32.mrf.mxu0
  %2184 = vdwg.mxu0
  %v2185 = vadd.f32 %v2114, %v2182
  %v2186 = vxor.u32 %v2185, 2147483648
  %v2187 = vmul.f32 %v2186, 1.442695
  %v2188 = vpow.pop %v2187
  %v2189 = vadd.f32 %v2188, 1.0
  %v2190 = vrcp.pop %v2189
  %v2191 = vmul.f32 1.0, %v2190
  %v2192 = vtanh.pop %v2185
  %2193 = vrot.lane.b32.xlu0 %v2191, 96
  %v2194 = vpop.permute.xlu0 %2193
  %2195 = vrot.lane.b32.xlu0 %v2192, 64
  %v2196 = vpop.permute.xlu0 %2195
  %2197 = vrot.lane.b32.xlu0 %v2191, 32
  %v2198 = vpop.permute.xlu0 %2197
  %v2199 = vmul.f32 %v2194, 0.0
  %v2200 = vmul.f32 %v2191, %v2196
  %v2201 = vadd.f32 %v2199, %v2200
  %v2202 = vtanh.pop %v2201
  %v2203 = vmul.f32 %v2198, %v2202
  %v2204 = vld [vmem:[%s472] sm:$0x3]
  %2205 = vmatprep.subr.mxu0 0.0
  %2206 = vmatpush1.msra.mxu0 %v2113
  %2207 = vmatprep.subr.mxu0 0.0
  %2208 = vmatpush1.msra.mxu0 %v2112
  %2209 = vmatprep.subr.mxu0 0.0
  %2210 = vmatpush1.msra.mxu0 %v2111
  %2211 = vmatprep.subr.mxu0 0.0
  %2212 = vmatpush1.msra.mxu0 %v2110
  %2213 = vmatprep.subr.mxu0 0.0
  %2214 = vmatpush1.msra.mxu0 %v2109
  %2215 = vmatprep.subr.mxu0 0.0
  %2216 = vmatpush1.msra.mxu0 %v2108
  %2217 = vmatprep.subr.mxu0 0.0
  %2218 = vmatpush1.msra.mxu0 %v2107
  %2219 = vmatprep.subr.mxu0 0.0
  %2220 = vmatpush1.msra.mxu0 %v2106
  %2221 = vmatprep.subr.mxu0 0.0
  %2222 = vmatpush1.msra.mxu0 %v2105
  %2223 = vmatprep.subr.mxu0 0.0
  %2224 = vmatpush1.msra.mxu0 %v2104
  %2225 = vmatprep.subr.mxu0 0.0
  %2226 = vmatpush1.msra.mxu0 %v2103
  %2227 = vmatprep.subr.mxu0 0.0
  %2228 = vmatpush1.msra.mxu0 %v2102
  %2229 = vmatprep.subr.mxu0 0.0
  %2230 = vmatpush1.msra.mxu0 %v2101
  %2231 = vmatprep.subr.mxu0 0.0
  %2232 = vmatpush1.msra.mxu0 %v2100
  %2233 = vmatprep.subr.mxu0 0.0
  %2234 = vmatpush1.msra.mxu0 %v2099
  %2235 = vmatprep.subr.mxu0 0.0
  %2236 = vmatpush1.msra.mxu0 %v2098
  %2237 = vmatprep.subr.mxu0 0.0
  %2238 = vmatpush2.msra.mxu0 0.0
  %2239 = vmatprep.subr.mxu0 0.0
  %2240 = vmatpush2.msra.mxu0 0.0
  %2241 = vmatprep.subr.mxu0 0.0
  %2242 = vmatpush2.msra.mxu0 0.0
  %2243 = vmatprep.subr.mxu0 0.0
  %2244 = vmatpush2.msra.mxu0 0.0
  %2245 = vmatprep.subr.mxu0 0.0
  %2246 = vmatpush2.msra.mxu0 0.0
  %2247 = vmatprep.subr.mxu0 0.0
  %2248 = vmatpush2.msra.mxu0 0.0
  %2249 = vmatprep.subr.mxu0 0.0
  %2250 = vmatpush2.msra.mxu0 0.0
  %2251 = vmatprep.subr.mxu0 0.0
  %2252 = vmatpush2.msra.mxu0 0.0
  %2253 = vmatprep.subr.mxu0 0.0
  %2254 = vmatpush2.msra.mxu0 0.0
  %2255 = vmatprep.subr.mxu0 0.0
  %2256 = vmatpush2.msra.mxu0 0.0
  %2257 = vmatprep.subr.mxu0 0.0
  %2258 = vmatpush2.msra.mxu0 0.0
  %2259 = vmatprep.subr.mxu0 0.0
  %2260 = vmatpush2.msra.mxu0 0.0
  %2261 = vmatprep.subr.mxu0 0.0
  %2262 = vmatpush2.msra.mxu0 0.0
  %2263 = vmatprep.subr.mxu0 0.0
  %2264 = vmatpush2.msra.mxu0 0.0
  %2265 = vmatprep.subr.mxu0 0.0
  %2266 = vmatpush2.msra.mxu0 0.0
  %2267 = vmatprep.subr.mxu0 0.0
  %2268 = vmatpush2.msra.mxu0 0.0
  %2269 = vmatprep.mubr.f32.mxu0 0.0
  %2270 = vmatmul.mubr.f32.gmra.mxu0 %v2203
  %v2271 = vpop.f32.mrf.mxu0
  %v2272 = vadd.f32 0.0, %v2271
  %v2273 = vpop.f32.mrf.mxu0
  %2274 = vdwg.mxu0
  %v2275 = vadd.f32 %v2204, %v2272
  %v2276 = vxor.u32 %v2275, 2147483648
  %v2277 = vmul.f32 %v2276, 1.442695
  %v2278 = vpow.pop %v2277
  %v2279 = vadd.f32 %v2278, 1.0
  %v2280 = vrcp.pop %v2279
  %v2281 = vmul.f32 1.0, %v2280
  %v2282 = vtanh.pop %v2275
  %2283 = vrot.lane.b32.xlu0 %v2281, 96
  %v2284 = vpop.permute.xlu0 %2283
  %2285 = vrot.lane.b32.xlu0 %v2282, 64
  %v2286 = vpop.permute.xlu0 %2285
  %2287 = vrot.lane.b32.xlu0 %v2281, 32
  %v2288 = vpop.permute.xlu0 %2287
  %v2289 = vmul.f32 %v2284, %v2201
  %v2290 = vmul.f32 %v2281, %v2286
  %v2291 = vadd.f32 %v2289, %v2290
  %v2292 = vtanh.pop %v2291
  %v2293 = vmul.f32 %v2288, %v2292
  %v2294 = vld [vmem:[%s565] sm:$0x3]
  %2295 = vmatprep.subr.mxu0 0.0
  %2296 = vmatpush1.msra.mxu0 %v2113
  %2297 = vmatprep.subr.mxu0 0.0
  %2298 = vmatpush1.msra.mxu0 %v2112
  %2299 = vmatprep.subr.mxu0 0.0
  %2300 = vmatpush1.msra.mxu0 %v2111
  %2301 = vmatprep.subr.mxu0 0.0
  %2302 = vmatpush1.msra.mxu0 %v2110
  %2303 = vmatprep.subr.mxu0 0.0
  %2304 = vmatpush1.msra.mxu0 %v2109
  %2305 = vmatprep.subr.mxu0 0.0
  %2306 = vmatpush1.msra.mxu0 %v2108
  %2307 = vmatprep.subr.mxu0 0.0
  %2308 = vmatpush1.msra.mxu0 %v2107
  %2309 = vmatprep.subr.mxu0 0.0
  %2310 = vmatpush1.msra.mxu0 %v2106
  %2311 = vmatprep.subr.mxu0 0.0
  %2312 = vmatpush1.msra.mxu0 %v2105
  %2313 = vmatprep.subr.mxu0 0.0
  %2314 = vmatpush1.msra.mxu0 %v2104
  %2315 = vmatprep.subr.mxu0 0.0
  %2316 = vmatpush1.msra.mxu0 %v2103
  %2317 = vmatprep.subr.mxu0 0.0
  %2318 = vmatpush1.msra.mxu0 %v2102
  %2319 = vmatprep.subr.mxu0 0.0
  %2320 = vmatpush1.msra.mxu0 %v2101
  %2321 = vmatprep.subr.mxu0 0.0
  %2322 = vmatpush1.msra.mxu0 %v2100
  %2323 = vmatprep.subr.mxu0 0.0
  %2324 = vmatpush1.msra.mxu0 %v2099
  %2325 = vmatprep.subr.mxu0 0.0
  %2326 = vmatpush1.msra.mxu0 %v2098
  %2327 = vmatprep.subr.mxu0 0.0
  %2328 = vmatpush2.msra.mxu0 0.0
  %2329 = vmatprep.subr.mxu0 0.0
  %2330 = vmatpush2.msra.mxu0 0.0
  %2331 = vmatprep.subr.mxu0 0.0
  %2332 = vmatpush2.msra.mxu0 0.0
  %2333 = vmatprep.subr.mxu0 0.0
  %2334 = vmatpush2.msra.mxu0 0.0
  %2335 = vmatprep.subr.mxu0 0.0
  %2336 = vmatpush2.msra.mxu0 0.0
  %2337 = vmatprep.subr.mxu0 0.0
  %2338 = vmatpush2.msra.mxu0 0.0
  %2339 = vmatprep.subr.mxu0 0.0
  %2340 = vmatpush2.msra.mxu0 0.0
  %2341 = vmatprep.subr.mxu0 0.0
  %2342 = vmatpush2.msra.mxu0 0.0
  %2343 = vmatprep.subr.mxu0 0.0
  %2344 = vmatpush2.msra.mxu0 0.0
  %2345 = vmatprep.subr.mxu0 0.0
  %2346 = vmatpush2.msra.mxu0 0.0
  %2347 = vmatprep.subr.mxu0 0.0
  %2348 = vmatpush2.msra.mxu0 0.0
  %2349 = vmatprep.subr.mxu0 0.0
  %2350 = vmatpush2.msra.mxu0 0.0
  %2351 = vmatprep.subr.mxu0 0.0
  %2352 = vmatpush2.msra.mxu0 0.0
  %2353 = vmatprep.subr.mxu0 0.0
  %2354 = vmatpush2.msra.mxu0 0.0
  %2355 = vmatprep.subr.mxu0 0.0
  %2356 = vmatpush2.msra.mxu0 0.0
  %2357 = vmatprep.subr.mxu0 0.0
  %2358 = vmatpush2.msra.mxu0 0.0
  %2359 = vmatprep.mubr.f32.mxu0 0.0
  %2360 = vmatmul.mubr.f32.gmra.mxu0 %v2293
  %v2361 = vpop.f32.mrf.mxu0
  %v2362 = vadd.f32 0.0, %v2361
  %v2363 = vpop.f32.mrf.mxu0
  %2364 = vdwg.mxu0
  %v2365 = vadd.f32 %v2294, %v2362
  %v2366 = vxor.u32 %v2365, 2147483648
  %v2367 = vmul.f32 %v2366, 1.442695
  %v2368 = vpow.pop %v2367
  %v2369 = vadd.f32 %v2368, 1.0
  %v2370 = vrcp.pop %v2369
  %v2371 = vmul.f32 1.0, %v2370
  %v2372 = vtanh.pop %v2365
  %2373 = vrot.lane.b32.xlu0 %v2371, 96
  %v2374 = vpop.permute.xlu0 %2373
  %2375 = vrot.lane.b32.xlu0 %v2372, 64
  %v2376 = vpop.permute.xlu0 %2375
  %2377 = vrot.lane.b32.xlu0 %v2371, 32
  %v2378 = vpop.permute.xlu0 %2377
  %v2379 = vmul.f32 %v2374, %v2291
  %v2380 = vmul.f32 %v2371, %v2376
  %v2381 = vadd.f32 %v2379, %v2380
  %v2382 = vtanh.pop %v2381
  %v2383 = vmul.f32 %v2378, %v2382
  %v2384 = vld [vmem:[%s658] sm:$0x3]
  %2385 = vmatprep.subr.mxu0 0.0
  %2386 = vmatpush1.msra.mxu0 %v2113
  %2387 = vmatprep.subr.mxu0 0.0
  %2388 = vmatpush1.msra.mxu0 %v2112
  %2389 = vmatprep.subr.mxu0 0.0
  %2390 = vmatpush1.msra.mxu0 %v2111
  %2391 = vmatprep.subr.mxu0 0.0
  %2392 = vmatpush1.msra.mxu0 %v2110
  %2393 = vmatprep.subr.mxu0 0.0
  %2394 = vmatpush1.msra.mxu0 %v2109
  %2395 = vmatprep.subr.mxu0 0.0
  %2396 = vmatpush1.msra.mxu0 %v2108
  %2397 = vmatprep.subr.mxu0 0.0
  %2398 = vmatpush1.msra.mxu0 %v2107
  %2399 = vmatprep.subr.mxu0 0.0
  %2400 = vmatpush1.msra.mxu0 %v2106
  %2401 = vmatprep.subr.mxu0 0.0
  %2402 = vmatpush1.msra.mxu0 %v2105
  %2403 = vmatprep.subr.mxu0 0.0
  %2404 = vmatpush1.msra.mxu0 %v2104
  %2405 = vmatprep.subr.mxu0 0.0
  %2406 = vmatpush1.msra.mxu0 %v2103
  %2407 = vmatprep.subr.mxu0 0.0
  %2408 = vmatpush1.msra.mxu0 %v2102
  %2409 = vmatprep.subr.mxu0 0.0
  %2410 = vmatpush1.msra.mxu0 %v2101
  %2411 = vmatprep.subr.mxu0 0.0
  %2412 = vmatpush1.msra.mxu0 %v2100
  %2413 = vmatprep.subr.mxu0 0.0
  %2414 = vmatpush1.msra.mxu0 %v2099
  %2415 = vmatprep.subr.mxu0 0.0
  %2416 = vmatpush1.msra.mxu0 %v2098
  %2417 = vmatprep.subr.mxu0 0.0
  %2418 = vmatpush2.msra.mxu0 0.0
  %2419 = vmatprep.subr.mxu0 0.0
  %2420 = vmatpush2.msra.mxu0 0.0
  %2421 = vmatprep.subr.mxu0 0.0
  %2422 = vmatpush2.msra.mxu0 0.0
  %2423 = vmatprep.subr.mxu0 0.0
  %2424 = vmatpush2.msra.mxu0 0.0
  %2425 = vmatprep.subr.mxu0 0.0
  %2426 = vmatpush2.msra.mxu0 0.0
  %2427 = vmatprep.subr.mxu0 0.0
  %2428 = vmatpush2.msra.mxu0 0.0
  %2429 = vmatprep.subr.mxu0 0.0
  %2430 = vmatpush2.msra.mxu0 0.0
  %2431 = vmatprep.subr.mxu0 0.0
  %2432 = vmatpush2.msra.mxu0 0.0
  %2433 = vmatprep.subr.mxu0 0.0
  %2434 = vmatpush2.msra.mxu0 0.0
  %2435 = vmatprep.subr.mxu0 0.0
  %2436 = vmatpush2.msra.mxu0 0.0
  %2437 = vmatprep.subr.mxu0 0.0
  %2438 = vmatpush2.msra.mxu0 0.0
  %2439 = vmatprep.subr.mxu0 0.0
  %2440 = vmatpush2.msra.mxu0 0.0
  %2441 = vmatprep.subr.mxu0 0.0
  %2442 = vmatpush2.msra.mxu0 0.0
  %2443 = vmatprep.subr.mxu0 0.0
  %2444 = vmatpush2.msra.mxu0 0.0
  %2445 = vmatprep.subr.mxu0 0.0
  %2446 = vmatpush2.msra.mxu0 0.0
  %2447 = vmatprep.subr.mxu0 0.0
  %2448 = vmatpush2.msra.mxu0 0.0
  %2449 = vmatprep.mubr.f32.mxu0 0.0
  %2450 = vmatmul.mubr.f32.gmra.mxu0 %v2383
  %v2451 = vpop.f32.mrf.mxu0
  %v2452 = vadd.f32 0.0, %v2451
  %v2453 = vpop.f32.mrf.mxu0
  %2454 = vdwg.mxu0
  %v2455 = vadd.f32 %v2384, %v2452
  %v2456 = vxor.u32 %v2455, 2147483648
  %v2457 = vmul.f32 %v2456, 1.442695
  %v2458 = vpow.pop %v2457
  %v2459 = vadd.f32 %v2458, 1.0
  %v2460 = vrcp.pop %v2459
  %v2461 = vmul.f32 1.0, %v2460
  %v2462 = vtanh.pop %v2455
  %2463 = vrot.lane.b32.xlu0 %v2461, 96
  %v2464 = vpop.permute.xlu0 %2463
  %2465 = vrot.lane.b32.xlu0 %v2462, 64
  %v2466 = vpop.permute.xlu0 %2465
  %2467 = vrot.lane.b32.xlu0 %v2461, 32
  %v2468 = vpop.permute.xlu0 %2467
  %v2469 = vmul.f32 %v2464, %v2381
  %v2470 = vmul.f32 %v2461, %v2466
  %v2471 = vadd.f32 %v2469, %v2470
  %v2472 = vtanh.pop %v2471
  %v2473 = vmul.f32 %v2468, %v2472
  %v2474 = vld [vmem:[%s751] sm:$0x3]
  %2475 = vmatprep.subr.mxu0 0.0
  %2476 = vmatpush1.msra.mxu0 %v2113
  %2477 = vmatprep.subr.mxu0 0.0
  %2478 = vmatpush1.msra.mxu0 %v2112
  %2479 = vmatprep.subr.mxu0 0.0
  %2480 = vmatpush1.msra.mxu0 %v2111
  %2481 = vmatprep.subr.mxu0 0.0
  %2482 = vmatpush1.msra.mxu0 %v2110
  %2483 = vmatprep.subr.mxu0 0.0
  %2484 = vmatpush1.msra.mxu0 %v2109
  %2485 = vmatprep.subr.mxu0 0.0
  %2486 = vmatpush1.msra.mxu0 %v2108
  %2487 = vmatprep.subr.mxu0 0.0
  %2488 = vmatpush1.msra.mxu0 %v2107
  %2489 = vmatprep.subr.mxu0 0.0
  %2490 = vmatpush1.msra.mxu0 %v2106
  %2491 = vmatprep.subr.mxu0 0.0
  %2492 = vmatpush1.msra.mxu0 %v2105
  %2493 = vmatprep.subr.mxu0 0.0
  %2494 = vmatpush1.msra.mxu0 %v2104
  %2495 = vmatprep.subr.mxu0 0.0
  %2496 = vmatpush1.msra.mxu0 %v2103
  %2497 = vmatprep.subr.mxu0 0.0
  %2498 = vmatpush1.msra.mxu0 %v2102
  %2499 = vmatprep.subr.mxu0 0.0
  %2500 = vmatpush1.msra.mxu0 %v2101
  %2501 = vmatprep.subr.mxu0 0.0
  %2502 = vmatpush1.msra.mxu0 %v2100
  %2503 = vmatprep.subr.mxu0 0.0
  %2504 = vmatpush1.msra.mxu0 %v2099
  %2505 = vmatprep.subr.mxu0 0.0
  %2506 = vmatpush1.msra.mxu0 %v2098
  %2507 = vmatprep.subr.mxu0 0.0
  %2508 = vmatpush2.msra.mxu0 0.0
  %2509 = vmatprep.subr.mxu0 0.0
  %2510 = vmatpush2.msra.mxu0 0.0
  %2511 = vmatprep.subr.mxu0 0.0
  %2512 = vmatpush2.msra.mxu0 0.0
  %2513 = vmatprep.subr.mxu0 0.0
  %2514 = vmatpush2.msra.mxu0 0.0
  %2515 = vmatprep.subr.mxu0 0.0
  %2516 = vmatpush2.msra.mxu0 0.0
  %2517 = vmatprep.subr.mxu0 0.0
  %2518 = vmatpush2.msra.mxu0 0.0
  %2519 = vmatprep.subr.mxu0 0.0
  %2520 = vmatpush2.msra.mxu0 0.0
  %2521 = vmatprep.subr.mxu0 0.0
  %2522 = vmatpush2.msra.mxu0 0.0
  %2523 = vmatprep.subr.mxu0 0.0
  %2524 = vmatpush2.msra.mxu0 0.0
  %2525 = vmatprep.subr.mxu0 0.0
  %2526 = vmatpush2.msra.mxu0 0.0
  %2527 = vmatprep.subr.mxu0 0.0
  %2528 = vmatpush2.msra.mxu0 0.0
  %2529 = vmatprep.subr.mxu0 0.0
  %2530 = vmatpush2.msra.mxu0 0.0
  %2531 = vmatprep.subr.mxu0 0.0
  %2532 = vmatpush2.msra.mxu0 0.0
  %2533 = vmatprep.subr.mxu0 0.0
  %2534 = vmatpush2.msra.mxu0 0.0
  %2535 = vmatprep.subr.mxu0 0.0
  %2536 = vmatpush2.msra.mxu0 0.0
  %2537 = vmatprep.subr.mxu0 0.0
  %2538 = vmatpush2.msra.mxu0 0.0
  %2539 = vmatprep.mubr.f32.mxu0 0.0
  %2540 = vmatmul.mubr.f32.gmra.mxu0 %v2473
  %v2541 = vpop.f32.mrf.mxu0
  %v2542 = vadd.f32 0.0, %v2541
  %v2543 = vpop.f32.mrf.mxu0
  %2544 = vdwg.mxu0
  %v2545 = vadd.f32 %v2474, %v2542
  %v2546 = vxor.u32 %v2545, 2147483648
  %v2547 = vmul.f32 %v2546, 1.442695
  %v2548 = vpow.pop %v2547
  %v2549 = vadd.f32 %v2548, 1.0
  %v2550 = vrcp.pop %v2549
  %v2551 = vmul.f32 1.0, %v2550
  %v2552 = vtanh.pop %v2545
  %2553 = vrot.lane.b32.xlu0 %v2551, 96
  %v2554 = vpop.permute.xlu0 %2553
  %2555 = vrot.lane.b32.xlu0 %v2552, 64
  %v2556 = vpop.permute.xlu0 %2555
  %2557 = vrot.lane.b32.xlu0 %v2551, 32
  %v2558 = vpop.permute.xlu0 %2557
  %v2559 = vmul.f32 %v2554, %v2471
  %v2560 = vmul.f32 %v2551, %v2556
  %v2561 = vadd.f32 %v2559, %v2560
  %v2562 = vtanh.pop %v2561
  %v2563 = vmul.f32 %v2558, %v2562
  %v2564 = vld [vmem:[%s844] sm:$0x3]
  %2565 = vmatprep.subr.mxu0 0.0
  %2566 = vmatpush1.msra.mxu0 %v2113
  %2567 = vmatprep.subr.mxu0 0.0
  %2568 = vmatpush1.msra.mxu0 %v2112
  %2569 = vmatprep.subr.mxu0 0.0
  %2570 = vmatpush1.msra.mxu0 %v2111
  %2571 = vmatprep.subr.mxu0 0.0
  %2572 = vmatpush1.msra.mxu0 %v2110
  %2573 = vmatprep.subr.mxu0 0.0
  %2574 = vmatpush1.msra.mxu0 %v2109
  %2575 = vmatprep.subr.mxu0 0.0
  %2576 = vmatpush1.msra.mxu0 %v2108
  %2577 = vmatprep.subr.mxu0 0.0
  %2578 = vmatpush1.msra.mxu0 %v2107
  %2579 = vmatprep.subr.mxu0 0.0
  %2580 = vmatpush1.msra.mxu0 %v2106
  %2581 = vmatprep.subr.mxu0 0.0
  %2582 = vmatpush1.msra.mxu0 %v2105
  %2583 = vmatprep.subr.mxu0 0.0
  %2584 = vmatpush1.msra.mxu0 %v2104
  %2585 = vmatprep.subr.mxu0 0.0
  %2586 = vmatpush1.msra.mxu0 %v2103
  %2587 = vmatprep.subr.mxu0 0.0
  %2588 = vmatpush1.msra.mxu0 %v2102
  %2589 = vmatprep.subr.mxu0 0.0
  %2590 = vmatpush1.msra.mxu0 %v2101
  %2591 = vmatprep.subr.mxu0 0.0
  %2592 = vmatpush1.msra.mxu0 %v2100
  %2593 = vmatprep.subr.mxu0 0.0
  %2594 = vmatpush1.msra.mxu0 %v2099
  %2595 = vmatprep.subr.mxu0 0.0
  %2596 = vmatpush1.msra.mxu0 %v2098
  %2597 = vmatprep.subr.mxu0 0.0
  %2598 = vmatpush2.msra.mxu0 0.0
  %2599 = vmatprep.subr.mxu0 0.0
  %2600 = vmatpush2.msra.mxu0 0.0
  %2601 = vmatprep.subr.mxu0 0.0
  %2602 = vmatpush2.msra.mxu0 0.0
  %2603 = vmatprep.subr.mxu0 0.0
  %2604 = vmatpush2.msra.mxu0 0.0
  %2605 = vmatprep.subr.mxu0 0.0
  %2606 = vmatpush2.msra.mxu0 0.0
  %2607 = vmatprep.subr.mxu0 0.0
  %2608 = vmatpush2.msra.mxu0 0.0
  %2609 = vmatprep.subr.mxu0 0.0
  %2610 = vmatpush2.msra.mxu0 0.0
  %2611 = vmatprep.subr.mxu0 0.0
  %2612 = vmatpush2.msra.mxu0 0.0
  %2613 = vmatprep.subr.mxu0 0.0
  %2614 = vmatpush2.msra.mxu0 0.0
  %2615 = vmatprep.subr.mxu0 0.0
  %2616 = vmatpush2.msra.mxu0 0.0
  %2617 = vmatprep.subr.mxu0 0.0
  %2618 = vmatpush2.msra.mxu0 0.0
  %2619 = vmatprep.subr.mxu0 0.0
  %2620 = vmatpush2.msra.mxu0 0.0
  %2621 = vmatprep.subr.mxu0 0.0
  %2622 = vmatpush2.msra.mxu0 0.0
  %2623 = vmatprep.subr.mxu0 0.0
  %2624 = vmatpush2.msra.mxu0 0.0
  %2625 = vmatprep.subr.mxu0 0.0
  %2626 = vmatpush2.msra.mxu0 0.0
  %2627 = vmatprep.subr.mxu0 0.0
  %2628 = vmatpush2.msra.mxu0 0.0
  %2629 = vmatprep.mubr.f32.mxu0 0.0
  %2630 = vmatmul.mubr.f32.gmra.mxu0 %v2563
  %v2631 = vpop.f32.mrf.mxu0
  %v2632 = vadd.f32 0.0, %v2631
  %v2633 = vpop.f32.mrf.mxu0
  %2634 = vdwg.mxu0
  %v2635 = vadd.f32 %v2564, %v2632
  %v2636 = vxor.u32 %v2635, 2147483648
  %v2637 = vmul.f32 %v2636, 1.442695
  %v2638 = vpow.pop %v2637
  %v2639 = vadd.f32 %v2638, 1.0
  %v2640 = vrcp.pop %v2639
  %v2641 = vmul.f32 1.0, %v2640
  %v2642 = vtanh.pop %v2635
  %2643 = vrot.lane.b32.xlu0 %v2641, 96
  %v2644 = vpop.permute.xlu0 %2643
  %2645 = vrot.lane.b32.xlu0 %v2642, 64
  %v2646 = vpop.permute.xlu0 %2645
  %2647 = vrot.lane.b32.xlu0 %v2641, 32
  %v2648 = vpop.permute.xlu0 %2647
  %v2649 = vmul.f32 %v2644, %v2561
  %v2650 = vmul.f32 %v2641, %v2646
  %v2651 = vadd.f32 %v2649, %v2650
  %v2652 = vtanh.pop %v2651
  %v2653 = vmul.f32 %v2648, %v2652
  %v2654 = vld [vmem:[%s937] sm:$0x3]
  %2655 = vmatprep.subr.mxu0 0.0
  %2656 = vmatpush1.msra.mxu0 %v2113
  %2657 = vmatprep.subr.mxu0 0.0
  %2658 = vmatpush1.msra.mxu0 %v2112
  %2659 = vmatprep.subr.mxu0 0.0
  %2660 = vmatpush1.msra.mxu0 %v2111
  %2661 = vmatprep.subr.mxu0 0.0
  %2662 = vmatpush1.msra.mxu0 %v2110
  %2663 = vmatprep.subr.mxu0 0.0
  %2664 = vmatpush1.msra.mxu0 %v2109
  %2665 = vmatprep.subr.mxu0 0.0
  %2666 = vmatpush1.msra.mxu0 %v2108
  %2667 = vmatprep.subr.mxu0 0.0
  %2668 = vmatpush1.msra.mxu0 %v2107
  %2669 = vmatprep.subr.mxu0 0.0
  %2670 = vmatpush1.msra.mxu0 %v2106
  %2671 = vmatprep.subr.mxu0 0.0
  %2672 = vmatpush1.msra.mxu0 %v2105
  %2673 = vmatprep.subr.mxu0 0.0
  %2674 = vmatpush1.msra.mxu0 %v2104
  %2675 = vmatprep.subr.mxu0 0.0
  %2676 = vmatpush1.msra.mxu0 %v2103
  %2677 = vmatprep.subr.mxu0 0.0
  %2678 = vmatpush1.msra.mxu0 %v2102
  %2679 = vmatprep.subr.mxu0 0.0
  %2680 = vmatpush1.msra.mxu0 %v2101
  %2681 = vmatprep.subr.mxu0 0.0
  %2682 = vmatpush1.msra.mxu0 %v2100
  %2683 = vmatprep.subr.mxu0 0.0
  %2684 = vmatpush1.msra.mxu0 %v2099
  %2685 = vmatprep.subr.mxu0 0.0
  %2686 = vmatpush1.msra.mxu0 %v2098
  %2687 = vmatprep.subr.mxu0 0.0
  %2688 = vmatpush2.msra.mxu0 0.0
  %2689 = vmatprep.subr.mxu0 0.0
  %2690 = vmatpush2.msra.mxu0 0.0
  %2691 = vmatprep.subr.mxu0 0.0
  %2692 = vmatpush2.msra.mxu0 0.0
  %2693 = vmatprep.subr.mxu0 0.0
  %2694 = vmatpush2.msra.mxu0 0.0
  %2695 = vmatprep.subr.mxu0 0.0
  %2696 = vmatpush2.msra.mxu0 0.0
  %2697 = vmatprep.subr.mxu0 0.0
  %2698 = vmatpush2.msra.mxu0 0.0
  %2699 = vmatprep.subr.mxu0 0.0
  %2700 = vmatpush2.msra.mxu0 0.0
  %2701 = vmatprep.subr.mxu0 0.0
  %2702 = vmatpush2.msra.mxu0 0.0
  %2703 = vmatprep.subr.mxu0 0.0
  %2704 = vmatpush2.msra.mxu0 0.0
  %2705 = vmatprep.subr.mxu0 0.0
  %2706 = vmatpush2.msra.mxu0 0.0
  %2707 = vmatprep.subr.mxu0 0.0
  %2708 = vmatpush2.msra.mxu0 0.0
  %2709 = vmatprep.subr.mxu0 0.0
  %2710 = vmatpush2.msra.mxu0 0.0
  %2711 = vmatprep.subr.mxu0 0.0
  %2712 = vmatpush2.msra.mxu0 0.0
  %2713 = vmatprep.subr.mxu0 0.0
  %2714 = vmatpush2.msra.mxu0 0.0
  %2715 = vmatprep.subr.mxu0 0.0
  %2716 = vmatpush2.msra.mxu0 0.0
  %2717 = vmatprep.subr.mxu0 0.0
  %2718 = vmatpush2.msra.mxu0 0.0
  %2719 = vmatprep.mubr.f32.mxu0 0.0
  %2720 = vmatmul.mubr.f32.gmra.mxu0 %v2653
  %v2721 = vpop.f32.mrf.mxu0
  %v2722 = vadd.f32 0.0, %v2721
  %v2723 = vpop.f32.mrf.mxu0
  %2724 = vdwg.mxu0
  %v2725 = vadd.f32 %v2654, %v2722
  %v2726 = vxor.u32 %v2725, 2147483648
  %v2727 = vmul.f32 %v2726, 1.442695
  %v2728 = vpow.pop %v2727
  %v2729 = vadd.f32 %v2728, 1.0
  %v2730 = vrcp.pop %v2729
  %v2731 = vmul.f32 1.0, %v2730
  %v2732 = vtanh.pop %v2725
  %2733 = vrot.lane.b32.xlu0 %v2731, 96
  %v2734 = vpop.permute.xlu0 %2733
  %2735 = vrot.lane.b32.xlu0 %v2732, 64
  %v2736 = vpop.permute.xlu0 %2735
  %2737 = vrot.lane.b32.xlu0 %v2731, 32
  %v2738 = vpop.permute.xlu0 %2737
  %v2739 = vmul.f32 %v2734, %v2651
  %v2740 = vmul.f32 %v2731, %v2736
  %v2741 = vadd.f32 %v2739, %v2740
  %v2742 = vtanh.pop %v2741
  %v2743 = vmul.f32 %v2738, %v2742
  %v2744 = vld [vmem:[%s1030] sm:$0x3]
  %2745 = vmatprep.subr.mxu0 0.0
  %2746 = vmatpush1.msra.mxu0 %v2113
  %2747 = vmatprep.subr.mxu0 0.0
  %2748 = vmatpush1.msra.mxu0 %v2112
  %2749 = vmatprep.subr.mxu0 0.0
  %2750 = vmatpush1.msra.mxu0 %v2111
  %2751 = vmatprep.subr.mxu0 0.0
  %2752 = vmatpush1.msra.mxu0 %v2110
  %2753 = vmatprep.subr.mxu0 0.0
  %2754 = vmatpush1.msra.mxu0 %v2109
  %2755 = vmatprep.subr.mxu0 0.0
  %2756 = vmatpush1.msra.mxu0 %v2108
  %2757 = vmatprep.subr.mxu0 0.0
  %2758 = vmatpush1.msra.mxu0 %v2107
  %2759 = vmatprep.subr.mxu0 0.0
  %2760 = vmatpush1.msra.mxu0 %v2106
  %2761 = vmatprep.subr.mxu0 0.0
  %2762 = vmatpush1.msra.mxu0 %v2105
  %2763 = vmatprep.subr.mxu0 0.0
  %2764 = vmatpush1.msra.mxu0 %v2104
  %2765 = vmatprep.subr.mxu0 0.0
  %2766 = vmatpush1.msra.mxu0 %v2103
  %2767 = vmatprep.subr.mxu0 0.0
  %2768 = vmatpush1.msra.mxu0 %v2102
  %2769 = vmatprep.subr.mxu0 0.0
  %2770 = vmatpush1.msra.mxu0 %v2101
  %2771 = vmatprep.subr.mxu0 0.0
  %2772 = vmatpush1.msra.mxu0 %v2100
  %2773 = vmatprep.subr.mxu0 0.0
  %2774 = vmatpush1.msra.mxu0 %v2099
  %2775 = vmatprep.subr.mxu0 0.0
  %2776 = vmatpush1.msra.mxu0 %v2098
  %2777 = vmatprep.subr.mxu0 0.0
  %2778 = vmatpush2.msra.mxu0 0.0
  %2779 = vmatprep.subr.mxu0 0.0
  %2780 = vmatpush2.msra.mxu0 0.0
  %2781 = vmatprep.subr.mxu0 0.0
  %2782 = vmatpush2.msra.mxu0 0.0
  %2783 = vmatprep.subr.mxu0 0.0
  %2784 = vmatpush2.msra.mxu0 0.0
  %2785 = vmatprep.subr.mxu0 0.0
  %2786 = vmatpush2.msra.mxu0 0.0
  %2787 = vmatprep.subr.mxu0 0.0
  %2788 = vmatpush2.msra.mxu0 0.0
  %2789 = vmatprep.subr.mxu0 0.0
  %2790 = vmatpush2.msra.mxu0 0.0
  %2791 = vmatprep.subr.mxu0 0.0
  %2792 = vmatpush2.msra.mxu0 0.0
  %2793 = vmatprep.subr.mxu0 0.0
  %2794 = vmatpush2.msra.mxu0 0.0
  %2795 = vmatprep.subr.mxu0 0.0
  %2796 = vmatpush2.msra.mxu0 0.0
  %2797 = vmatprep.subr.mxu0 0.0
  %2798 = vmatpush2.msra.mxu0 0.0
  %2799 = vmatprep.subr.mxu0 0.0
  %2800 = vmatpush2.msra.mxu0 0.0
  %2801 = vmatprep.subr.mxu0 0.0
  %2802 = vmatpush2.msra.mxu0 0.0
  %2803 = vmatprep.subr.mxu0 0.0
  %2804 = vmatpush2.msra.mxu0 0.0
  %2805 = vmatprep.subr.mxu0 0.0
  %2806 = vmatpush2.msra.mxu0 0.0
  %2807 = vmatprep.subr.mxu0 0.0
  %2808 = vmatpush2.msra.mxu0 0.0
  %2809 = vmatprep.mubr.f32.mxu0 0.0
  %2810 = vmatmul.mubr.f32.gmra.mxu0 %v2743
  %v2811 = vpop.f32.mrf.mxu0
  %v2812 = vadd.f32 0.0, %v2811
  %v2813 = vpop.f32.mrf.mxu0
  %2814 = vdwg.mxu0
  %v2815 = vadd.f32 %v2744, %v2812
  %v2816 = vxor.u32 %v2815, 2147483648
  %v2817 = vmul.f32 %v2816, 1.442695
  %v2818 = vpow.pop %v2817
  %v2819 = vadd.f32 %v2818, 1.0
  %v2820 = vrcp.pop %v2819
  %v2821 = vmul.f32 1.0, %v2820
  %v2822 = vtanh.pop %v2815
  %2823 = vrot.lane.b32.xlu0 %v2821, 96
  %v2824 = vpop.permute.xlu0 %2823
  %2825 = vrot.lane.b32.xlu0 %v2822, 64
  %v2826 = vpop.permute.xlu0 %2825
  %2827 = vrot.lane.b32.xlu0 %v2821, 32
  %v2828 = vpop.permute.xlu0 %2827
  %v2829 = vmul.f32 %v2824, %v2741
  %v2830 = vmul.f32 %v2821, %v2826
  %v2831 = vadd.f32 %v2829, %v2830
  %v2832 = vtanh.pop %v2831
  %v2833 = vmul.f32 %v2828, %v2832
  %v2834 = vld [vmem:[%s1123] sm:$0x3]
  %2835 = vmatprep.subr.mxu0 0.0
  %2836 = vmatpush1.msra.mxu0 %v2113
  %2837 = vmatprep.subr.mxu0 0.0
  %2838 = vmatpush1.msra.mxu0 %v2112
  %2839 = vmatprep.subr.mxu0 0.0
  %2840 = vmatpush1.msra.mxu0 %v2111
  %2841 = vmatprep.subr.mxu0 0.0
  %2842 = vmatpush1.msra.mxu0 %v2110
  %2843 = vmatprep.subr.mxu0 0.0
  %2844 = vmatpush1.msra.mxu0 %v2109
  %2845 = vmatprep.subr.mxu0 0.0
  %2846 = vmatpush1.msra.mxu0 %v2108
  %2847 = vmatprep.subr.mxu0 0.0
  %2848 = vmatpush1.msra.mxu0 %v2107
  %2849 = vmatprep.subr.mxu0 0.0
  %2850 = vmatpush1.msra.mxu0 %v2106
  %2851 = vmatprep.subr.mxu0 0.0
  %2852 = vmatpush1.msra.mxu0 %v2105
  %2853 = vmatprep.subr.mxu0 0.0
  %2854 = vmatpush1.msra.mxu0 %v2104
  %2855 = vmatprep.subr.mxu0 0.0
  %2856 = vmatpush1.msra.mxu0 %v2103
  %2857 = vmatprep.subr.mxu0 0.0
  %2858 = vmatpush1.msra.mxu0 %v2102
  %2859 = vmatprep.subr.mxu0 0.0
  %2860 = vmatpush1.msra.mxu0 %v2101
  %2861 = vmatprep.subr.mxu0 0.0
  %2862 = vmatpush1.msra.mxu0 %v2100
  %2863 = vmatprep.subr.mxu0 0.0
  %2864 = vmatpush1.msra.mxu0 %v2099
  %2865 = vmatprep.subr.mxu0 0.0
  %2866 = vmatpush1.msra.mxu0 %v2098
  %2867 = vmatprep.subr.mxu0 0.0
  %2868 = vmatpush2.msra.mxu0 0.0
  %2869 = vmatprep.subr.mxu0 0.0
  %2870 = vmatpush2.msra.mxu0 0.0
  %2871 = vmatprep.subr.mxu0 0.0
  %2872 = vmatpush2.msra.mxu0 0.0
  %2873 = vmatprep.subr.mxu0 0.0
  %2874 = vmatpush2.msra.mxu0 0.0
  %2875 = vmatprep.subr.mxu0 0.0
  %2876 = vmatpush2.msra.mxu0 0.0
  %2877 = vmatprep.subr.mxu0 0.0
  %2878 = vmatpush2.msra.mxu0 0.0
  %2879 = vmatprep.subr.mxu0 0.0
  %2880 = vmatpush2.msra.mxu0 0.0
  %2881 = vmatprep.subr.mxu0 0.0
  %2882 = vmatpush2.msra.mxu0 0.0
  %2883 = vmatprep.subr.mxu0 0.0
  %2884 = vmatpush2.msra.mxu0 0.0
  %2885 = vmatprep.subr.mxu0 0.0
  %2886 = vmatpush2.msra.mxu0 0.0
  %2887 = vmatprep.subr.mxu0 0.0
  %2888 = vmatpush2.msra.mxu0 0.0
  %2889 = vmatprep.subr.mxu0 0.0
  %2890 = vmatpush2.msra.mxu0 0.0
  %2891 = vmatprep.subr.mxu0 0.0
  %2892 = vmatpush2.msra.mxu0 0.0
  %2893 = vmatprep.subr.mxu0 0.0
  %2894 = vmatpush2.msra.mxu0 0.0
  %2895 = vmatprep.subr.mxu0 0.0
  %2896 = vmatpush2.msra.mxu0 0.0
  %2897 = vmatprep.subr.mxu0 0.0
  %2898 = vmatpush2.msra.mxu0 0.0
  %2899 = vmatprep.mubr.f32.mxu0 0.0
  %2900 = vmatmul.mubr.f32.gmra.mxu0 %v2833
  %v2901 = vpop.f32.mrf.mxu0
  %v2902 = vadd.f32 0.0, %v2901
  %v2903 = vpop.f32.mrf.mxu0
  %2904 = vdwg.mxu0
  %v2905 = vadd.f32 %v2834, %v2902
  %v2906 = vxor.u32 %v2905, 2147483648
  %v2907 = vmul.f32 %v2906, 1.442695
  %v2908 = vpow.pop %v2907
  %v2909 = vadd.f32 %v2908, 1.0
  %v2910 = vrcp.pop %v2909
  %v2911 = vmul.f32 1.0, %v2910
  %v2912 = vtanh.pop %v2905
  %2913 = vrot.lane.b32.xlu0 %v2911, 96
  %v2914 = vpop.permute.xlu0 %2913
  %2915 = vrot.lane.b32.xlu0 %v2912, 64
  %v2916 = vpop.permute.xlu0 %2915
  %2917 = vrot.lane.b32.xlu0 %v2911, 32
  %v2918 = vpop.permute.xlu0 %2917
  %v2919 = vmul.f32 %v2914, %v2831
  %v2920 = vmul.f32 %v2911, %v2916
  %v2921 = vadd.f32 %v2919, %v2920
  %v2922 = vtanh.pop %v2921
  %v2923 = vmul.f32 %v2918, %v2922
  %v2924 = vld [vmem:[%s1216] sm:$0x3]
  %2925 = vmatprep.subr.mxu0 0.0
  %2926 = vmatpush1.msra.mxu0 %v2113
  %2927 = vmatprep.subr.mxu0 0.0
  %2928 = vmatpush1.msra.mxu0 %v2112
  %2929 = vmatprep.subr.mxu0 0.0
  %2930 = vmatpush1.msra.mxu0 %v2111
  %2931 = vmatprep.subr.mxu0 0.0
  %2932 = vmatpush1.msra.mxu0 %v2110
  %2933 = vmatprep.subr.mxu0 0.0
  %2934 = vmatpush1.msra.mxu0 %v2109
  %2935 = vmatprep.subr.mxu0 0.0
  %2936 = vmatpush1.msra.mxu0 %v2108
  %2937 = vmatprep.subr.mxu0 0.0
  %2938 = vmatpush1.msra.mxu0 %v2107
  %2939 = vmatprep.subr.mxu0 0.0
  %2940 = vmatpush1.msra.mxu0 %v2106
  %2941 = vmatprep.subr.mxu0 0.0
  %2942 = vmatpush1.msra.mxu0 %v2105
  %2943 = vmatprep.subr.mxu0 0.0
  %2944 = vmatpush1.msra.mxu0 %v2104
  %2945 = vmatprep.subr.mxu0 0.0
  %2946 = vmatpush1.msra.mxu0 %v2103
  %2947 = vmatprep.subr.mxu0 0.0
  %2948 = vmatpush1.msra.mxu0 %v2102
  %2949 = vmatprep.subr.mxu0 0.0
  %2950 = vmatpush1.msra.mxu0 %v2101
  %2951 = vmatprep.subr.mxu0 0.0
  %2952 = vmatpush1.msra.mxu0 %v2100
  %2953 = vmatprep.subr.mxu0 0.0
  %2954 = vmatpush1.msra.mxu0 %v2099
  %2955 = vmatprep.subr.mxu0 0.0
  %2956 = vmatpush1.msra.mxu0 %v2098
  %2957 = vmatprep.subr.mxu0 0.0
  %2958 = vmatpush2.msra.mxu0 0.0
  %2959 = vmatprep.subr.mxu0 0.0
  %2960 = vmatpush2.msra.mxu0 0.0
  %2961 = vmatprep.subr.mxu0 0.0
  %2962 = vmatpush2.msra.mxu0 0.0
  %2963 = vmatprep.subr.mxu0 0.0
  %2964 = vmatpush2.msra.mxu0 0.0
  %2965 = vmatprep.subr.mxu0 0.0
  %2966 = vmatpush2.msra.mxu0 0.0
  %2967 = vmatprep.subr.mxu0 0.0
  %2968 = vmatpush2.msra.mxu0 0.0
  %2969 = vmatprep.subr.mxu0 0.0
  %2970 = vmatpush2.msra.mxu0 0.0
  %2971 = vmatprep.subr.mxu0 0.0
  %2972 = vmatpush2.msra.mxu0 0.0
  %2973 = vmatprep.subr.mxu0 0.0
  %2974 = vmatpush2.msra.mxu0 0.0
  %2975 = vmatprep.subr.mxu0 0.0
  %2976 = vmatpush2.msra.mxu0 0.0
  %2977 = vmatprep.subr.mxu0 0.0
  %2978 = vmatpush2.msra.mxu0 0.0
  %2979 = vmatprep.subr.mxu0 0.0
  %2980 = vmatpush2.msra.mxu0 0.0
  %2981 = vmatprep.subr.mxu0 0.0
  %2982 = vmatpush2.msra.mxu0 0.0
  %2983 = vmatprep.subr.mxu0 0.0
  %2984 = vmatpush2.msra.mxu0 0.0
  %2985 = vmatprep.subr.mxu0 0.0
  %2986 = vmatpush2.msra.mxu0 0.0
  %2987 = vmatprep.subr.mxu0 0.0
  %2988 = vmatpush2.msra.mxu0 0.0
  %2989 = vmatprep.mubr.f32.mxu0 0.0
  %2990 = vmatmul.mubr.f32.gmra.mxu0 %v2923
  %v2991 = vpop.f32.mrf.mxu0
  %v2992 = vadd.f32 0.0, %v2991
  %v2993 = vpop.f32.mrf.mxu0
  %2994 = vdwg.mxu0
  %v2995 = vadd.f32 %v2924, %v2992
  %v2996 = vxor.u32 %v2995, 2147483648
  %v2997 = vmul.f32 %v2996, 1.442695
  %v2998 = vpow.pop %v2997
  %v2999 = vadd.f32 %v2998, 1.0
  %v3000 = vrcp.pop %v2999
  %v3001 = vmul.f32 1.0, %v3000
  %v3002 = vtanh.pop %v2995
  %3003 = vrot.lane.b32.xlu0 %v3001, 96
  %v3004 = vpop.permute.xlu0 %3003
  %3005 = vrot.lane.b32.xlu0 %v3002, 64
  %v3006 = vpop.permute.xlu0 %3005
  %3007 = vrot.lane.b32.xlu0 %v3001, 32
  %v3008 = vpop.permute.xlu0 %3007
  %v3009 = vmul.f32 %v3004, %v2921
  %v3010 = vmul.f32 %v3001, %v3006
  %v3011 = vadd.f32 %v3009, %v3010
  %v3012 = vtanh.pop %v3011
  %v3013 = vmul.f32 %v3008, %v3012
  %v3014 = vld [vmem:[%s1309] sm:$0x3]
  %3015 = vmatprep.subr.mxu0 0.0
  %3016 = vmatpush1.msra.mxu0 %v2113
  %3017 = vmatprep.subr.mxu0 0.0
  %3018 = vmatpush1.msra.mxu0 %v2112
  %3019 = vmatprep.subr.mxu0 0.0
  %3020 = vmatpush1.msra.mxu0 %v2111
  %3021 = vmatprep.subr.mxu0 0.0
  %3022 = vmatpush1.msra.mxu0 %v2110
  %3023 = vmatprep.subr.mxu0 0.0
  %3024 = vmatpush1.msra.mxu0 %v2109
  %3025 = vmatprep.subr.mxu0 0.0
  %3026 = vmatpush1.msra.mxu0 %v2108
  %3027 = vmatprep.subr.mxu0 0.0
  %3028 = vmatpush1.msra.mxu0 %v2107
  %3029 = vmatprep.subr.mxu0 0.0
  %3030 = vmatpush1.msra.mxu0 %v2106
  %3031 = vmatprep.subr.mxu0 0.0
  %3032 = vmatpush1.msra.mxu0 %v2105
  %3033 = vmatprep.subr.mxu0 0.0
  %3034 = vmatpush1.msra.mxu0 %v2104
  %3035 = vmatprep.subr.mxu0 0.0
  %3036 = vmatpush1.msra.mxu0 %v2103
  %3037 = vmatprep.subr.mxu0 0.0
  %3038 = vmatpush1.msra.mxu0 %v2102
  %3039 = vmatprep.subr.mxu0 0.0
  %3040 = vmatpush1.msra.mxu0 %v2101
  %3041 = vmatprep.subr.mxu0 0.0
  %3042 = vmatpush1.msra.mxu0 %v2100
  %3043 = vmatprep.subr.mxu0 0.0
  %3044 = vmatpush1.msra.mxu0 %v2099
  %3045 = vmatprep.subr.mxu0 0.0
  %3046 = vmatpush1.msra.mxu0 %v2098
  %3047 = vmatprep.subr.mxu0 0.0
  %3048 = vmatpush2.msra.mxu0 0.0
  %3049 = vmatprep.subr.mxu0 0.0
  %3050 = vmatpush2.msra.mxu0 0.0
  %3051 = vmatprep.subr.mxu0 0.0
  %3052 = vmatpush2.msra.mxu0 0.0
  %3053 = vmatprep.subr.mxu0 0.0
  %3054 = vmatpush2.msra.mxu0 0.0
  %3055 = vmatprep.subr.mxu0 0.0
  %3056 = vmatpush2.msra.mxu0 0.0
  %3057 = vmatprep.subr.mxu0 0.0
  %3058 = vmatpush2.msra.mxu0 0.0
  %3059 = vmatprep.subr.mxu0 0.0
  %3060 = vmatpush2.msra.mxu0 0.0
  %3061 = vmatprep.subr.mxu0 0.0
  %3062 = vmatpush2.msra.mxu0 0.0
  %3063 = vmatprep.subr.mxu0 0.0
  %3064 = vmatpush2.msra.mxu0 0.0
  %3065 = vmatprep.subr.mxu0 0.0
  %3066 = vmatpush2.msra.mxu0 0.0
  %3067 = vmatprep.subr.mxu0 0.0
  %3068 = vmatpush2.msra.mxu0 0.0
  %3069 = vmatprep.subr.mxu0 0.0
  %3070 = vmatpush2.msra.mxu0 0.0
  %3071 = vmatprep.subr.mxu0 0.0
  %3072 = vmatpush2.msra.mxu0 0.0
  %3073 = vmatprep.subr.mxu0 0.0
  %3074 = vmatpush2.msra.mxu0 0.0
  %3075 = vmatprep.subr.mxu0 0.0
  %3076 = vmatpush2.msra.mxu0 0.0
  %3077 = vmatprep.subr.mxu0 0.0
  %3078 = vmatpush2.msra.mxu0 0.0
  %3079 = vmatprep.mubr.f32.mxu0 0.0
  %3080 = vmatmul.mubr.f32.gmra.mxu0 %v3013
  %v3081 = vpop.f32.mrf.mxu0
  %v3082 = vadd.f32 0.0, %v3081
  %v3083 = vpop.f32.mrf.mxu0
  %3084 = vdwg.mxu0
  %v3085 = vadd.f32 %v3014, %v3082
  %v3086 = vxor.u32 %v3085, 2147483648
  %v3087 = vmul.f32 %v3086, 1.442695
  %v3088 = vpow.pop %v3087
  %v3089 = vadd.f32 %v3088, 1.0
  %v3090 = vrcp.pop %v3089
  %v3091 = vmul.f32 1.0, %v3090
  %v3092 = vtanh.pop %v3085
  %3093 = vrot.lane.b32.xlu0 %v3091, 96
  %v3094 = vpop.permute.xlu0 %3093
  %3095 = vrot.lane.b32.xlu0 %v3092, 64
  %v3096 = vpop.permute.xlu0 %3095
  %3097 = vrot.lane.b32.xlu0 %v3091, 32
  %v3098 = vpop.permute.xlu0 %3097
  %v3099 = vmul.f32 %v3094, %v3011
  %v3100 = vmul.f32 %v3091, %v3096
  %v3101 = vadd.f32 %v3099, %v3100
  %v3102 = vtanh.pop %v3101
  %v3103 = vmul.f32 %v3098, %v3102
  %v3104 = vld [vmem:[%s1402] sm:$0x3]
  %3105 = vmatprep.subr.mxu0 0.0
  %3106 = vmatpush1.msra.mxu0 %v2113
  %3107 = vmatprep.subr.mxu0 0.0
  %3108 = vmatpush1.msra.mxu0 %v2112
  %3109 = vmatprep.subr.mxu0 0.0
  %3110 = vmatpush1.msra.mxu0 %v2111
  %3111 = vmatprep.subr.mxu0 0.0
  %3112 = vmatpush1.msra.mxu0 %v2110
  %3113 = vmatprep.subr.mxu0 0.0
  %3114 = vmatpush1.msra.mxu0 %v2109
  %3115 = vmatprep.subr.mxu0 0.0
  %3116 = vmatpush1.msra.mxu0 %v2108
  %3117 = vmatprep.subr.mxu0 0.0
  %3118 = vmatpush1.msra.mxu0 %v2107
  %3119 = vmatprep.subr.mxu0 0.0
  %3120 = vmatpush1.msra.mxu0 %v2106
  %3121 = vmatprep.subr.mxu0 0.0
  %3122 = vmatpush1.msra.mxu0 %v2105
  %3123 = vmatprep.subr.mxu0 0.0
  %3124 = vmatpush1.msra.mxu0 %v2104
  %3125 = vmatprep.subr.mxu0 0.0
  %3126 = vmatpush1.msra.mxu0 %v2103
  %3127 = vmatprep.subr.mxu0 0.0
  %3128 = vmatpush1.msra.mxu0 %v2102
  %3129 = vmatprep.subr.mxu0 0.0
  %3130 = vmatpush1.msra.mxu0 %v2101
  %3131 = vmatprep.subr.mxu0 0.0
  %3132 = vmatpush1.msra.mxu0 %v2100
  %3133 = vmatprep.subr.mxu0 0.0
  %3134 = vmatpush1.msra.mxu0 %v2099
  %3135 = vmatprep.subr.mxu0 0.0
  %3136 = vmatpush1.msra.mxu0 %v2098
  %3137 = vmatprep.subr.mxu0 0.0
  %3138 = vmatpush2.msra.mxu0 0.0
  %3139 = vmatprep.subr.mxu0 0.0
  %3140 = vmatpush2.msra.mxu0 0.0
  %3141 = vmatprep.subr.mxu0 0.0
  %3142 = vmatpush2.msra.mxu0 0.0
  %3143 = vmatprep.subr.mxu0 0.0
  %3144 = vmatpush2.msra.mxu0 0.0
  %3145 = vmatprep.subr.mxu0 0.0
  %3146 = vmatpush2.msra.mxu0 0.0
  %3147 = vmatprep.subr.mxu0 0.0
  %3148 = vmatpush2.msra.mxu0 0.0
  %3149 = vmatprep.subr.mxu0 0.0
  %3150 = vmatpush2.msra.mxu0 0.0
  %3151 = vmatprep.subr.mxu0 0.0
  %3152 = vmatpush2.msra.mxu0 0.0
  %3153 = vmatprep.subr.mxu0 0.0
  %3154 = vmatpush2.msra.mxu0 0.0
  %3155 = vmatprep.subr.mxu0 0.0
  %3156 = vmatpush2.msra.mxu0 0.0
  %3157 = vmatprep.subr.mxu0 0.0
  %3158 = vmatpush2.msra.mxu0 0.0
  %3159 = vmatprep.subr.mxu0 0.0
  %3160 = vmatpush2.msra.mxu0 0.0
  %3161 = vmatprep.subr.mxu0 0.0
  %3162 = vmatpush2.msra.mxu0 0.0
  %3163 = vmatprep.subr.mxu0 0.0
  %3164 = vmatpush2.msra.mxu0 0.0
  %3165 = vmatprep.subr.mxu0 0.0
  %3166 = vmatpush2.msra.mxu0 0.0
  %3167 = vmatprep.subr.mxu0 0.0
  %3168 = vmatpush2.msra.mxu0 0.0
  %3169 = vmatprep.mubr.f32.mxu0 0.0
  %3170 = vmatmul.mubr.f32.gmra.mxu0 %v3103
  %v3171 = vpop.f32.mrf.mxu0
  %v3172 = vadd.f32 0.0, %v3171
  %v3173 = vpop.f32.mrf.mxu0
  %3174 = vdwg.mxu0
  %v3175 = vadd.f32 %v3104, %v3172
  %v3176 = vxor.u32 %v3175, 2147483648
  %v3177 = vmul.f32 %v3176, 1.442695
  %v3178 = vpow.pop %v3177
  %v3179 = vadd.f32 %v3178, 1.0
  %v3180 = vrcp.pop %v3179
  %v3181 = vmul.f32 1.0, %v3180
  %v3182 = vtanh.pop %v3175
  %3183 = vrot.lane.b32.xlu0 %v3181, 96
  %v3184 = vpop.permute.xlu0 %3183
  %3185 = vrot.lane.b32.xlu0 %v3182, 64
  %v3186 = vpop.permute.xlu0 %3185
  %3187 = vrot.lane.b32.xlu0 %v3181, 32
  %v3188 = vpop.permute.xlu0 %3187
  %v3189 = vmul.f32 %v3184, %v3101
  %v3190 = vmul.f32 %v3181, %v3186
  %v3191 = vadd.f32 %v3189, %v3190
  %v3192 = vtanh.pop %v3191
  %v3193 = vmul.f32 %v3188, %v3192
  %v3194 = vld [vmem:[%s1495] sm:$0x3]
  %3195 = vmatprep.subr.mxu0 0.0
  %3196 = vmatpush1.msra.mxu0 %v2113
  %3197 = vmatprep.subr.mxu0 0.0
  %3198 = vmatpush1.msra.mxu0 %v2112
  %3199 = vmatprep.subr.mxu0 0.0
  %3200 = vmatpush1.msra.mxu0 %v2111
  %3201 = vmatprep.subr.mxu0 0.0
  %3202 = vmatpush1.msra.mxu0 %v2110
  %3203 = vmatprep.subr.mxu0 0.0
  %3204 = vmatpush1.msra.mxu0 %v2109
  %3205 = vmatprep.subr.mxu0 0.0
  %3206 = vmatpush1.msra.mxu0 %v2108
  %3207 = vmatprep.subr.mxu0 0.0
  %3208 = vmatpush1.msra.mxu0 %v2107
  %3209 = vmatprep.subr.mxu0 0.0
  %3210 = vmatpush1.msra.mxu0 %v2106
  %3211 = vmatprep.subr.mxu0 0.0
  %3212 = vmatpush1.msra.mxu0 %v2105
  %3213 = vmatprep.subr.mxu0 0.0
  %3214 = vmatpush1.msra.mxu0 %v2104
  %3215 = vmatprep.subr.mxu0 0.0
  %3216 = vmatpush1.msra.mxu0 %v2103
  %3217 = vmatprep.subr.mxu0 0.0
  %3218 = vmatpush1.msra.mxu0 %v2102
  %3219 = vmatprep.subr.mxu0 0.0
  %3220 = vmatpush1.msra.mxu0 %v2101
  %3221 = vmatprep.subr.mxu0 0.0
  %3222 = vmatpush1.msra.mxu0 %v2100
  %3223 = vmatprep.subr.mxu0 0.0
  %3224 = vmatpush1.msra.mxu0 %v2099
  %3225 = vmatprep.subr.mxu0 0.0
  %3226 = vmatpush1.msra.mxu0 %v2098
  %3227 = vmatprep.subr.mxu0 0.0
  %3228 = vmatpush2.msra.mxu0 0.0
  %3229 = vmatprep.subr.mxu0 0.0
  %3230 = vmatpush2.msra.mxu0 0.0
  %3231 = vmatprep.subr.mxu0 0.0
  %3232 = vmatpush2.msra.mxu0 0.0
  %3233 = vmatprep.subr.mxu0 0.0
  %3234 = vmatpush2.msra.mxu0 0.0
  %3235 = vmatprep.subr.mxu0 0.0
  %3236 = vmatpush2.msra.mxu0 0.0
  %3237 = vmatprep.subr.mxu0 0.0
  %3238 = vmatpush2.msra.mxu0 0.0
  %3239 = vmatprep.subr.mxu0 0.0
  %3240 = vmatpush2.msra.mxu0 0.0
  %3241 = vmatprep.subr.mxu0 0.0
  %3242 = vmatpush2.msra.mxu0 0.0
  %3243 = vmatprep.subr.mxu0 0.0
  %3244 = vmatpush2.msra.mxu0 0.0
  %3245 = vmatprep.subr.mxu0 0.0
  %3246 = vmatpush2.msra.mxu0 0.0
  %3247 = vmatprep.subr.mxu0 0.0
  %3248 = vmatpush2.msra.mxu0 0.0
  %3249 = vmatprep.subr.mxu0 0.0
  %3250 = vmatpush2.msra.mxu0 0.0
  %3251 = vmatprep.subr.mxu0 0.0
  %3252 = vmatpush2.msra.mxu0 0.0
  %3253 = vmatprep.subr.mxu0 0.0
  %3254 = vmatpush2.msra.mxu0 0.0
  %3255 = vmatprep.subr.mxu0 0.0
  %3256 = vmatpush2.msra.mxu0 0.0
  %3257 = vmatprep.subr.mxu0 0.0
  %3258 = vmatpush2.msra.mxu0 0.0
  %3259 = vmatprep.mubr.f32.mxu0 0.0
  %3260 = vmatmul.mubr.f32.gmra.mxu0 %v3193
  %v3261 = vpop.f32.mrf.mxu0
  %v3262 = vadd.f32 0.0, %v3261
  %v3263 = vpop.f32.mrf.mxu0
  %3264 = vdwg.mxu0
  %v3265 = vadd.f32 %v3194, %v3262
  %v3266 = vxor.u32 %v3265, 2147483648
  %v3267 = vmul.f32 %v3266, 1.442695
  %v3268 = vpow.pop %v3267
  %v3269 = vadd.f32 %v3268, 1.0
  %v3270 = vrcp.pop %v3269
  %v3271 = vmul.f32 1.0, %v3270
  %v3272 = vtanh.pop %v3265
  %3273 = vrot.lane.b32.xlu0 %v3271, 96
  %v3274 = vpop.permute.xlu0 %3273
  %3275 = vrot.lane.b32.xlu0 %v3272, 64
  %v3276 = vpop.permute.xlu0 %3275
  %3277 = vrot.lane.b32.xlu0 %v3271, 32
  %v3278 = vpop.permute.xlu0 %3277
  %v3279 = vmul.f32 %v3274, %v3191
  %v3280 = vmul.f32 %v3271, %v3276
  %v3281 = vadd.f32 %v3279, %v3280
  %v3282 = vtanh.pop %v3281
  %v3283 = vmul.f32 %v3278, %v3282
  %v3284 = vld [vmem:[%s1588] sm:$0x3]
  %3285 = vmatprep.subr.mxu0 0.0
  %3286 = vmatpush1.msra.mxu0 %v2113
  %3287 = vmatprep.subr.mxu0 0.0
  %3288 = vmatpush1.msra.mxu0 %v2112
  %3289 = vmatprep.subr.mxu0 0.0
  %3290 = vmatpush1.msra.mxu0 %v2111
  %3291 = vmatprep.subr.mxu0 0.0
  %3292 = vmatpush1.msra.mxu0 %v2110
  %3293 = vmatprep.subr.mxu0 0.0
  %3294 = vmatpush1.msra.mxu0 %v2109
  %3295 = vmatprep.subr.mxu0 0.0
  %3296 = vmatpush1.msra.mxu0 %v2108
  %3297 = vmatprep.subr.mxu0 0.0
  %3298 = vmatpush1.msra.mxu0 %v2107
  %3299 = vmatprep.subr.mxu0 0.0
  %3300 = vmatpush1.msra.mxu0 %v2106
  %3301 = vmatprep.subr.mxu0 0.0
  %3302 = vmatpush1.msra.mxu0 %v2105
  %3303 = vmatprep.subr.mxu0 0.0
  %3304 = vmatpush1.msra.mxu0 %v2104
  %3305 = vmatprep.subr.mxu0 0.0
  %3306 = vmatpush1.msra.mxu0 %v2103
  %3307 = vmatprep.subr.mxu0 0.0
  %3308 = vmatpush1.msra.mxu0 %v2102
  %3309 = vmatprep.subr.mxu0 0.0
  %3310 = vmatpush1.msra.mxu0 %v2101
  %3311 = vmatprep.subr.mxu0 0.0
  %3312 = vmatpush1.msra.mxu0 %v2100
  %3313 = vmatprep.subr.mxu0 0.0
  %3314 = vmatpush1.msra.mxu0 %v2099
  %3315 = vmatprep.subr.mxu0 0.0
  %3316 = vmatpush1.msra.mxu0 %v2098
  %3317 = vmatprep.subr.mxu0 0.0
  %3318 = vmatpush2.msra.mxu0 0.0
  %3319 = vmatprep.subr.mxu0 0.0
  %3320 = vmatpush2.msra.mxu0 0.0
  %3321 = vmatprep.subr.mxu0 0.0
  %3322 = vmatpush2.msra.mxu0 0.0
  %3323 = vmatprep.subr.mxu0 0.0
  %3324 = vmatpush2.msra.mxu0 0.0
  %3325 = vmatprep.subr.mxu0 0.0
  %3326 = vmatpush2.msra.mxu0 0.0
  %3327 = vmatprep.subr.mxu0 0.0
  %3328 = vmatpush2.msra.mxu0 0.0
  %3329 = vmatprep.subr.mxu0 0.0
  %3330 = vmatpush2.msra.mxu0 0.0
  %3331 = vmatprep.subr.mxu0 0.0
  %3332 = vmatpush2.msra.mxu0 0.0
  %3333 = vmatprep.subr.mxu0 0.0
  %3334 = vmatpush2.msra.mxu0 0.0
  %3335 = vmatprep.subr.mxu0 0.0
  %3336 = vmatpush2.msra.mxu0 0.0
  %3337 = vmatprep.subr.mxu0 0.0
  %3338 = vmatpush2.msra.mxu0 0.0
  %3339 = vmatprep.subr.mxu0 0.0
  %3340 = vmatpush2.msra.mxu0 0.0
  %3341 = vmatprep.subr.mxu0 0.0
  %3342 = vmatpush2.msra.mxu0 0.0
  %3343 = vmatprep.subr.mxu0 0.0
  %3344 = vmatpush2.msra.mxu0 0.0
  %3345 = vmatprep.subr.mxu0 0.0
  %3346 = vmatpush2.msra.mxu0 0.0
  %3347 = vmatprep.subr.mxu0 0.0
  %3348 = vmatpush2.msra.mxu0 0.0
  %3349 = vmatprep.mubr.f32.mxu0 0.0
  %3350 = vmatmul.mubr.f32.gmra.mxu0 %v3283
  %v3351 = vpop.f32.mrf.mxu0
  %v3352 = vadd.f32 0.0, %v3351
  %v3353 = vpop.f32.mrf.mxu0
  %3354 = vdwg.mxu0
  %v3355 = vadd.f32 %v3284, %v3352
  %v3356 = vxor.u32 %v3355, 2147483648
  %v3357 = vmul.f32 %v3356, 1.442695
  %v3358 = vpow.pop %v3357
  %v3359 = vadd.f32 %v3358, 1.0
  %v3360 = vrcp.pop %v3359
  %v3361 = vmul.f32 1.0, %v3360
  %v3362 = vtanh.pop %v3355
  %3363 = vrot.lane.b32.xlu0 %v3361, 96
  %v3364 = vpop.permute.xlu0 %3363
  %3365 = vrot.lane.b32.xlu0 %v3362, 64
  %v3366 = vpop.permute.xlu0 %3365
  %3367 = vrot.lane.b32.xlu0 %v3361, 32
  %v3368 = vpop.permute.xlu0 %3367
  %v3369 = vmul.f32 %v3364, %v3281
  %v3370 = vmul.f32 %v3361, %v3366
  %v3371 = vadd.f32 %v3369, %v3370
  %v3372 = vtanh.pop %v3371
  %v3373 = vmul.f32 %v3368, %v3372
  %v3374 = vld [vmem:[%s1681] sm:$0x3]
  %3375 = vmatprep.subr.mxu0 0.0
  %3376 = vmatpush1.msra.mxu0 %v2113
  %3377 = vmatprep.subr.mxu0 0.0
  %3378 = vmatpush1.msra.mxu0 %v2112
  %3379 = vmatprep.subr.mxu0 0.0
  %3380 = vmatpush1.msra.mxu0 %v2111
  %3381 = vmatprep.subr.mxu0 0.0
  %3382 = vmatpush1.msra.mxu0 %v2110
  %3383 = vmatprep.subr.mxu0 0.0
  %3384 = vmatpush1.msra.mxu0 %v2109
  %3385 = vmatprep.subr.mxu0 0.0
  %3386 = vmatpush1.msra.mxu0 %v2108
  %3387 = vmatprep.subr.mxu0 0.0
  %3388 = vmatpush1.msra.mxu0 %v2107
  %3389 = vmatprep.subr.mxu0 0.0
  %3390 = vmatpush1.msra.mxu0 %v2106
  %3391 = vmatprep.subr.mxu0 0.0
  %3392 = vmatpush1.msra.mxu0 %v2105
  %3393 = vmatprep.subr.mxu0 0.0
  %3394 = vmatpush1.msra.mxu0 %v2104
  %3395 = vmatprep.subr.mxu0 0.0
  %3396 = vmatpush1.msra.mxu0 %v2103
  %3397 = vmatprep.subr.mxu0 0.0
  %3398 = vmatpush1.msra.mxu0 %v2102
  %3399 = vmatprep.subr.mxu0 0.0
  %3400 = vmatpush1.msra.mxu0 %v2101
  %3401 = vmatprep.subr.mxu0 0.0
  %3402 = vmatpush1.msra.mxu0 %v2100
  %3403 = vmatprep.subr.mxu0 0.0
  %3404 = vmatpush1.msra.mxu0 %v2099
  %3405 = vmatprep.subr.mxu0 0.0
  %3406 = vmatpush1.msra.mxu0 %v2098
  %3407 = vmatprep.subr.mxu0 0.0
  %3408 = vmatpush2.msra.mxu0 0.0
  %3409 = vmatprep.subr.mxu0 0.0
  %3410 = vmatpush2.msra.mxu0 0.0
  %3411 = vmatprep.subr.mxu0 0.0
  %3412 = vmatpush2.msra.mxu0 0.0
  %3413 = vmatprep.subr.mxu0 0.0
  %3414 = vmatpush2.msra.mxu0 0.0
  %3415 = vmatprep.subr.mxu0 0.0
  %3416 = vmatpush2.msra.mxu0 0.0
  %3417 = vmatprep.subr.mxu0 0.0
  %3418 = vmatpush2.msra.mxu0 0.0
  %3419 = vmatprep.subr.mxu0 0.0
  %3420 = vmatpush2.msra.mxu0 0.0
  %3421 = vmatprep.subr.mxu0 0.0
  %3422 = vmatpush2.msra.mxu0 0.0
  %3423 = vmatprep.subr.mxu0 0.0
  %3424 = vmatpush2.msra.mxu0 0.0
  %3425 = vmatprep.subr.mxu0 0.0
  %3426 = vmatpush2.msra.mxu0 0.0
  %3427 = vmatprep.subr.mxu0 0.0
  %3428 = vmatpush2.msra.mxu0 0.0
  %3429 = vmatprep.subr.mxu0 0.0
  %3430 = vmatpush2.msra.mxu0 0.0
  %3431 = vmatprep.subr.mxu0 0.0
  %3432 = vmatpush2.msra.mxu0 0.0
  %3433 = vmatprep.subr.mxu0 0.0
  %3434 = vmatpush2.msra.mxu0 0.0
  %3435 = vmatprep.subr.mxu0 0.0
  %3436 = vmatpush2.msra.mxu0 0.0
  %3437 = vmatprep.subr.mxu0 0.0
  %3438 = vmatpush2.msra.mxu0 0.0
  %3439 = vmatprep.mubr.f32.mxu0 0.0
  %3440 = vmatmul.mubr.f32.gmra.mxu0 %v3373
  %v3441 = vpop.f32.mrf.mxu0
  %v3442 = vadd.f32 0.0, %v3441
  %v3443 = vpop.f32.mrf.mxu0
  %3444 = vdwg.mxu0
  %v3445 = vadd.f32 %v3374, %v3442
  %v3446 = vxor.u32 %v3445, 2147483648
  %v3447 = vmul.f32 %v3446, 1.442695
  %v3448 = vpow.pop %v3447
  %v3449 = vadd.f32 %v3448, 1.0
  %v3450 = vrcp.pop %v3449
  %v3451 = vmul.f32 1.0, %v3450
  %v3452 = vtanh.pop %v3445
  %3453 = vrot.lane.b32.xlu0 %v3451, 96
  %v3454 = vpop.permute.xlu0 %3453
  %3455 = vrot.lane.b32.xlu0 %v3452, 64
  %v3456 = vpop.permute.xlu0 %3455
  %3457 = vrot.lane.b32.xlu0 %v3451, 32
  %v3458 = vpop.permute.xlu0 %3457
  %v3459 = vmul.f32 %v3454, %v3371
  %v3460 = vmul.f32 %v3451, %v3456
  %v3461 = vadd.f32 %v3459, %v3460
  %v3462 = vtanh.pop %v3461
  %v3463 = vmul.f32 %v3458, %v3462
  %v3464 = vld [vmem:[%s7] sm:$0xff]
  %v3465 = vld [vmem:[%s7 + $0x8] sm:$0xff]
  %v3466 = vld [vmem:[%s7 + $0x10] sm:$0xff]
  %v3467 = vld [vmem:[%s7 + $0x18] sm:$0xff]
  %v3468 = vld [vmem:[%s7 + $0x20] sm:$0xff]
  %v3469 = vld [vmem:[%s7 + $0x28] sm:$0xff]
  %v3470 = vld [vmem:[%s7 + $0x30] sm:$0xff]
  %v3471 = vld [vmem:[%s7 + $0x38] sm:$0xff]
  %v3472 = vld [vmem:[%s7 + $0x40] sm:$0xff]
  %v3473 = vld [vmem:[%s7 + $0x48] sm:$0xff]
  %v3474 = vld [vmem:[%s7 + $0x50] sm:$0xff]
  %v3475 = vld [vmem:[%s7 + $0x58] sm:$0xff]
  %v3476 = vld [vmem:[%s7 + $0x60] sm:$0xff]
  %v3477 = vld [vmem:[%s7 + $0x68] sm:$0xff]
  %v3478 = vld [vmem:[%s7 + $0x70] sm:$0xff]
  %v3479 = vld [vmem:[%s7 + $0x78] sm:$0xff]
  %v3480 = vld [vmem:[%s8] sm:$0x1]
  %v3482 = vlaneseq
  %v3483 = vshrl.u32 %v3482, 7
  %v3484 = vsub.s32 0, %v3483
  %v3485 = vrot.slane %v3480, %v3484
  %3487 = vmatprep.subr.mxu0 0.0
  %3488 = vmatpush1.msra.mxu0 %v3479
  %3489 = vmatprep.subr.mxu0 0.0
  %3490 = vmatpush1.msra.mxu0 %v3478
  %3491 = vmatprep.subr.mxu0 0.0
  %3492 = vmatpush1.msra.mxu0 %v3477
  %3493 = vmatprep.subr.mxu0 0.0
  %3494 = vmatpush1.msra.mxu0 %v3476
  %3495 = vmatprep.subr.mxu0 0.0
  %3496 = vmatpush1.msra.mxu0 %v3475
  %3497 = vmatprep.subr.mxu0 0.0
  %3498 = vmatpush1.msra.mxu0 %v3474
  %3499 = vmatprep.subr.mxu0 0.0
  %3500 = vmatpush1.msra.mxu0 %v3473
  %3501 = vmatprep.subr.mxu0 0.0
  %3502 = vmatpush1.msra.mxu0 %v3472
  %3503 = vmatprep.subr.mxu0 0.0
  %3504 = vmatpush1.msra.mxu0 %v3471
  %3505 = vmatprep.subr.mxu0 0.0
  %3506 = vmatpush1.msra.mxu0 %v3470
  %3507 = vmatprep.subr.mxu0 0.0
  %3508 = vmatpush1.msra.mxu0 %v3469
  %3509 = vmatprep.subr.mxu0 0.0
  %3510 = vmatpush1.msra.mxu0 %v3468
  %3511 = vmatprep.subr.mxu0 0.0
  %3512 = vmatpush1.msra.mxu0 %v3467
  %3513 = vmatprep.subr.mxu0 0.0
  %3514 = vmatpush1.msra.mxu0 %v3466
  %3515 = vmatprep.subr.mxu0 0.0
  %3516 = vmatpush1.msra.mxu0 %v3465
  %3517 = vmatprep.subr.mxu0 0.0
  %3518 = vmatpush1.msra.mxu0 %v3464
  %3519 = vmatprep.subr.mxu0 0.0
  %3520 = vmatpush2.msra.mxu0 0.0
  %3521 = vmatprep.subr.mxu0 0.0
  %3522 = vmatpush2.msra.mxu0 0.0
  %3523 = vmatprep.subr.mxu0 0.0
  %3524 = vmatpush2.msra.mxu0 0.0
  %3525 = vmatprep.subr.mxu0 0.0
  %3526 = vmatpush2.msra.mxu0 0.0
  %3527 = vmatprep.subr.mxu0 0.0
  %3528 = vmatpush2.msra.mxu0 0.0
  %3529 = vmatprep.subr.mxu0 0.0
  %3530 = vmatpush2.msra.mxu0 0.0
  %3531 = vmatprep.subr.mxu0 0.0
  %3532 = vmatpush2.msra.mxu0 0.0
  %3533 = vmatprep.subr.mxu0 0.0
  %3534 = vmatpush2.msra.mxu0 0.0
  %3535 = vmatprep.subr.mxu0 0.0
  %3536 = vmatpush2.msra.mxu0 0.0
  %3537 = vmatprep.subr.mxu0 0.0
  %3538 = vmatpush2.msra.mxu0 0.0
  %3539 = vmatprep.subr.mxu0 0.0
  %3540 = vmatpush2.msra.mxu0 0.0
  %3541 = vmatprep.subr.mxu0 0.0
  %3542 = vmatpush2.msra.mxu0 0.0
  %3543 = vmatprep.subr.mxu0 0.0
  %3544 = vmatpush2.msra.mxu0 0.0
  %3545 = vmatprep.subr.mxu0 0.0
  %3546 = vmatpush2.msra.mxu0 0.0
  %3547 = vmatprep.subr.mxu0 0.0
  %3548 = vmatpush2.msra.mxu0 0.0
  %3549 = vmatprep.subr.mxu0 0.0
  %3550 = vmatpush2.msra.mxu0 0.0
  %3551 = vmatprep.mubr.f32.mxu0 0.0
  %3552 = vmatmul.mubr.f32.gmra.mxu0 %v3463
  %v3553 = vpop.f32.mrf.mxu0
  %v3554 = vadd.f32 %v3485, %v3553
  %v3555 = vpop.f32.mrf.mxu0
  %3556 = vdwg.mxu0
  %v3557 = vld [vmem:[%s9] sm:$0xff]
  %v3558 = vld [vmem:[%s9 + $0x8] sm:$0xff]
  %v3559 = vld [vmem:[%s9 + $0x10] sm:$0xff]
  %v3560 = vld [vmem:[%s9 + $0x18] sm:$0xff]
  %v3561 = vld [vmem:[#allocation4] sm:$0x1]
  %v3563 = vlaneseq
  %v3564 = vshrl.u32 %v3563, 7
  %v3565 = vsub.s32 0, %v3564
  %v3566 = vrot.slane %v3561, %v3565
  %vm3568 = vcmask 261120
  %v3570 = vsel %vm3568, %v3554, 0
  %3572 = vmatprep.subr.mxu0 0.0
  %3573 = vmatpush1.msra.mxu0 0.0
  %3574 = vmatprep.subr.mxu0 0.0
  %3575 = vmatpush1.msra.mxu0 0.0
  %3576 = vmatprep.subr.mxu0 0.0
  %3577 = vmatpush1.msra.mxu0 0.0
  %3578 = vmatprep.subr.mxu0 0.0
  %3579 = vmatpush1.msra.mxu0 0.0
  %3580 = vmatprep.subr.mxu0 0.0
  %3581 = vmatpush1.msra.mxu0 0.0
  %3582 = vmatprep.subr.mxu0 0.0
  %3583 = vmatpush1.msra.mxu0 0.0
  %3584 = vmatprep.subr.mxu0 0.0
  %3585 = vmatpush1.msra.mxu0 0.0
  %3586 = vmatprep.subr.mxu0 0.0
  %3587 = vmatpush1.msra.mxu0 0.0
  %3588 = vmatprep.subr.mxu0 0.0
  %3589 = vmatpush1.msra.mxu0 0.0
  %3590 = vmatprep.subr.mxu0 0.0
  %3591 = vmatpush1.msra.mxu0 0.0
  %3592 = vmatprep.subr.mxu0 0.0
  %3593 = vmatpush1.msra.mxu0 0.0
  %3594 = vmatprep.subr.mxu0 0.0
  %3595 = vmatpush1.msra.mxu0 0.0
  %3596 = vmatprep.subr.mxu0 0.0
  %3597 = vmatpush1.msra.mxu0 %v3560
  %3598 = vmatprep.subr.mxu0 0.0
  %3599 = vmatpush1.msra.mxu0 %v3559
  %3600 = vmatprep.subr.mxu0 0.0
  %3601 = vmatpush1.msra.mxu0 %v3558
  %3602 = vmatprep.subr.mxu0 0.0
  %3603 = vmatpush1.msra.mxu0 %v3557
  %3604 = vmatprep.subr.mxu0 0.0
  %3605 = vmatpush2.msra.mxu0 0.0
  %3606 = vmatprep.subr.mxu0 0.0
  %3607 = vmatpush2.msra.mxu0 0.0
  %3608 = vmatprep.subr.mxu0 0.0
  %3609 = vmatpush2.msra.mxu0 0.0
  %3610 = vmatprep.subr.mxu0 0.0
  %3611 = vmatpush2.msra.mxu0 0.0
  %3612 = vmatprep.subr.mxu0 0.0
  %3613 = vmatpush2.msra.mxu0 0.0
  %3614 = vmatprep.subr.mxu0 0.0
  %3615 = vmatpush2.msra.mxu0 0.0
  %3616 = vmatprep.subr.mxu0 0.0
  %3617 = vmatpush2.msra.mxu0 0.0
  %3618 = vmatprep.subr.mxu0 0.0
  %3619 = vmatpush2.msra.mxu0 0.0
  %3620 = vmatprep.subr.mxu0 0.0
  %3621 = vmatpush2.msra.mxu0 0.0
  %3622 = vmatprep.subr.mxu0 0.0
  %3623 = vmatpush2.msra.mxu0 0.0
  %3624 = vmatprep.subr.mxu0 0.0
  %3625 = vmatpush2.msra.mxu0 0.0
  %3626 = vmatprep.subr.mxu0 0.0
  %3627 = vmatpush2.msra.mxu0 0.0
  %3628 = vmatprep.subr.mxu0 0.0
  %3629 = vmatpush2.msra.mxu0 0.0
  %3630 = vmatprep.subr.mxu0 0.0
  %3631 = vmatpush2.msra.mxu0 0.0
  %3632 = vmatprep.subr.mxu0 0.0
  %3633 = vmatpush2.msra.mxu0 0.0
  %3634 = vmatprep.subr.mxu0 0.0
  %3635 = vmatpush2.msra.mxu0 0.0
  %3636 = vmatprep.mubr.f32.mxu0 0.0
  %3637 = vmatmul.mubr.f32.gmra.mxu0 %v3570
  %v3638 = vpop.f32.mrf.mxu0
  %v3639 = vadd.f32 %v3566, %v3638
  %v3640 = vpop.f32.mrf.mxu0
  %3641 = vdwg.mxu0
  %vm3642 = vcmask 1024
  %3643 = vst.msk [vmem:[%s11] sm:$0x3] %vm3642, %v3639
  // Predicated region
  $region46: #{forward.3} parent=0 // pred_check
    _
  $region47: #{forward.3} parent=0 // pred_check_branch
    %3645 = sbr.rel (0) target = $region49
  $region48: #{forward.3} parent=0 // pred_region
    _
  $region49: #{forward.3} parent=0 // pred_fallthru
    _
  // Predicated region
  $region50: #{forward.3} parent=0 // pred_check
    _
  $region51: #{forward.3} parent=0 // pred_check_branch
    %3647 = sbr.rel (0) target = $region53
  $region52: #{forward.3} parent=0 // pred_region
    _
  $region53: #{forward.3} parent=0 // pred_fallthru
    _

</llo_original>
